<compile_context>
chip_gen: v7x
topology: tpu7x:2x2x1
jax: 0.10.0
libtpu: 0.0.40
codegen_flags: <defaults>
</compile_context>

<pallas_src>
import jax
import jax.numpy as jnp
from jax.experimental import pallas as pl
from jax.experimental.pallas import tpu as pltpu


def _layer_norm(x, w, b, eps=1e-5):
    mu = jnp.mean(x, axis=-1, keepdims=True)
    var = jnp.mean(jnp.square(x - mu), axis=-1, keepdims=True)
    return (x - mu) * jax.lax.rsqrt(var + eps) * w + b


def _gelu(x):
    # exact (erf-based) GELU, matching nn.GELU() default
    return 0.5 * x * (1.0 + jax.lax.erf(x * jnp.float32(0.7071067811865476)))


def _softmax(x):
    m = jnp.max(x, axis=-1, keepdims=True)
    e = jnp.exp(x - m)
    return e / jnp.sum(e, axis=-1, keepdims=True)


def _make_kernel(nhead, seq_len, batch_tile):
    def kernel(src_ref,
               q_wT, q_b, k_wT, k_b, v_wT, v_b, out_wT, out_b,
               ln1_w, ln1_b, lin1_wT, lin1_b, lin2_wT, lin2_b, ln2_w, ln2_b,
               fc1_wT, fc1_b, rln1_w, rln1_b,
               fc2_wT, fc2_b, rln2_w, rln2_b, rln3_w, rln3_b,
               all_out_ref,
               state_ref):
        layer = pl.program_id(1)

        # Load this batch-tile's src into the carried state once per batch
        # tile; src_ref is a pipelined VMEM block with a per-b-constant index
        # map, so the HBM read is overlapped by the pipeline prefetch.
        @pl.when(layer == 0)
        def _():
            state_ref[...] = src_ref[...]

        x2 = state_ref[...]                       # (TB*S, E) f32, batch-major rows
        BS, E = x2.shape
        dh = E // nhead

        # ---- multi-head self-attention (batched over batch; heads unrolled) --
        # TODO(synk): src_mask / src_key_padding_mask are None (module defaults)
        #             and not implemented; dropout is eval-mode identity.
        x_bf = x2.astype(jnp.bfloat16)
        q2 = jnp.dot(x_bf, q_wT[...], preferred_element_type=jnp.float32) + q_b[...]
        k2 = jnp.dot(x_bf, k_wT[...], preferred_element_type=jnp.float32) + k_b[...]
        v2 = jnp.dot(x_bf, v_wT[...], preferred_element_type=jnp.float32) + v_b[...]
        # 1/sqrt(dh) is already folded into q_wT / q_b host-side.
        q3 = q2.astype(jnp.bfloat16).reshape(batch_tile, seq_len, E)   # major-dim
        k3 = k2.astype(jnp.bfloat16).reshape(batch_tile, seq_len, E)   # splits only
        v3 = v2.astype(jnp.bfloat16).reshape(batch_tile, seq_len, E)

        # TODO(synk): for long sequences, switch to a key-tiled online-softmax
        #             (flash) loop instead of materializing (TB, S, S) scores.
        ctx_heads = []
        for h in range(nhead):                    # small static unroll over heads
            c0 = h * dh
            q_h = q3[:, :, c0:c0 + dh]            # (TB, S, dh) bf16
            k_h = k3[:, :, c0:c0 + dh]
            v_h = v3[:, :, c0:c0 + dh]
            scores = jnp.einsum('bqd,bkd->bqk', q_h, k_h,
                                preferred_element_type=jnp.float32)
            m = jnp.max(scores, axis=-1, keepdims=True)
            e = jnp.exp(scores - m)
            # divide -> EUP approx reciprocal + VPU multiply
            p = e * pl.reciprocal(jnp.sum(e, axis=-1, keepdims=True), approx=True)
            ctx_heads.append(jnp.einsum('bqk,bkd->bqd', p.astype(jnp.bfloat16), v_h,
                                        preferred_element_type=jnp.float32))
        # One full-K output projection (fills the MXU) instead of H skinny dots.
        ctx = jnp.concatenate(ctx_heads, axis=-1).reshape(BS, E)
        attn_out = jnp.dot(ctx.astype(jnp.bfloat16), out_wT[...],
                           preferred_element_type=jnp.float32) + out_b[...]

        # ---- residual + norm1 ----
        h1 = _layer_norm(x2 + attn_out, ln1_w[...], ln1_b[...])

        # ---- feed-forward (ReLU) + residual + norm2 ----
        # TODO(synk): for production F (=4E) stream lin1_wT/lin2_wT in F-chunks
        #             (emit_pipeline) to bound weight residency on v7x VMEM.
        ff = jnp.dot(h1.astype(jnp.bfloat16), lin1_wT[...],
                     preferred_element_type=jnp.float32) + lin1_b[...]
        ff = jnp.maximum(ff, 0.0)
        ff = jnp.dot(ff.astype(jnp.bfloat16), lin2_wT[...],
                     preferred_element_type=jnp.float32) + lin2_b[...]
        h2 = _layer_norm(h1 + ff, ln2_w[...], ln2_b[...])

        # ---- shared ResidualBlock ----
        rb = jnp.dot(h2.astype(jnp.bfloat16), fc1_wT[...],
                     preferred_element_type=jnp.float32) + fc1_b[...]
        rb = _gelu(_layer_norm(rb, rln1_w[...], rln1_b[...]))
        rb = jnp.dot(rb.astype(jnp.bfloat16), fc2_wT[...],
                     preferred_element_type=jnp.float32) + fc2_b[...]
        rb = _layer_norm(rb, rln2_w[...], rln2_b[...])
        rb = rb + h2
        rb = _gelu(_layer_norm(rb, rln3_w[...], rln3_b[...]))

        state_ref[...] = rb
        # TODO(synk): with E < 128 this store is lane-masked; production E
        #             (multiple of 128) makes it lane-dense.
        all_out_ref[...] = rb.astype(all_out_ref.dtype)

    return kernel


def _vmem_budget_bytes(rows, E, F):
    act = rows * E * 4                        # one f32 activation slab
    state = act                               # carried-state scratch
    src_blk = 2 * act                         # double-buffered src block
    out_blk = 2 * act                         # double-buffered output block
    wpl = 2 * (4 * E * E + 2 * E * F) * 2     # per-layer bf16 weights, 2x buffered
    wsh = 2 * (2 * E * E) * 2                 # shared bf16 weights (fc1, fc2)
    small = 64 * E * 4 + 8 * F * 4            # biases / LN params (generous)
    temps = 8 * act + rows * F * 4            # in-kernel temporaries (generous)
    need = state + src_blk + out_blk + wpl + wsh + small + temps
    return int(min(max(2 * need, 16 << 20), 64 << 20))


def transformer_encoder_base(src, params, nhead, batch_tile=None):
    """Returns (output, all_output) like TransformerEncoderBase.forward (norm=None)."""
    S, B, E = src.shape
    L = params["in_w"].shape[0]
    F = params["lin1_w"].shape[1]
    dh = E // nhead
    scale = float(dh) ** -0.5

    # Batch tiling: split B across TensorCores when possible (v7x megacore);
    # each tile must keep (TB*S) a multiple of 8 for the (8,128) block rule.
    if batch_tile is None:
        batch_tile = B // 2 if (B % 2 == 0 and ((B // 2) * S) % 8 == 0) else B
    assert B % batch_tile == 0 and (batch_tile * S) % 8 == 0 or batch_tile == B
    nbt = B // batch_tile
    rows = batch_tile * S

    # Host-side layout plumbing (one-time, free): batch-major activation rows;
    # all weights pre-transposed to (in, out) and pre-cast to bf16; QKV split
    # into aligned per-projection weights with 1/sqrt(dh) folded into Q.
    src_bm = jnp.transpose(src.astype(jnp.float32), (1, 0, 2)).reshape(B * S, E)

    in_w, in_b = params["in_w"], params["in_b"]
    per_layer = [
        ("q_wT", (jnp.swapaxes(in_w[:, :E, :], 1, 2) * scale).astype(jnp.bfloat16)),
        ("q_b", in_b[:, :, :E] * scale),
        ("k_wT", jnp.swapaxes(in_w[:, E:2 * E, :], 1, 2).astype(jnp.bfloat16)),
        ("k_b", in_b[:, :, E:2 * E]),
        ("v_wT", jnp.swapaxes(in_w[:, 2 * E:, :], 1, 2).astype(jnp.bfloat16)),
        ("v_b", in_b[:, :, 2 * E:]),
        ("out_wT", jnp.swapaxes(params["out_w"], 1, 2).astype(jnp.bfloat16)),
        ("out_b", params["out_b"]),
        ("ln1_w", params["ln1_w"]), ("ln1_b", params["ln1_b"]),
        ("lin1_wT", jnp.swapaxes(params["lin1_w"], 1, 2).astype(jnp.bfloat16)),
        ("lin1_b", params["lin1_b"]),
        ("lin2_wT", jnp.swapaxes(params["lin2_w"], 1, 2).astype(jnp.bfloat16)),
        ("lin2_b", params["lin2_b"]),
        ("ln2_w", params["ln2_w"]), ("ln2_b", params["ln2_b"]),
    ]
    shared = [
        ("fc1_wT", params["fc1_w"].T.astype(jnp.bfloat16)), ("fc1_b", params["fc1_b"]),
        ("rln1_w", params["rln1_w"]), ("rln1_b", params["rln1_b"]),
        ("fc2_wT", params["fc2_w"].T.astype(jnp.bfloat16)), ("fc2_b", params["fc2_b"]),
        ("rln2_w", params["rln2_w"]), ("rln2_b", params["rln2_b"]),
        ("rln3_w", params["rln3_w"]), ("rln3_b", params["rln3_b"]),
    ]

    def layer_spec(shape):
        nd = len(shape)
        # leading layer dim squeezed out of the kernel ref; streamed over l
        return pl.BlockSpec((None,) + tuple(shape[1:]),
                            lambda b, l, nd=nd: (l,) + (0,) * (nd - 1))

    def shared_spec(shape):
        nd = len(shape)
        return pl.BlockSpec(tuple(shape), lambda b, l, nd=nd: (0,) * nd)

    args = [src_bm]
    specs = [pl.BlockSpec((rows, E), lambda b, l: (b, 0))]   # pipelined src block
    for _, a in per_layer:
        args.append(a)
        specs.append(layer_spec(a.shape))
    for _, a in shared:
        args.append(a)
        specs.append(shared_spec(a.shape))

    all_out_bm = pl.pallas_call(
        _make_kernel(nhead, S, batch_tile),
        out_shape=jax.ShapeDtypeStruct((L, B * S, E), jnp.float32),
        grid_spec=pltpu.PrefetchScalarGridSpec(
            num_scalar_prefetch=0,
            grid=(nbt, L),
            in_specs=specs,
            out_specs=pl.BlockSpec((None, rows, E), lambda b, l: (l, b, 0)),
            scratch_shapes=[pltpu.VMEM((rows, E), jnp.float32)],  # carried state
        ),
        compiler_params=pltpu.CompilerParams(
            # layer axis carries state in the scratch -> must stay "arbitrary";
            # batch-tile axis is exact data parallelism -> megacore sharding.
            dimension_semantics=("parallel", "arbitrary"),
            vmem_limit_bytes=_vmem_budget_bytes(rows, E, F)),
    )(*args)

    # back to the module's (S, B, E) convention (outside the kernel -> cheap)
    all_out = jnp.transpose(all_out_bm.reshape(L, B, S, E), (0, 2, 1, 3))
    output = all_out[L - 1]
    all_output = [all_out[i] for i in range(L)]
    return output, all_output


def reference(src, params, nhead):
    """Pure-JAX f32 mirror of the PyTorch forward (eval mode, norm=None)."""
    x = src.astype(jnp.float32)
    S, B, E = x.shape
    dh = E // nhead
    L = params["in_w"].shape[0]
    outs = []
    for l in range(L):
        x2 = x.reshape(S * B, E)
        qkv = x2 @ params["in_w"][l].T + params["in_b"][l, 0]
        q = qkv[:, :E].reshape(S, B, nhead, dh) * (dh ** -0.5)
        k = qkv[:, E:2 * E].reshape(S, B, nhead, dh)
        v = qkv[:, 2 * E:].reshape(S, B, nhead, dh)
        scores = jnp.einsum('sbhd,tbhd->bhst', q, k)
        attn = _softmax(scores)
        ctx = jnp.einsum('bhst,tbhd->sbhd', attn, v).reshape(S * B, E)
        ao = ctx @ params["out_w"][l].T + params["out_b"][l, 0]
        h1 = _layer_norm(x2 + ao, params["ln1_w"][l, 0], params["ln1_b"][l, 0])
        ff = jnp.maximum(h1 @ params["lin1_w"][l].T + params["lin1_b"][l, 0], 0.0)
        ff = ff @ params["lin2_w"][l].T + params["lin2_b"][l, 0]
        h2 = _layer_norm(h1 + ff, params["ln2_w"][l, 0], params["ln2_b"][l, 0])
        rb = h2 @ params["fc1_w"].T + params["fc1_b"][0]
        rb = _gelu(_layer_norm(rb, params["rln1_w"][0], params["rln1_b"][0]))
        rb = rb @ params["fc2_w"].T + params["fc2_b"][0]
        rb = _layer_norm(rb, params["rln2_w"][0], params["rln2_b"][0])
        rb = rb + h2
        rb = _gelu(_layer_norm(rb, params["rln3_w"][0], params["rln3_b"][0]))
        x = rb.reshape(S, B, E)
        outs.append(x)
    return x, outs


if __name__ == "__main__":
    # small shapes consistent with the module: seq=8, batch=2, embed=32,
    # nhead=4, dim_feedforward=64, num_layers=2
    S, B, E, H, F, L = 8, 2, 32, 4, 64, 2
    key = jax.random.PRNGKey(0)
    ks = jax.random.split(key, 16)

    def w(k, shape, scale=0.05):
        return (scale * jax.random.normal(k, shape)).astype(jnp.float32)

    params = {
        # per-layer TransformerEncoderLayer params, stacked on leading L dim
        "in_w":   w(ks[0], (L, 3 * E, E)),
        "in_b":   w(ks[1], (L, 1, 3 * E)),
        "out_w":  w(ks[2], (L, E, E)),
        "out_b":  w(ks[3], (L, 1, E)),
        "ln1_w":  jnp.ones((L, 1, E), jnp.float32),
        "ln1_b":  jnp.zeros((L, 1, E), jnp.float32),
        "lin1_w": w(ks[4], (L, F, E)),
        "lin1_b": w(ks[5], (L, 1, F)),
        "lin2_w": w(ks[6], (L, E, F)),
        "lin2_b": w(ks[7], (L, 1, E)),
        "ln2_w":  jnp.ones((L, 1, E), jnp.float32),
        "ln2_b":  jnp.zeros((L, 1, E), jnp.float32),
        # shared ResidualBlock params
        "fc1_w":  w(ks[8], (E, E)),
        "fc1_b":  w(ks[9], (1, E)),
        "rln1_w": jnp.ones((1, E), jnp.float32),
        "rln1_b": jnp.zeros((1, E), jnp.float32),
        "fc2_w":  w(ks[10], (E, E)),
        "fc2_b":  w(ks[11], (1, E)),
        "rln2_w": jnp.ones((1, E), jnp.float32),
        "rln2_b": jnp.zeros((1, E), jnp.float32),
        "rln3_w": jnp.ones((1, E), jnp.float32),
        "rln3_b": jnp.zeros((1, E), jnp.float32),
    }
    src = jax.random.normal(ks[12], (S, B, E), jnp.float32)

    out, all_out = transformer_encoder_base(src, params, nhead=H)
    out = jax.block_until_ready(out)

    # bf16 MXU math vs f32 reference -> loosened tolerance (per perf review).
    ref_out, ref_all = reference(src, params, H)
    assert jnp.allclose(out, ref_out, atol=1e-1, rtol=1e-1), "final output mismatch"
    for a, r in zip(all_out, ref_all):
        assert jnp.allclose(a, r, atol=1e-1, rtol=1e-1), "per-layer output mismatch"

    print("KERNEL_OK")
</pallas_src>

<mosaic_0001>
module attributes {stable_mosaic.version = 11 : i64} {
  func.func @kernel(%arg0: i32, %arg1: i32, %arg2: memref<8x32xf32, #tpu.memory_space<vmem>>, %arg3: memref<1x32x32xbf16, #tpu.memory_space<vmem>>, %arg4: memref<1x1x32xf32, #tpu.memory_space<vmem>>, %arg5: memref<1x32x32xbf16, #tpu.memory_space<vmem>>, %arg6: memref<1x1x32xf32, #tpu.memory_space<vmem>>, %arg7: memref<1x32x32xbf16, #tpu.memory_space<vmem>>, %arg8: memref<1x1x32xf32, #tpu.memory_space<vmem>>, %arg9: memref<1x32x32xbf16, #tpu.memory_space<vmem>>, %arg10: memref<1x1x32xf32, #tpu.memory_space<vmem>>, %arg11: memref<1x1x32xf32, #tpu.memory_space<vmem>>, %arg12: memref<1x1x32xf32, #tpu.memory_space<vmem>>, %arg13: memref<1x32x64xbf16, #tpu.memory_space<vmem>>, %arg14: memref<1x1x64xf32, #tpu.memory_space<vmem>>, %arg15: memref<1x64x32xbf16, #tpu.memory_space<vmem>>, %arg16: memref<1x1x32xf32, #tpu.memory_space<vmem>>, %arg17: memref<1x1x32xf32, #tpu.memory_space<vmem>>, %arg18: memref<1x1x32xf32, #tpu.memory_space<vmem>>, %arg19: memref<32x32xbf16, #tpu.memory_space<vmem>>, %arg20: memref<1x32xf32, #tpu.memory_space<vmem>>, %arg21: memref<1x32xf32, #tpu.memory_space<vmem>>, %arg22: memref<1x32xf32, #tpu.memory_space<vmem>>, %arg23: memref<32x32xbf16, #tpu.memory_space<vmem>>, %arg24: memref<1x32xf32, #tpu.memory_space<vmem>>, %arg25: memref<1x32xf32, #tpu.memory_space<vmem>>, %arg26: memref<1x32xf32, #tpu.memory_space<vmem>>, %arg27: memref<1x32xf32, #tpu.memory_space<vmem>>, %arg28: memref<1x32xf32, #tpu.memory_space<vmem>>, %arg29: memref<1x8x32xf32, #tpu.memory_space<vmem>>, %arg30: memref<8x32xf32, #tpu.memory_space<vmem>>) attributes {dimension_semantics = [#tpu.dimension_semantics<parallel>, #tpu.dimension_semantics<arbitrary>], iteration_bounds = array<i64: 2, 2>, scalar_prefetch = 0 : i64, scratch_operands = 1 : i64, tpu.core_type = #tpu.core_type<tc>, window_params = [{transform_indices = @transform_0, window_bounds = array<i64: 8, 32>}, {transform_indices = @transform_1, window_bounds = array<i64: 1, 32, 32>}, {transform_indices = @transform_2, window_bounds = array<i64: 1, 1, 32>}, {transform_indices = @transform_3, window_bounds = array<i64: 1, 32, 32>}, {transform_indices = @transform_4, window_bounds = array<i64: 1, 1, 32>}, {transform_indices = @transform_5, window_bounds = array<i64: 1, 32, 32>}, {transform_indices = @transform_6, window_bounds = array<i64: 1, 1, 32>}, {transform_indices = @transform_7, window_bounds = array<i64: 1, 32, 32>}, {transform_indices = @transform_8, window_bounds = array<i64: 1, 1, 32>}, {transform_indices = @transform_9, window_bounds = array<i64: 1, 1, 32>}, {transform_indices = @transform_10, window_bounds = array<i64: 1, 1, 32>}, {transform_indices = @transform_11, window_bounds = array<i64: 1, 32, 64>}, {transform_indices = @transform_12, window_bounds = array<i64: 1, 1, 64>}, {transform_indices = @transform_13, window_bounds = array<i64: 1, 64, 32>}, {transform_indices = @transform_14, window_bounds = array<i64: 1, 1, 32>}, {transform_indices = @transform_15, window_bounds = array<i64: 1, 1, 32>}, {transform_indices = @transform_16, window_bounds = array<i64: 1, 1, 32>}, {pipeline_mode = #tpu.pipeline_mode<synchronous>, transform_indices = @transform_17, window_bounds = array<i64: 32, 32>}, {pipeline_mode = #tpu.pipeline_mode<synchronous>, transform_indices = @transform_18, window_bounds = array<i64: 1, 32>}, {pipeline_mode = #tpu.pipeline_mode<synchronous>, transform_indices = @transform_19, window_bounds = array<i64: 1, 32>}, {pipeline_mode = #tpu.pipeline_mode<synchronous>, transform_indices = @transform_20, window_bounds = array<i64: 1, 32>}, {pipeline_mode = #tpu.pipeline_mode<synchronous>, transform_indices = @transform_21, window_bounds = array<i64: 32, 32>}, {pipeline_mode = #tpu.pipeline_mode<synchronous>, transform_indices = @transform_22, window_bounds = array<i64: 1, 32>}, {pipeline_mode = #tpu.pipeline_mode<synchronous>, transform_indices = @transform_23, window_bounds = array<i64: 1, 32>}, {pipeline_mode = #tpu.pipeline_mode<synchronous>, transform_indices = @transform_24, window_bounds = array<i64: 1, 32>}, {pipeline_mode = #tpu.pipeline_mode<synchronous>, transform_indices = @transform_25, window_bounds = array<i64: 1, 32>}, {pipeline_mode = #tpu.pipeline_mode<synchronous>, transform_indices = @transform_26, window_bounds = array<i64: 1, 32>}, {transform_indices = @transform_27, window_bounds = array<i64: 1, 8, 32>}]} {
    %c0_i32 = arith.constant 0 : i32
    %0 = arith.cmpi eq, %arg1, %c0_i32 : i32
    %1 = arith.extui %0 : i1 to i32
    %c0_i32_0 = arith.constant 0 : i32
    %2 = arith.cmpi ne, %1, %c0_i32_0 : i32
    scf.if %2 {
      %c0_130 = arith.constant 0 : index
      %c0_131 = arith.constant 0 : index
      %283 = vector.load %arg2[%c0_130, %c0_131] : memref<8x32xf32, #tpu.memory_space<vmem>>, vector<8x32xf32>
      %c0_132 = arith.constant 0 : index
      %c0_133 = arith.constant 0 : index
      %284 = vector.load %arg30[%c0_132, %c0_133] : memref<8x32xf32, #tpu.memory_space<vmem>>, vector<8x32xf32>
      tpu.vector_store %arg30[%c0_132, %c0_133], %283 {strides = array<i32>} : memref<8x32xf32, #tpu.memory_space<vmem>>, vector<8x32xf32>,
    } else {
    }
    %c0 = arith.constant 0 : index
    %c0_1 = arith.constant 0 : index
    %3 = vector.load %arg30[%c0, %c0_1] : memref<8x32xf32, #tpu.memory_space<vmem>>, vector<8x32xf32>
    %4 = arith.truncf %3 : vector<8x32xf32> to vector<8x32xbf16>
    %c0_2 = arith.constant 0 : index
    %c0_3 = arith.constant 0 : index
    %c0_4 = arith.constant 0 : index
    %5 = vector.load %arg3[%c0_2, %c0_3, %c0_4] : memref<1x32x32xbf16, #tpu.memory_space<vmem>>, vector<1x32x32xbf16>
    %6 = vector.shape_cast %5 : vector<1x32x32xbf16> to vector<32x32xbf16>
    %cst = arith.constant dense<0.000000e+00> : vector<8x32xf32>
    %7 = tpu.matmul %4, %6, %cst {dimension_numbers = #tpu.dot_dimension_numbers<[1], [0], [0], [1], [0, 0, 1, 1], [], []>} : vector<8x32xbf16>, vector<32x32xbf16>, vector<8x32xf32> -> vector<8x32xf32>
    %c0_5 = arith.constant 0 : index
    %c0_6 = arith.constant 0 : index
    %c0_7 = arith.constant 0 : index
    %8 = vector.load %arg4[%c0_5, %c0_6, %c0_7] : memref<1x1x32xf32, #tpu.memory_space<vmem>>, vector<1x1x32xf32>
    %9 = vector.shape_cast %8 : vector<1x1x32xf32> to vector<1x32xf32>
    %10 = vector.broadcast %9 : vector<1x32xf32> to vector<8x32xf32>
    %11 = arith.addf %7, %10 : vector<8x32xf32>
    %c0_8 = arith.constant 0 : index
    %c0_9 = arith.constant 0 : index
    %c0_10 = arith.constant 0 : index
    %12 = vector.load %arg5[%c0_8, %c0_9, %c0_10] : memref<1x32x32xbf16, #tpu.memory_space<vmem>>, vector<1x32x32xbf16>
    %13 = vector.shape_cast %12 : vector<1x32x32xbf16> to vector<32x32xbf16>
    %cst_11 = arith.constant dense<0.000000e+00> : vector<8x32xf32>
    %14 = tpu.matmul %4, %13, %cst_11 {dimension_numbers = #tpu.dot_dimension_numbers<[1], [0], [0], [1], [0, 0, 1, 1], [], []>} : vector<8x32xbf16>, vector<32x32xbf16>, vector<8x32xf32> -> vector<8x32xf32>
    %c0_12 = arith.constant 0 : index
    %c0_13 = arith.constant 0 : index
    %c0_14 = arith.constant 0 : index
    %15 = vector.load %arg6[%c0_12, %c0_13, %c0_14] : memref<1x1x32xf32, #tpu.memory_space<vmem>>, vector<1x1x32xf32>
    %16 = vector.shape_cast %15 : vector<1x1x32xf32> to vector<1x32xf32>
    %17 = vector.broadcast %16 : vector<1x32xf32> to vector<8x32xf32>
    %18 = arith.addf %14, %17 : vector<8x32xf32>
    %c0_15 = arith.constant 0 : index
    %c0_16 = arith.constant 0 : index
    %c0_17 = arith.constant 0 : index
    %19 = vector.load %arg7[%c0_15, %c0_16, %c0_17] : memref<1x32x32xbf16, #tpu.memory_space<vmem>>, vector<1x32x32xbf16>
    %20 = vector.shape_cast %19 : vector<1x32x32xbf16> to vector<32x32xbf16>
    %cst_18 = arith.constant dense<0.000000e+00> : vector<8x32xf32>
    %21 = tpu.matmul %4, %20, %cst_18 {dimension_numbers = #tpu.dot_dimension_numbers<[1], [0], [0], [1], [0, 0, 1, 1], [], []>} : vector<8x32xbf16>, vector<32x32xbf16>, vector<8x32xf32> -> vector<8x32xf32>
    %c0_19 = arith.constant 0 : index
    %c0_20 = arith.constant 0 : index
    %c0_21 = arith.constant 0 : index
    %22 = vector.load %arg8[%c0_19, %c0_20, %c0_21] : memref<1x1x32xf32, #tpu.memory_space<vmem>>, vector<1x1x32xf32>
    %23 = vector.shape_cast %22 : vector<1x1x32xf32> to vector<1x32xf32>
    %24 = vector.broadcast %23 : vector<1x32xf32> to vector<8x32xf32>
    %25 = arith.addf %21, %24 : vector<8x32xf32>
    %26 = arith.truncf %11 : vector<8x32xf32> to vector<8x32xbf16>
    %27 = vector.shape_cast %26 : vector<8x32xbf16> to vector<1x8x32xbf16>
    %28 = arith.truncf %18 : vector<8x32xf32> to vector<8x32xbf16>
    %29 = vector.shape_cast %28 : vector<8x32xbf16> to vector<1x8x32xbf16>
    %30 = arith.truncf %25 : vector<8x32xf32> to vector<8x32xbf16>
    %31 = vector.shape_cast %30 : vector<8x32xbf16> to vector<1x8x32xbf16>
    %32 = vector.extract_strided_slice %27 {offsets = [0, 0, 0], sizes = [1, 8, 8], strides = [1, 1, 1]} : vector<1x8x32xbf16> to vector<1x8x8xbf16>
    %33 = vector.extract_strided_slice %29 {offsets = [0, 0, 0], sizes = [1, 8, 8], strides = [1, 1, 1]} : vector<1x8x32xbf16> to vector<1x8x8xbf16>
    %34 = vector.extract_strided_slice %31 {offsets = [0, 0, 0], sizes = [1, 8, 8], strides = [1, 1, 1]} : vector<1x8x32xbf16> to vector<1x8x8xbf16>
    "tpu.trace_start"() <{level = 10 : i32, message = "bqd,bkd->bqk"}> : () -> ()
    %cst_22 = arith.constant dense<0.000000e+00> : vector<1x8x8xf32>
    %35 = tpu.matmul %32, %33, %cst_22 {dimension_numbers = #tpu.dot_dimension_numbers<[2], [2], [1], [1], [0, 0, 0, 1, 1, 1], [0], [0]>} : vector<1x8x8xbf16>, vector<1x8x8xbf16>, vector<1x8x8xf32> -> vector<1x8x8xf32>
    "tpu.trace_stop"() : () -> ()
    %cst_23 = arith.constant dense<0xFF800000> : vector<1x8xf32>
    %36 = vector.multi_reduction <maximumf>, %35, %cst_23 [2] : vector<1x8x8xf32> to vector<1x8xf32>
    %37 = vector.shape_cast %36 : vector<1x8xf32> to vector<1x8x1xf32>
    %38 = vector.broadcast %37 : vector<1x8x1xf32> to vector<1x8x8xf32>
    %39 = arith.subf %35, %38 : vector<1x8x8xf32>
    %40 = math.exp %39 : vector<1x8x8xf32>
    %cst_24 = arith.constant dense<0.000000e+00> : vector<1x8xf32>
    %41 = vector.multi_reduction <add>, %40, %cst_24 [2] : vector<1x8x8xf32> to vector<1x8xf32>
    %42 = vector.shape_cast %41 : vector<1x8xf32> to vector<1x8x1xf32>
    %43 = tpu.reciprocal %42 {approx = true} : vector<1x8x1xf32> -> vector<1x8x1xf32>
    %44 = vector.broadcast %43 : vector<1x8x1xf32> to vector<1x8x8xf32>
    %45 = arith.mulf %40, %44 : vector<1x8x8xf32>
    %46 = arith.truncf %45 : vector<1x8x8xf32> to vector<1x8x8xbf16>
    "tpu.trace_start"() <{level = 10 : i32, message = "bqk,bkd->bqd"}> : () -> ()
    %cst_25 = arith.constant dense<0.000000e+00> : vector<1x8x8xf32>
    %47 = tpu.matmul %46, %34, %cst_25 {dimension_numbers = #tpu.dot_dimension_numbers<[2], [1], [1], [2], [0, 0, 0, 1, 1, 2], [0], [0]>} : vector<1x8x8xbf16>, vector<1x8x8xbf16>, vector<1x8x8xf32> -> vector<1x8x8xf32>
    "tpu.trace_stop"() : () -> ()
    %48 = vector.extract_strided_slice %27 {offsets = [0, 0, 8], sizes = [1, 8, 8], strides = [1, 1, 1]} : vector<1x8x32xbf16> to vector<1x8x8xbf16>
    %49 = vector.extract_strided_slice %29 {offsets = [0, 0, 8], sizes = [1, 8, 8], strides = [1, 1, 1]} : vector<1x8x32xbf16> to vector<1x8x8xbf16>
    %50 = vector.extract_strided_slice %31 {offsets = [0, 0, 8], sizes = [1, 8, 8], strides = [1, 1, 1]} : vector<1x8x32xbf16> to vector<1x8x8xbf16>
    "tpu.trace_start"() <{level = 10 : i32, message = "bqd,bkd->bqk"}> : () -> ()
    %cst_26 = arith.constant dense<0.000000e+00> : vector<1x8x8xf32>
    %51 = tpu.matmul %48, %49, %cst_26 {dimension_numbers = #tpu.dot_dimension_numbers<[2], [2], [1], [1], [0, 0, 0, 1, 1, 1], [0], [0]>} : vector<1x8x8xbf16>, vector<1x8x8xbf16>, vector<1x8x8xf32> -> vector<1x8x8xf32>
    "tpu.trace_stop"() : () -> ()
    %cst_27 = arith.constant dense<0xFF800000> : vector<1x8xf32>
    %52 = vector.multi_reduction <maximumf>, %51, %cst_27 [2] : vector<1x8x8xf32> to vector<1x8xf32>
    %53 = vector.shape_cast %52 : vector<1x8xf32> to vector<1x8x1xf32>
    %54 = vector.broadcast %53 : vector<1x8x1xf32> to vector<1x8x8xf32>
    %55 = arith.subf %51, %54 : vector<1x8x8xf32>
    %56 = math.exp %55 : vector<1x8x8xf32>
    %cst_28 = arith.constant dense<0.000000e+00> : vector<1x8xf32>
    %57 = vector.multi_reduction <add>, %56, %cst_28 [2] : vector<1x8x8xf32> to vector<1x8xf32>
    %58 = vector.shape_cast %57 : vector<1x8xf32> to vector<1x8x1xf32>
    %59 = tpu.reciprocal %58 {approx = true} : vector<1x8x1xf32> -> vector<1x8x1xf32>
    %60 = vector.broadcast %59 : vector<1x8x1xf32> to vector<1x8x8xf32>
    %61 = arith.mulf %56, %60 : vector<1x8x8xf32>
    %62 = arith.truncf %61 : vector<1x8x8xf32> to vector<1x8x8xbf16>
    "tpu.trace_start"() <{level = 10 : i32, message = "bqk,bkd->bqd"}> : () -> ()
    %cst_29 = arith.constant dense<0.000000e+00> : vector<1x8x8xf32>
    %63 = tpu.matmul %62, %50, %cst_29 {dimension_numbers = #tpu.dot_dimension_numbers<[2], [1], [1], [2], [0, 0, 0, 1, 1, 2], [0], [0]>} : vector<1x8x8xbf16>, vector<1x8x8xbf16>, vector<1x8x8xf32> -> vector<1x8x8xf32>
    "tpu.trace_stop"() : () -> ()
    %64 = vector.extract_strided_slice %27 {offsets = [0, 0, 16], sizes = [1, 8, 8], strides = [1, 1, 1]} : vector<1x8x32xbf16> to vector<1x8x8xbf16>
    %65 = vector.extract_strided_slice %29 {offsets = [0, 0, 16], sizes = [1, 8, 8], strides = [1, 1, 1]} : vector<1x8x32xbf16> to vector<1x8x8xbf16>
    %66 = vector.extract_strided_slice %31 {offsets = [0, 0, 16], sizes = [1, 8, 8], strides = [1, 1, 1]} : vector<1x8x32xbf16> to vector<1x8x8xbf16>
    "tpu.trace_start"() <{level = 10 : i32, message = "bqd,bkd->bqk"}> : () -> ()
    %cst_30 = arith.constant dense<0.000000e+00> : vector<1x8x8xf32>
    %67 = tpu.matmul %64, %65, %cst_30 {dimension_numbers = #tpu.dot_dimension_numbers<[2], [2], [1], [1], [0, 0, 0, 1, 1, 1], [0], [0]>} : vector<1x8x8xbf16>, vector<1x8x8xbf16>, vector<1x8x8xf32> -> vector<1x8x8xf32>
    "tpu.trace_stop"() : () -> ()
    %cst_31 = arith.constant dense<0xFF800000> : vector<1x8xf32>
    %68 = vector.multi_reduction <maximumf>, %67, %cst_31 [2] : vector<1x8x8xf32> to vector<1x8xf32>
    %69 = vector.shape_cast %68 : vector<1x8xf32> to vector<1x8x1xf32>
    %70 = vector.broadcast %69 : vector<1x8x1xf32> to vector<1x8x8xf32>
    %71 = arith.subf %67, %70 : vector<1x8x8xf32>
    %72 = math.exp %71 : vector<1x8x8xf32>
    %cst_32 = arith.constant dense<0.000000e+00> : vector<1x8xf32>
    %73 = vector.multi_reduction <add>, %72, %cst_32 [2] : vector<1x8x8xf32> to vector<1x8xf32>
    %74 = vector.shape_cast %73 : vector<1x8xf32> to vector<1x8x1xf32>
    %75 = tpu.reciprocal %74 {approx = true} : vector<1x8x1xf32> -> vector<1x8x1xf32>
    %76 = vector.broadcast %75 : vector<1x8x1xf32> to vector<1x8x8xf32>
    %77 = arith.mulf %72, %76 : vector<1x8x8xf32>
    %78 = arith.truncf %77 : vector<1x8x8xf32> to vector<1x8x8xbf16>
    "tpu.trace_start"() <{level = 10 : i32, message = "bqk,bkd->bqd"}> : () -> ()
    %cst_33 = arith.constant dense<0.000000e+00> : vector<1x8x8xf32>
    %79 = tpu.matmul %78, %66, %cst_33 {dimension_numbers = #tpu.dot_dimension_numbers<[2], [1], [1], [2], [0, 0, 0, 1, 1, 2], [0], [0]>} : vector<1x8x8xbf16>, vector<1x8x8xbf16>, vector<1x8x8xf32> -> vector<1x8x8xf32>
    "tpu.trace_stop"() : () -> ()
    %80 = vector.extract_strided_slice %27 {offsets = [0, 0, 24], sizes = [1, 8, 8], strides = [1, 1, 1]} : vector<1x8x32xbf16> to vector<1x8x8xbf16>
    %81 = vector.extract_strided_slice %29 {offsets = [0, 0, 24], sizes = [1, 8, 8], strides = [1, 1, 1]} : vector<1x8x32xbf16> to vector<1x8x8xbf16>
    %82 = vector.extract_strided_slice %31 {offsets = [0, 0, 24], sizes = [1, 8, 8], strides = [1, 1, 1]} : vector<1x8x32xbf16> to vector<1x8x8xbf16>
    "tpu.trace_start"() <{level = 10 : i32, message = "bqd,bkd->bqk"}> : () -> ()
    %cst_34 = arith.constant dense<0.000000e+00> : vector<1x8x8xf32>
    %83 = tpu.matmul %80, %81, %cst_34 {dimension_numbers = #tpu.dot_dimension_numbers<[2], [2], [1], [1], [0, 0, 0, 1, 1, 1], [0], [0]>} : vector<1x8x8xbf16>, vector<1x8x8xbf16>, vector<1x8x8xf32> -> vector<1x8x8xf32>
    "tpu.trace_stop"() : () -> ()
    %cst_35 = arith.constant dense<0xFF800000> : vector<1x8xf32>
    %84 = vector.multi_reduction <maximumf>, %83, %cst_35 [2] : vector<1x8x8xf32> to vector<1x8xf32>
    %85 = vector.shape_cast %84 : vector<1x8xf32> to vector<1x8x1xf32>
    %86 = vector.broadcast %85 : vector<1x8x1xf32> to vector<1x8x8xf32>
    %87 = arith.subf %83, %86 : vector<1x8x8xf32>
    %88 = math.exp %87 : vector<1x8x8xf32>
    %cst_36 = arith.constant dense<0.000000e+00> : vector<1x8xf32>
    %89 = vector.multi_reduction <add>, %88, %cst_36 [2] : vector<1x8x8xf32> to vector<1x8xf32>
    %90 = vector.shape_cast %89 : vector<1x8xf32> to vector<1x8x1xf32>
    %91 = tpu.reciprocal %90 {approx = true} : vector<1x8x1xf32> -> vector<1x8x1xf32>
    %92 = vector.broadcast %91 : vector<1x8x1xf32> to vector<1x8x8xf32>
    %93 = arith.mulf %88, %92 : vector<1x8x8xf32>
    %94 = arith.truncf %93 : vector<1x8x8xf32> to vector<1x8x8xbf16>
    "tpu.trace_start"() <{level = 10 : i32, message = "bqk,bkd->bqd"}> : () -> ()
    %cst_37 = arith.constant dense<0.000000e+00> : vector<1x8x8xf32>
    %95 = tpu.matmul %94, %82, %cst_37 {dimension_numbers = #tpu.dot_dimension_numbers<[2], [1], [1], [2], [0, 0, 0, 1, 1, 2], [0], [0]>} : vector<1x8x8xbf16>, vector<1x8x8xbf16>, vector<1x8x8xf32> -> vector<1x8x8xf32>
    "tpu.trace_stop"() : () -> ()
    %96 = tpu.concatenate %47, %63, %79, %95 in 2 : vector<1x8x8xf32>, vector<1x8x8xf32>, vector<1x8x8xf32>, vector<1x8x8xf32> -> vector<1x8x32xf32>
    %97 = vector.shape_cast %96 : vector<1x8x32xf32> to vector<8x32xf32>
    %98 = arith.truncf %97 : vector<8x32xf32> to vector<8x32xbf16>
    %c0_38 = arith.constant 0 : index
    %c0_39 = arith.constant 0 : index
    %c0_40 = arith.constant 0 : index
    %99 = vector.load %arg9[%c0_38, %c0_39, %c0_40] : memref<1x32x32xbf16, #tpu.memory_space<vmem>>, vector<1x32x32xbf16>
    %100 = vector.shape_cast %99 : vector<1x32x32xbf16> to vector<32x32xbf16>
    %cst_41 = arith.constant dense<0.000000e+00> : vector<8x32xf32>
    %101 = tpu.matmul %98, %100, %cst_41 {dimension_numbers = #tpu.dot_dimension_numbers<[1], [0], [0], [1], [0, 0, 1, 1], [], []>} : vector<8x32xbf16>, vector<32x32xbf16>, vector<8x32xf32> -> vector<8x32xf32>
    %c0_42 = arith.constant 0 : index
    %c0_43 = arith.constant 0 : index
    %c0_44 = arith.constant 0 : index
    %102 = vector.load %arg10[%c0_42, %c0_43, %c0_44] : memref<1x1x32xf32, #tpu.memory_space<vmem>>, vector<1x1x32xf32>
    %103 = vector.shape_cast %102 : vector<1x1x32xf32> to vector<1x32xf32>
    %104 = vector.broadcast %103 : vector<1x32xf32> to vector<8x32xf32>
    %105 = arith.addf %101, %104 : vector<8x32xf32>
    %106 = arith.addf %3, %105 : vector<8x32xf32>
    %c0_45 = arith.constant 0 : index
    %c0_46 = arith.constant 0 : index
    %c0_47 = arith.constant 0 : index
    %107 = vector.load %arg11[%c0_45, %c0_46, %c0_47] : memref<1x1x32xf32, #tpu.memory_space<vmem>>, vector<1x1x32xf32>
    %108 = vector.shape_cast %107 : vector<1x1x32xf32> to vector<1x32xf32>
    %c0_48 = arith.constant 0 : index
    %c0_49 = arith.constant 0 : index
    %c0_50 = arith.constant 0 : index
    %109 = vector.load %arg12[%c0_48, %c0_49, %c0_50] : memref<1x1x32xf32, #tpu.memory_space<vmem>>, vector<1x1x32xf32>
    %110 = vector.shape_cast %109 : vector<1x1x32xf32> to vector<1x32xf32>
    %cst_51 = arith.constant dense<0.000000e+00> : vector<8xf32>
    %111 = vector.multi_reduction <add>, %106, %cst_51 [1] : vector<8x32xf32> to vector<8xf32>
    %112 = vector.shape_cast %111 : vector<8xf32> to vector<8x1xf32>
    %cst_52 = arith.constant 3.200000e+01 : f32
    %113 = vector.broadcast %cst_52 : f32 to vector<8x1xf32>
    %114 = arith.divf %112, %113 : vector<8x1xf32>
    %115 = vector.broadcast %114 : vector<8x1xf32> to vector<8x32xf32>
    %116 = arith.subf %106, %115 : vector<8x32xf32>
    %117 = arith.mulf %116, %116 : vector<8x32xf32>
    %cst_53 = arith.constant dense<0.000000e+00> : vector<8xf32>
    %118 = vector.multi_reduction <add>, %117, %cst_53 [1] : vector<8x32xf32> to vector<8xf32>
    %119 = vector.shape_cast %118 : vector<8xf32> to vector<8x1xf32>
    %cst_54 = arith.constant 3.200000e+01 : f32
    %120 = vector.broadcast %cst_54 : f32 to vector<8x1xf32>
    %121 = arith.divf %119, %120 : vector<8x1xf32>
    %122 = vector.broadcast %114 : vector<8x1xf32> to vector<8x32xf32>
    %123 = arith.subf %106, %122 : vector<8x32xf32>
    %cst_55 = arith.constant 9.99999974E-6 : f32
    %124 = vector.broadcast %cst_55 : f32 to vector<8x1xf32>
    %125 = arith.addf %121, %124 : vector<8x1xf32>
    %126 = math.rsqrt %125 : vector<8x1xf32>
    %127 = vector.broadcast %126 : vector<8x1xf32> to vector<8x32xf32>
    %128 = arith.mulf %123, %127 : vector<8x32xf32>
    %129 = vector.broadcast %108 : vector<1x32xf32> to vector<8x32xf32>
    %130 = arith.mulf %128, %129 : vector<8x32xf32>
    %131 = vector.broadcast %110 : vector<1x32xf32> to vector<8x32xf32>
    %132 = arith.addf %130, %131 : vector<8x32xf32>
    %133 = arith.truncf %132 : vector<8x32xf32> to vector<8x32xbf16>
    %c0_56 = arith.constant 0 : index
    %c0_57 = arith.constant 0 : index
    %c0_58 = arith.constant 0 : index
    %134 = vector.load %arg13[%c0_56, %c0_57, %c0_58] : memref<1x32x64xbf16, #tpu.memory_space<vmem>>, vector<1x32x64xbf16>
    %135 = vector.shape_cast %134 : vector<1x32x64xbf16> to vector<32x64xbf16>
    %cst_59 = arith.constant dense<0.000000e+00> : vector<8x64xf32>
    %136 = tpu.matmul %133, %135, %cst_59 {dimension_numbers = #tpu.dot_dimension_numbers<[1], [0], [0], [1], [0, 0, 1, 1], [], []>} : vector<8x32xbf16>, vector<32x64xbf16>, vector<8x64xf32> -> vector<8x64xf32>
    %c0_60 = arith.constant 0 : index
    %c0_61 = arith.constant 0 : index
    %c0_62 = arith.constant 0 : index
    %137 = vector.load %arg14[%c0_60, %c0_61, %c0_62] : memref<1x1x64xf32, #tpu.memory_space<vmem>>, vector<1x1x64xf32>
    %138 = vector.shape_cast %137 : vector<1x1x64xf32> to vector<1x64xf32>
    %139 = vector.broadcast %138 : vector<1x64xf32> to vector<8x64xf32>
    %140 = arith.addf %136, %139 : vector<8x64xf32>
    %cst_63 = arith.constant 0.000000e+00 : f32
    %141 = vector.broadcast %cst_63 : f32 to vector<8x64xf32>
    %142 = arith.maximumf %140, %141 : vector<8x64xf32>
    %143 = arith.truncf %142 : vector<8x64xf32> to vector<8x64xbf16>
    %c0_64 = arith.constant 0 : index
    %c0_65 = arith.constant 0 : index
    %c0_66 = arith.constant 0 : index
    %144 = vector.load %arg15[%c0_64, %c0_65, %c0_66] : memref<1x64x32xbf16, #tpu.memory_space<vmem>>, vector<1x64x32xbf16>
    %145 = vector.shape_cast %144 : vector<1x64x32xbf16> to vector<64x32xbf16>
    %cst_67 = arith.constant dense<0.000000e+00> : vector<8x32xf32>
    %146 = tpu.matmul %143, %145, %cst_67 {dimension_numbers = #tpu.dot_dimension_numbers<[1], [0], [0], [1], [0, 0, 1, 1], [], []>} : vector<8x64xbf16>, vector<64x32xbf16>, vector<8x32xf32> -> vector<8x32xf32>
    %c0_68 = arith.constant 0 : index
    %c0_69 = arith.constant 0 : index
    %c0_70 = arith.constant 0 : index
    %147 = vector.load %arg16[%c0_68, %c0_69, %c0_70] : memref<1x1x32xf32, #tpu.memory_space<vmem>>, vector<1x1x32xf32>
    %148 = vector.shape_cast %147 : vector<1x1x32xf32> to vector<1x32xf32>
    %149 = vector.broadcast %148 : vector<1x32xf32> to vector<8x32xf32>
    %150 = arith.addf %146, %149 : vector<8x32xf32>
    %151 = arith.addf %132, %150 : vector<8x32xf32>
    %c0_71 = arith.constant 0 : index
    %c0_72 = arith.constant 0 : index
    %c0_73 = arith.constant 0 : index
    %152 = vector.load %arg17[%c0_71, %c0_72, %c0_73] : memref<1x1x32xf32, #tpu.memory_space<vmem>>, vector<1x1x32xf32>
    %153 = vector.shape_cast %152 : vector<1x1x32xf32> to vector<1x32xf32>
    %c0_74 = arith.constant 0 : index
    %c0_75 = arith.constant 0 : index
    %c0_76 = arith.constant 0 : index
    %154 = vector.load %arg18[%c0_74, %c0_75, %c0_76] : memref<1x1x32xf32, #tpu.memory_space<vmem>>, vector<1x1x32xf32>
    %155 = vector.shape_cast %154 : vector<1x1x32xf32> to vector<1x32xf32>
    %cst_77 = arith.constant dense<0.000000e+00> : vector<8xf32>
    %156 = vector.multi_reduction <add>, %151, %cst_77 [1] : vector<8x32xf32> to vector<8xf32>
    %157 = vector.shape_cast %156 : vector<8xf32> to vector<8x1xf32>
    %cst_78 = arith.constant 3.200000e+01 : f32
    %158 = vector.broadcast %cst_78 : f32 to vector<8x1xf32>
    %159 = arith.divf %157, %158 : vector<8x1xf32>
    %160 = vector.broadcast %159 : vector<8x1xf32> to vector<8x32xf32>
    %161 = arith.subf %151, %160 : vector<8x32xf32>
    %162 = arith.mulf %161, %161 : vector<8x32xf32>
    %cst_79 = arith.constant dense<0.000000e+00> : vector<8xf32>
    %163 = vector.multi_reduction <add>, %162, %cst_79 [1] : vector<8x32xf32> to vector<8xf32>
    %164 = vector.shape_cast %163 : vector<8xf32> to vector<8x1xf32>
    %cst_80 = arith.constant 3.200000e+01 : f32
    %165 = vector.broadcast %cst_80 : f32 to vector<8x1xf32>
    %166 = arith.divf %164, %165 : vector<8x1xf32>
    %167 = vector.broadcast %159 : vector<8x1xf32> to vector<8x32xf32>
    %168 = arith.subf %151, %167 : vector<8x32xf32>
    %cst_81 = arith.constant 9.99999974E-6 : f32
    %169 = vector.broadcast %cst_81 : f32 to vector<8x1xf32>
    %170 = arith.addf %166, %169 : vector<8x1xf32>
    %171 = math.rsqrt %170 : vector<8x1xf32>
    %172 = vector.broadcast %171 : vector<8x1xf32> to vector<8x32xf32>
    %173 = arith.mulf %168, %172 : vector<8x32xf32>
    %174 = vector.broadcast %153 : vector<1x32xf32> to vector<8x32xf32>
    %175 = arith.mulf %173, %174 : vector<8x32xf32>
    %176 = vector.broadcast %155 : vector<1x32xf32> to vector<8x32xf32>
    %177 = arith.addf %175, %176 : vector<8x32xf32>
    %178 = arith.truncf %177 : vector<8x32xf32> to vector<8x32xbf16>
    %c0_82 = arith.constant 0 : index
    %c0_83 = arith.constant 0 : index
    %179 = vector.load %arg19[%c0_82, %c0_83] : memref<32x32xbf16, #tpu.memory_space<vmem>>, vector<32x32xbf16>
    %cst_84 = arith.constant dense<0.000000e+00> : vector<8x32xf32>
    %180 = tpu.matmul %178, %179, %cst_84 {dimension_numbers = #tpu.dot_dimension_numbers<[1], [0], [0], [1], [0, 0, 1, 1], [], []>} : vector<8x32xbf16>, vector<32x32xbf16>, vector<8x32xf32> -> vector<8x32xf32>
    %c0_85 = arith.constant 0 : index
    %c0_86 = arith.constant 0 : index
    %181 = vector.load %arg20[%c0_85, %c0_86] : memref<1x32xf32, #tpu.memory_space<vmem>>, vector<1x32xf32>
    %182 = vector.broadcast %181 : vector<1x32xf32> to vector<8x32xf32>
    %183 = arith.addf %180, %182 : vector<8x32xf32>
    %c0_87 = arith.constant 0 : index
    %c0_88 = arith.constant 0 : index
    %184 = vector.load %arg21[%c0_87, %c0_88] : memref<1x32xf32, #tpu.memory_space<vmem>>, vector<1x32xf32>
    %c0_89 = arith.constant 0 : index
    %c0_90 = arith.constant 0 : index
    %185 = vector.load %arg22[%c0_89, %c0_90] : memref<1x32xf32, #tpu.memory_space<vmem>>, vector<1x32xf32>
    %cst_91 = arith.constant dense<0.000000e+00> : vector<8xf32>
    %186 = vector.multi_reduction <add>, %183, %cst_91 [1] : vector<8x32xf32> to vector<8xf32>
    %187 = vector.shape_cast %186 : vector<8xf32> to vector<8x1xf32>
    %cst_92 = arith.constant 3.200000e+01 : f32
    %188 = vector.broadcast %cst_92 : f32 to vector<8x1xf32>
    %189 = arith.divf %187, %188 : vector<8x1xf32>
    %190 = vector.broadcast %189 : vector<8x1xf32> to vector<8x32xf32>
    %191 = arith.subf %183, %190 : vector<8x32xf32>
    %192 = arith.mulf %191, %191 : vector<8x32xf32>
    %cst_93 = arith.constant dense<0.000000e+00> : vector<8xf32>
    %193 = vector.multi_reduction <add>, %192, %cst_93 [1] : vector<8x32xf32> to vector<8xf32>
    %194 = vector.shape_cast %193 : vector<8xf32> to vector<8x1xf32>
    %cst_94 = arith.constant 3.200000e+01 : f32
    %195 = vector.broadcast %cst_94 : f32 to vector<8x1xf32>
    %196 = arith.divf %194, %195 : vector<8x1xf32>
    %197 = vector.broadcast %189 : vector<8x1xf32> to vector<8x32xf32>
    %198 = arith.subf %183, %197 : vector<8x32xf32>
    %cst_95 = arith.constant 9.99999974E-6 : f32
    %199 = vector.broadcast %cst_95 : f32 to vector<8x1xf32>
    %200 = arith.addf %196, %199 : vector<8x1xf32>
    %201 = math.rsqrt %200 : vector<8x1xf32>
    %202 = vector.broadcast %201 : vector<8x1xf32> to vector<8x32xf32>
    %203 = arith.mulf %198, %202 : vector<8x32xf32>
    %204 = vector.broadcast %184 : vector<1x32xf32> to vector<8x32xf32>
    %205 = arith.mulf %203, %204 : vector<8x32xf32>
    %206 = vector.broadcast %185 : vector<1x32xf32> to vector<8x32xf32>
    %207 = arith.addf %205, %206 : vector<8x32xf32>
    %cst_96 = arith.constant 5.000000e-01 : f32
    %208 = vector.broadcast %cst_96 : f32 to vector<8x32xf32>
    %209 = arith.mulf %208, %207 : vector<8x32xf32>
    %cst_97 = arith.constant 0.707106769 : f32
    %210 = vector.broadcast %cst_97 : f32 to vector<8x32xf32>
    %211 = arith.mulf %207, %210 : vector<8x32xf32>
    %212 = math.erf %211 : vector<8x32xf32>
    %cst_98 = arith.constant 1.000000e+00 : f32
    %213 = vector.broadcast %cst_98 : f32 to vector<8x32xf32>
    %214 = arith.addf %213, %212 : vector<8x32xf32>
    %215 = arith.mulf %209, %214 : vector<8x32xf32>
    %216 = arith.truncf %215 : vector<8x32xf32> to vector<8x32xbf16>
    %c0_99 = arith.constant 0 : index
    %c0_100 = arith.constant 0 : index
    %217 = vector.load %arg23[%c0_99, %c0_100] : memref<32x32xbf16, #tpu.memory_space<vmem>>, vector<32x32xbf16>
    %cst_101 = arith.constant dense<0.000000e+00> : vector<8x32xf32>
    %218 = tpu.matmul %216, %217, %cst_101 {dimension_numbers = #tpu.dot_dimension_numbers<[1], [0], [0], [1], [0, 0, 1, 1], [], []>} : vector<8x32xbf16>, vector<32x32xbf16>, vector<8x32xf32> -> vector<8x32xf32>
    %c0_102 = arith.constant 0 : index
    %c0_103 = arith.constant 0 : index
    %219 = vector.load %arg24[%c0_102, %c0_103] : memref<1x32xf32, #tpu.memory_space<vmem>>, vector<1x32xf32>
    %220 = vector.broadcast %219 : vector<1x32xf32> to vector<8x32xf32>
    %221 = arith.addf %218, %220 : vector<8x32xf32>
    %c0_104 = arith.constant 0 : index
    %c0_105 = arith.constant 0 : index
    %222 = vector.load %arg25[%c0_104, %c0_105] : memref<1x32xf32, #tpu.memory_space<vmem>>, vector<1x32xf32>
    %c0_106 = arith.constant 0 : index
    %c0_107 = arith.constant 0 : index
    %223 = vector.load %arg26[%c0_106, %c0_107] : memref<1x32xf32, #tpu.memory_space<vmem>>, vector<1x32xf32>
    %cst_108 = arith.constant dense<0.000000e+00> : vector<8xf32>
    %224 = vector.multi_reduction <add>, %221, %cst_108 [1] : vector<8x32xf32> to vector<8xf32>
    %225 = vector.shape_cast %224 : vector<8xf32> to vector<8x1xf32>
    %cst_109 = arith.constant 3.200000e+01 : f32
    %226 = vector.broadcast %cst_109 : f32 to vector<8x1xf32>
    %227 = arith.divf %225, %226 : vector<8x1xf32>
    %228 = vector.broadcast %227 : vector<8x1xf32> to vector<8x32xf32>
    %229 = arith.subf %221, %228 : vector<8x32xf32>
    %230 = arith.mulf %229, %229 : vector<8x32xf32>
    %cst_110 = arith.constant dense<0.000000e+00> : vector<8xf32>
    %231 = vector.multi_reduction <add>, %230, %cst_110 [1] : vector<8x32xf32> to vector<8xf32>
    %232 = vector.shape_cast %231 : vector<8xf32> to vector<8x1xf32>
    %cst_111 = arith.constant 3.200000e+01 : f32
    %233 = vector.broadcast %cst_111 : f32 to vector<8x1xf32>
    %234 = arith.divf %232, %233 : vector<8x1xf32>
    %235 = vector.broadcast %227 : vector<8x1xf32> to vector<8x32xf32>
    %236 = arith.subf %221, %235 : vector<8x32xf32>
    %cst_112 = arith.constant 9.99999974E-6 : f32
    %237 = vector.broadcast %cst_112 : f32 to vector<8x1xf32>
    %238 = arith.addf %234, %237 : vector<8x1xf32>
    %239 = math.rsqrt %238 : vector<8x1xf32>
    %240 = vector.broadcast %239 : vector<8x1xf32> to vector<8x32xf32>
    %241 = arith.mulf %236, %240 : vector<8x32xf32>
    %242 = vector.broadcast %222 : vector<1x32xf32> to vector<8x32xf32>
    %243 = arith.mulf %241, %242 : vector<8x32xf32>
    %244 = vector.broadcast %223 : vector<1x32xf32> to vector<8x32xf32>
    %245 = arith.addf %243, %244 : vector<8x32xf32>
    %246 = arith.addf %245, %177 : vector<8x32xf32>
    %c0_113 = arith.constant 0 : index
    %c0_114 = arith.constant 0 : index
    %247 = vector.load %arg27[%c0_113, %c0_114] : memref<1x32xf32, #tpu.memory_space<vmem>>, vector<1x32xf32>
    %c0_115 = arith.constant 0 : index
    %c0_116 = arith.constant 0 : index
    %248 = vector.load %arg28[%c0_115, %c0_116] : memref<1x32xf32, #tpu.memory_space<vmem>>, vector<1x32xf32>
    %cst_117 = arith.constant dense<0.000000e+00> : vector<8xf32>
    %249 = vector.multi_reduction <add>, %246, %cst_117 [1] : vector<8x32xf32> to vector<8xf32>
    %250 = vector.shape_cast %249 : vector<8xf32> to vector<8x1xf32>
    %cst_118 = arith.constant 3.200000e+01 : f32
    %251 = vector.broadcast %cst_118 : f32 to vector<8x1xf32>
    %252 = arith.divf %250, %251 : vector<8x1xf32>
    %253 = vector.broadcast %252 : vector<8x1xf32> to vector<8x32xf32>
    %254 = arith.subf %246, %253 : vector<8x32xf32>
    %255 = arith.mulf %254, %254 : vector<8x32xf32>
    %cst_119 = arith.constant dense<0.000000e+00> : vector<8xf32>
    %256 = vector.multi_reduction <add>, %255, %cst_119 [1] : vector<8x32xf32> to vector<8xf32>
    %257 = vector.shape_cast %256 : vector<8xf32> to vector<8x1xf32>
    %cst_120 = arith.constant 3.200000e+01 : f32
    %258 = vector.broadcast %cst_120 : f32 to vector<8x1xf32>
    %259 = arith.divf %257, %258 : vector<8x1xf32>
    %260 = vector.broadcast %252 : vector<8x1xf32> to vector<8x32xf32>
    %261 = arith.subf %246, %260 : vector<8x32xf32>
    %cst_121 = arith.constant 9.99999974E-6 : f32
    %262 = vector.broadcast %cst_121 : f32 to vector<8x1xf32>
    %263 = arith.addf %259, %262 : vector<8x1xf32>
    %264 = math.rsqrt %263 : vector<8x1xf32>
    %265 = vector.broadcast %264 : vector<8x1xf32> to vector<8x32xf32>
    %266 = arith.mulf %261, %265 : vector<8x32xf32>
    %267 = vector.broadcast %247 : vector<1x32xf32> to vector<8x32xf32>
    %268 = arith.mulf %266, %267 : vector<8x32xf32>
    %269 = vector.broadcast %248 : vector<1x32xf32> to vector<8x32xf32>
    %270 = arith.addf %268, %269 : vector<8x32xf32>
    %cst_122 = arith.constant 5.000000e-01 : f32
    %271 = vector.broadcast %cst_122 : f32 to vector<8x32xf32>
    %272 = arith.mulf %271, %270 : vector<8x32xf32>
    %cst_123 = arith.constant 0.707106769 : f32
    %273 = vector.broadcast %cst_123 : f32 to vector<8x32xf32>
    %274 = arith.mulf %270, %273 : vector<8x32xf32>
    %275 = math.erf %274 : vector<8x32xf32>
    %cst_124 = arith.constant 1.000000e+00 : f32
    %276 = vector.broadcast %cst_124 : f32 to vector<8x32xf32>
    %277 = arith.addf %276, %275 : vector<8x32xf32>
    %278 = arith.mulf %272, %277 : vector<8x32xf32>
    %c0_125 = arith.constant 0 : index
    %c0_126 = arith.constant 0 : index
    %279 = vector.load %arg30[%c0_125, %c0_126] : memref<8x32xf32, #tpu.memory_space<vmem>>, vector<8x32xf32>
    tpu.vector_store %arg30[%c0_125, %c0_126], %278 {strides = array<i32>} : memref<8x32xf32, #tpu.memory_space<vmem>>, vector<8x32xf32>,
    %c0_127 = arith.constant 0 : index
    %c0_128 = arith.constant 0 : index
    %c0_129 = arith.constant 0 : index
    %280 = vector.load %arg29[%c0_127, %c0_128, %c0_129] : memref<1x8x32xf32, #tpu.memory_space<vmem>>, vector<1x8x32xf32>
    %281 = vector.shape_cast %280 : vector<1x8x32xf32> to vector<8x32xf32>
    %282 = vector.shape_cast %278 : vector<8x32xf32> to vector<1x8x32xf32>
    tpu.vector_store %arg29[%c0_127, %c0_128, %c0_129], %282 {strides = array<i32>} : memref<1x8x32xf32, #tpu.memory_space<vmem>>, vector<1x8x32xf32>,
    return
  }
  func.func @transform_0(%arg0: i32, %arg1: i32) -> (i32, i32) {
    %c0_i32 = arith.constant 0 : i32
    %c0_i32_0 = arith.constant 0 : i32
    return %arg0, %c0_i32 : i32, i32
  }
  func.func @transform_1(%arg0: i32, %arg1: i32) -> (i32, i32, i32) {
    %c0_i32 = arith.constant 0 : i32
    %c0_i32_0 = arith.constant 0 : i32
    %c0_i32_1 = arith.constant 0 : i32
    return %arg1, %c0_i32, %c0_i32_0 : i32, i32, i32
  }
  func.func @transform_2(%arg0: i32, %arg1: i32) -> (i32, i32, i32) {
    %c0_i32 = arith.constant 0 : i32
    %c0_i32_0 = arith.constant 0 : i32
    %c0_i32_1 = arith.constant 0 : i32
    return %arg1, %c0_i32, %c0_i32_0 : i32, i32, i32
  }
  func.func @transform_3(%arg0: i32, %arg1: i32) -> (i32, i32, i32) {
    %c0_i32 = arith.constant 0 : i32
    %c0_i32_0 = arith.constant 0 : i32
    %c0_i32_1 = arith.constant 0 : i32
    return %arg1, %c0_i32, %c0_i32_0 : i32, i32, i32
  }
  func.func @transform_4(%arg0: i32, %arg1: i32) -> (i32, i32, i32) {
    %c0_i32 = arith.constant 0 : i32
    %c0_i32_0 = arith.constant 0 : i32
    %c0_i32_1 = arith.constant 0 : i32
    return %arg1, %c0_i32, %c0_i32_0 : i32, i32, i32
  }
  func.func @transform_5(%arg0: i32, %arg1: i32) -> (i32, i32, i32) {
    %c0_i32 = arith.constant 0 : i32
    %c0_i32_0 = arith.constant 0 : i32
    %c0_i32_1 = arith.constant 0 : i32
    return %arg1, %c0_i32, %c0_i32_0 : i32, i32, i32
  }
  func.func @transform_6(%arg0: i32, %arg1: i32) -> (i32, i32, i32) {
    %c0_i32 = arith.constant 0 : i32
    %c0_i32_0 = arith.constant 0 : i32
    %c0_i32_1 = arith.constant 0 : i32
    return %arg1, %c0_i32, %c0_i32_0 : i32, i32, i32
  }
  func.func @transform_7(%arg0: i32, %arg1: i32) -> (i32, i32, i32) {
    %c0_i32 = arith.constant 0 : i32
    %c0_i32_0 = arith.constant 0 : i32
    %c0_i32_1 = arith.constant 0 : i32
    return %arg1, %c0_i32, %c0_i32_0 : i32, i32, i32
  }
  func.func @transform_8(%arg0: i32, %arg1: i32) -> (i32, i32, i32) {
    %c0_i32 = arith.constant 0 : i32
    %c0_i32_0 = arith.constant 0 : i32
    %c0_i32_1 = arith.constant 0 : i32
    return %arg1, %c0_i32, %c0_i32_0 : i32, i32, i32
  }
  func.func @transform_9(%arg0: i32, %arg1: i32) -> (i32, i32, i32) {
    %c0_i32 = arith.constant 0 : i32
    %c0_i32_0 = arith.constant 0 : i32
    %c0_i32_1 = arith.constant 0 : i32
    return %arg1, %c0_i32, %c0_i32_0 : i32, i32, i32
  }
  func.func @transform_10(%arg0: i32, %arg1: i32) -> (i32, i32, i32) {
    %c0_i32 = arith.constant 0 : i32
    %c0_i32_0 = arith.constant 0 : i32
    %c0_i32_1 = arith.constant 0 : i32
    return %arg1, %c0_i32, %c0_i32_0 : i32, i32, i32
  }
  func.func @transform_11(%arg0: i32, %arg1: i32) -> (i32, i32, i32) {
    %c0_i32 = arith.constant 0 : i32
    %c0_i32_0 = arith.constant 0 : i32
    %c0_i32_1 = arith.constant 0 : i32
    return %arg1, %c0_i32, %c0_i32_0 : i32, i32, i32
  }
  func.func @transform_12(%arg0: i32, %arg1: i32) -> (i32, i32, i32) {
    %c0_i32 = arith.constant 0 : i32
    %c0_i32_0 = arith.constant 0 : i32
    %c0_i32_1 = arith.constant 0 : i32
    return %arg1, %c0_i32, %c0_i32_0 : i32, i32, i32
  }
  func.func @transform_13(%arg0: i32, %arg1: i32) -> (i32, i32, i32) {
    %c0_i32 = arith.constant 0 : i32
    %c0_i32_0 = arith.constant 0 : i32
    %c0_i32_1 = arith.constant 0 : i32
    return %arg1, %c0_i32, %c0_i32_0 : i32, i32, i32
  }
  func.func @transform_14(%arg0: i32, %arg1: i32) -> (i32, i32, i32) {
    %c0_i32 = arith.constant 0 : i32
    %c0_i32_0 = arith.constant 0 : i32
    %c0_i32_1 = arith.constant 0 : i32
    return %arg1, %c0_i32, %c0_i32_0 : i32, i32, i32
  }
  func.func @transform_15(%arg0: i32, %arg1: i32) -> (i32, i32, i32) {
    %c0_i32 = arith.constant 0 : i32
    %c0_i32_0 = arith.constant 0 : i32
    %c0_i32_1 = arith.constant 0 : i32
    return %arg1, %c0_i32, %c0_i32_0 : i32, i32, i32
  }
  func.func @transform_16(%arg0: i32, %arg1: i32) -> (i32, i32, i32) {
    %c0_i32 = arith.constant 0 : i32
    %c0_i32_0 = arith.constant 0 : i32
    %c0_i32_1 = arith.constant 0 : i32
    return %arg1, %c0_i32, %c0_i32_0 : i32, i32, i32
  }
  func.func @transform_17(%arg0: i32, %arg1: i32) -> (i32, i32) {
    %c0_i32 = arith.constant 0 : i32
    %c0_i32_0 = arith.constant 0 : i32
    %c0_i32_1 = arith.constant 0 : i32
    return %c0_i32, %c0_i32_0 : i32, i32
  }
  func.func @transform_18(%arg0: i32, %arg1: i32) -> (i32, i32) {
    %c0_i32 = arith.constant 0 : i32
    %c0_i32_0 = arith.constant 0 : i32
    %c0_i32_1 = arith.constant 0 : i32
    return %c0_i32, %c0_i32_0 : i32, i32
  }
  func.func @transform_19(%arg0: i32, %arg1: i32) -> (i32, i32) {
    %c0_i32 = arith.constant 0 : i32
    %c0_i32_0 = arith.constant 0 : i32
    %c0_i32_1 = arith.constant 0 : i32
    return %c0_i32, %c0_i32_0 : i32, i32
  }
  func.func @transform_20(%arg0: i32, %arg1: i32) -> (i32, i32) {
    %c0_i32 = arith.constant 0 : i32
    %c0_i32_0 = arith.constant 0 : i32
    %c0_i32_1 = arith.constant 0 : i32
    return %c0_i32, %c0_i32_0 : i32, i32
  }
  func.func @transform_21(%arg0: i32, %arg1: i32) -> (i32, i32) {
    %c0_i32 = arith.constant 0 : i32
    %c0_i32_0 = arith.constant 0 : i32
    %c0_i32_1 = arith.constant 0 : i32
    return %c0_i32, %c0_i32_0 : i32, i32
  }
  func.func @transform_22(%arg0: i32, %arg1: i32) -> (i32, i32) {
    %c0_i32 = arith.constant 0 : i32
    %c0_i32_0 = arith.constant 0 : i32
    %c0_i32_1 = arith.constant 0 : i32
    return %c0_i32, %c0_i32_0 : i32, i32
  }
  func.func @transform_23(%arg0: i32, %arg1: i32) -> (i32, i32) {
    %c0_i32 = arith.constant 0 : i32
    %c0_i32_0 = arith.constant 0 : i32
    %c0_i32_1 = arith.constant 0 : i32
    return %c0_i32, %c0_i32_0 : i32, i32
  }
  func.func @transform_24(%arg0: i32, %arg1: i32) -> (i32, i32) {
    %c0_i32 = arith.constant 0 : i32
    %c0_i32_0 = arith.constant 0 : i32
    %c0_i32_1 = arith.constant 0 : i32
    return %c0_i32, %c0_i32_0 : i32, i32
  }
  func.func @transform_25(%arg0: i32, %arg1: i32) -> (i32, i32) {
    %c0_i32 = arith.constant 0 : i32
    %c0_i32_0 = arith.constant 0 : i32
    %c0_i32_1 = arith.constant 0 : i32
    return %c0_i32, %c0_i32_0 : i32, i32
  }
  func.func @transform_26(%arg0: i32, %arg1: i32) -> (i32, i32) {
    %c0_i32 = arith.constant 0 : i32
    %c0_i32_0 = arith.constant 0 : i32
    %c0_i32_1 = arith.constant 0 : i32
    return %c0_i32, %c0_i32_0 : i32, i32
  }
  func.func @transform_27(%arg0: i32, %arg1: i32) -> (i32, i32, i32) {
    %c0_i32 = arith.constant 0 : i32
    %c0_i32_0 = arith.constant 0 : i32
    return %arg1, %arg0, %c0_i32 : i32, i32, i32
  }
}

</mosaic_0001>

<llo_original>
// kernel: tpu_custom_call.1
$region0: #{tpu_custom_call.1}
  #allocation0 [shape = 'u32[]', space=smem, size = 0x4, offset = 0x4, fixed_abs, tag = 'smem constant byte address 0x4 - core index']
  #allocation1 [shape = 'u32[144,128]{1,0:T(1,128)}', space=vmem, size = 0x12000, scoped, tag = 'internal scratch']
  #allocation2 [shape = 'f32[8,32]{1,0:T(8,128)}', space=vmem, size = 0x1000, scoped, tag = 'scratch operand']
  %s0 = inlined_call_operand.hbm [shape: f32[16,32], index: 0, kind: input, shape index: {}]
  %s1 = inlined_call_operand.vmem [shape: bf16[2,32,32], index: 1, kind: input, shape index: {}]
  %s2 = inlined_call_operand.hbm [shape: f32[2,1,32], index: 2, kind: input, shape index: {}]
  %s3 = inlined_call_operand.vmem [shape: bf16[2,32,32], index: 3, kind: input, shape index: {}]
  %s4 = inlined_call_operand.hbm [shape: f32[2,1,32], index: 4, kind: input, shape index: {}]
  %s5 = inlined_call_operand.vmem [shape: bf16[2,32,32], index: 5, kind: input, shape index: {}]
  %s6 = inlined_call_operand.hbm [shape: f32[2,1,32], index: 6, kind: input, shape index: {}]
  %s7 = inlined_call_operand.hbm [shape: bf16[2,32,32], index: 7, kind: input, shape index: {}]
  %s8 = inlined_call_operand.hbm [shape: f32[2,1,32], index: 8, kind: input, shape index: {}]
  %s9 = inlined_call_operand.hbm [shape: f32[2,1,32], index: 9, kind: input, shape index: {}]
  %s10 = inlined_call_operand.hbm [shape: f32[2,1,32], index: 10, kind: input, shape index: {}]
  %s11 = inlined_call_operand.hbm [shape: bf16[2,32,64], index: 11, kind: input, shape index: {}]
  %s12 = inlined_call_operand.hbm [shape: f32[2,1,64], index: 12, kind: input, shape index: {}]
  %s13 = inlined_call_operand.vmem [shape: bf16[2,64,32], index: 13, kind: input, shape index: {}]
  %s14 = inlined_call_operand.hbm [shape: f32[2,1,32], index: 14, kind: input, shape index: {}]
  %s15 = inlined_call_operand.hbm [shape: f32[2,1,32], index: 15, kind: input, shape index: {}]
  %s16 = inlined_call_operand.hbm [shape: f32[2,1,32], index: 16, kind: input, shape index: {}]
  %s17 = inlined_call_operand.vmem [shape: bf16[32,32], index: 17, kind: input, shape index: {}]
  %s18 = inlined_call_operand.vmem [shape: f32[1,32], index: 18, kind: input, shape index: {}]
  %s19 = inlined_call_operand.vmem [shape: f32[1,32], index: 19, kind: input, shape index: {}]
  %s20 = inlined_call_operand.vmem [shape: f32[1,32], index: 20, kind: input, shape index: {}]
  %s21 = inlined_call_operand.vmem [shape: bf16[32,32], index: 21, kind: input, shape index: {}]
  %s22 = inlined_call_operand.vmem [shape: f32[1,32], index: 22, kind: input, shape index: {}]
  %s23 = inlined_call_operand.vmem [shape: f32[1,32], index: 23, kind: input, shape index: {}]
  %s24 = inlined_call_operand.vmem [shape: f32[1,32], index: 24, kind: input, shape index: {}]
  %s25 = inlined_call_operand.vmem [shape: f32[1,32], index: 25, kind: input, shape index: {}]
  %s26 = inlined_call_operand.vmem [shape: f32[1,32], index: 26, kind: input, shape index: {}]
  %s27 = inlined_call_operand.hbm [shape: f32[2,16,32], index: 27, kind: output, shape index: {}]
  %s28 = sld [smem:[#allocation0]]
  $region197: #{tpu_custom_call.1} parent=0
    _
  %s30 = ssub.s32 1, %s28
  %s31 = scalar_select 0, %s30, %s28
  $region1: #{tpu_custom_call.1} parent=0
    #allocation3 [shape = 'u8[8192]{0}', space=vmem, size = 0x2000, scoped, tag = 'input window, operand 0']
    #allocation4 [shape = 's32[2]{0}', space=sflag, size = 0x8, scoped, tag = 'scoped memory for tpu_custom_call.1']
    #allocation5 [shape = 's32[2]{0}', space=sflag, size = 0x8, scoped, tag = 'scoped memory for tpu_custom_call.1']
    #allocation6 [shape = 'u8[1024]{0}', space=vmem, size = 0x400, scoped, tag = 'input window, operand 2']
    #allocation7 [shape = 's32[2]{0}', space=sflag, size = 0x8, scoped, tag = 'scoped memory for tpu_custom_call.1']
    #allocation8 [shape = 'u8[1024]{0}', space=vmem, size = 0x400, scoped, tag = 'input window, operand 4']
    #allocation9 [shape = 'u8[1024]{0}', space=vmem, size = 0x400, scoped, tag = 'input window, operand 6']
    #allocation10 [shape = 's32[2]{0}', space=sflag, size = 0x8, scoped, tag = 'scoped memory for tpu_custom_call.1']
    #allocation11 [shape = 'u8[16384]{0}', space=vmem, size = 0x4000, scoped, tag = 'input window, operand 7']
    #allocation12 [shape = 'u8[1024]{0}', space=vmem, size = 0x400, scoped, tag = 'input window, operand 8']
    #allocation13 [shape = 's32[2]{0}', space=sflag, size = 0x8, scoped, tag = 'scoped memory for tpu_custom_call.1']
    #allocation14 [shape = 'u8[1024]{0}', space=vmem, size = 0x400, scoped, tag = 'input window, operand 9']
    #allocation15 [shape = 'u8[1024]{0}', space=vmem, size = 0x400, scoped, tag = 'input window, operand 10']
    #allocation16 [shape = 's32[2]{0}', space=sflag, size = 0x8, scoped, tag = 'scoped memory for tpu_custom_call.1']
    #allocation17 [shape = 'u8[16384]{0}', space=vmem, size = 0x4000, scoped, tag = 'input window, operand 11']
    #allocation18 [shape = 'u8[1024]{0}', space=vmem, size = 0x400, scoped, tag = 'input window, operand 12']
    #allocation19 [shape = 's32[2]{0}', space=sflag, size = 0x8, scoped, tag = 'scoped memory for tpu_custom_call.1']
    #allocation20 [shape = 'u8[1024]{0}', space=vmem, size = 0x400, scoped, tag = 'input window, operand 14']
    #allocation21 [shape = 'u8[1024]{0}', space=vmem, size = 0x400, scoped, tag = 'input window, operand 15']
    #allocation22 [shape = 's32[2]{0}', space=sflag, size = 0x8, scoped, tag = 'scoped memory for tpu_custom_call.1']
    #allocation23 [shape = 'u8[1024]{0}', space=vmem, size = 0x400, scoped, tag = 'input window, operand 16']
    #allocation24 [shape = 'u8[8192]{0}', space=vmem, size = 0x2000, scoped, tag = 'output window, operand 0']
    %32 = vsyncpa [#allocation4], 0
    %s33 = scalar_lea.sflag [#allocation4], 1
    %34 = vsyncpa %s33, 0
    %35 = vsyncpa [#allocation7], 0
    %s36 = scalar_lea.sflag [#allocation7], 1
    %37 = vsyncpa %s36, 0
    %38 = vsyncpa [#allocation10], 0
    %s39 = scalar_lea.sflag [#allocation10], 1
    %40 = vsyncpa %s39, 0
    %41 = vsyncpa [#allocation13], 0
    %s42 = scalar_lea.sflag [#allocation13], 1
    %43 = vsyncpa %s42, 0
    %44 = vsyncpa [#allocation16], 0
    %s45 = scalar_lea.sflag [#allocation16], 1
    %46 = vsyncpa %s45, 0
    %47 = vsyncpa [#allocation19], 0
    %s48 = scalar_lea.sflag [#allocation19], 1
    %49 = vsyncpa %s48, 0
    %50 = vsyncpa [#allocation22], 0
    %s51 = scalar_lea.sflag [#allocation22], 1
    %52 = vsyncpa %s51, 0
    %53 = vsyncpa [#allocation5], 0
    %s54 = scalar_lea.sflag [#allocation5], 1
    %55 = vsyncpa %s54, 0
    loop: start=0, step=1, limit=6
    $region2: #{tpu_custom_call.1} parent=1 // loop_pre_header
      _
    $region3: #{tpu_custom_call.1} parent=1 // loop_header
      %s57 = sphi 0, %s61
      %p58 = scmp.ge.s32.totalorder %s57, 6
      %s64 = sphi 0, %s76
      %s65 = sphi 0, %s72
      %s66 = sphi 0, %s64
      %s67 = sphi 0, %s65
      %s68 = sphi 0, %s66
      %s69 = sphi 0, %s67
      %s79 = sphi 0, %s81
      %s82 = sphi 0, %s79
      %s83 = sphi 0, %s82
      %s99 = sphi 0, %s83
      %s105 = sphi 0, %s107
      %s108 = sphi 0, %s105
      %s109 = sphi 0, %s108
      %s125 = sphi 0, %s109
      %s131 = sphi 0, %s133
      %s134 = sphi 0, %s131
      %s135 = sphi 0, %s134
      %s151 = sphi 0, %s135
      %s157 = sphi 0, %s159
      %s160 = sphi 0, %s157
      %s161 = sphi 0, %s160
      %s177 = sphi 0, %s161
      %s183 = sphi 0, %s185
      %s186 = sphi 0, %s183
      %s187 = sphi 0, %s186
      %s203 = sphi 0, %s187
      %s209 = sphi 0, %s211
      %s212 = sphi 0, %s209
      %s213 = sphi 0, %s212
      %s229 = sphi 0, %s213
      %s235 = sphi 0, %s237
      %s238 = sphi 0, %s235
      %s239 = sphi 0, %s238
      %s255 = sphi 0, %s239
      %s261 = sphi 0, %s263
      %s264 = sphi 0, %s261
      %s265 = sphi 0, %s264
      %s281 = sphi 0, %s265
      %s287 = sphi 0, %s289
      %s290 = sphi 0, %s287
      %s291 = sphi 0, %s290
      %s307 = sphi 0, %s291
      %s313 = sphi 0, %s315
      %s316 = sphi 0, %s313
      %s317 = sphi 0, %s316
      %s333 = sphi 0, %s317
      %s339 = sphi 0, %s341
      %s342 = sphi 0, %s339
      %s343 = sphi 0, %s342
      %s359 = sphi 0, %s343
      %s365 = sphi 0, %s367
      %s368 = sphi 0, %s365
      %s369 = sphi 0, %s368
      %s385 = sphi 0, %s369
      %s391 = sphi 0, %s393
      %s394 = sphi 0, %s391
      %s395 = sphi 0, %s394
      %s411 = sphi 0, %s395
      %s417 = sphi 0, %s419
      %s420 = sphi 0, %s417
      %s421 = sphi 0, %s420
      %s437 = sphi 0, %s421
      %s443 = sphi 0, %s445
      %s446 = sphi 0, %s443
      %s447 = sphi 0, %s446
      %s463 = sphi 0, %s447
      %s469 = sphi 0, %s471
      %s472 = sphi 0, %s469
      %s473 = sphi 0, %s472
      %s489 = sphi 0, %s473
      %s495 = sphi 0, %s497
      %s498 = sphi 0, %s495
      %s499 = sphi 0, %s498
      %s515 = sphi 0, %s499
      %s519 = sphi 0, %s519
      %s521 = sphi 0, %s519
      %s522 = sphi 0, %s521
      %s536 = sphi 0, %s522
      %s540 = sphi 0, %s540
      %s542 = sphi 0, %s540
      %s543 = sphi 0, %s542
      %s557 = sphi 0, %s543
      %s561 = sphi 0, %s561
      %s563 = sphi 0, %s561
      %s564 = sphi 0, %s563
      %s578 = sphi 0, %s564
      %s582 = sphi 0, %s582
      %s584 = sphi 0, %s582
      %s585 = sphi 0, %s584
      %s599 = sphi 0, %s585
      %s603 = sphi 0, %s603
      %s605 = sphi 0, %s603
      %s606 = sphi 0, %s605
      %s620 = sphi 0, %s606
      %s624 = sphi 0, %s624
      %s626 = sphi 0, %s624
      %s627 = sphi 0, %s626
      %s641 = sphi 0, %s627
      %s645 = sphi 0, %s645
      %s647 = sphi 0, %s645
      %s648 = sphi 0, %s647
      %s662 = sphi 0, %s648
      %s666 = sphi 0, %s666
      %s668 = sphi 0, %s666
      %s669 = sphi 0, %s668
      %s683 = sphi 0, %s669
      %s687 = sphi 0, %s687
      %s689 = sphi 0, %s687
      %s690 = sphi 0, %s689
      %s704 = sphi 0, %s690
      %s708 = sphi 0, %s708
      %s710 = sphi 0, %s708
      %s711 = sphi 0, %s710
      %s725 = sphi 0, %s711
      %s733 = sphi 0, %s735
      %s736 = sphi 0, %s733
      %s737 = sphi 0, %s736
      %s753 = sphi 0, %s737
    $region4: #{tpu_custom_call.1} parent=1 // loop_header_branch
      %60 = sbr.rel (%p58) target = $region8
    $region5: #{tpu_custom_call.1} parent=1 // loop_body
      %s62 = ssub.s32 %s57, 1
      %s63 = ssub.s32 %s57, 2
      %s70 = sadd.s32 1, %s65
      %p71 = scmp.ge.s32.totalorder %s70, 2
      %s72 = scalar_select %p71, 0, %s70
      %s73 = sadd.s32 1, %s64
      %s74 = scalar_select %p71, %s73, %s64
      %p75 = scmp.ge.s32.totalorder %s74, 2
      %s76 = scalar_select %p75, 0, %s74
      %s77 = ssub.s32 %s64, %s76
      %p78 = scmp.eq.s32.totalorder %s77, 0
      %s80 = sadd.s32 %s79, 1
      %s81 = scalar_select %p78, %s79, %s80
      %p84 = pneg %p78
      %p85 = scmp.eq.s32.totalorder %s57, 3
      %p86 = por %p84, %p85
      %p87 = scmp.ne.s32.totalorder %s79, %s82
      %p88 = scmp.eq.s32.totalorder %s57, 0
      %p89 = por %p87, %p88
      %p90 = scmp.ne.s32.totalorder %s79, %s82
      %p91 = scmp.eq.s32.totalorder %s62, 3
      %p92 = por %p90, %p91
      %p93 = scmp.ne.s32.totalorder %s82, %s83
      %p94 = scmp.eq.s32.totalorder %s62, 0
      %p95 = por %p93, %p94
      %p96 = scmp.ne.s32.totalorder %s82, %s83
      %p97 = scmp.eq.s32.totalorder %s63, 3
      %p98 = por %p96, %p97
      %p100 = scmp.ne.s32.totalorder %s83, %s99
      %p101 = scmp.eq.s32.totalorder %s63, 0
      %p102 = por %p100, %p101
      %s103 = ssub.s32 %s65, %s72
      %p104 = scmp.eq.s32.totalorder %s103, 0
      %s106 = sadd.s32 %s105, 1
      %s107 = scalar_select %p104, %s105, %s106
      %p110 = pneg %p104
      %p111 = scmp.eq.s32.totalorder %s57, 3
      %p112 = por %p110, %p111
      %p113 = scmp.ne.s32.totalorder %s105, %s108
      %p114 = scmp.eq.s32.totalorder %s57, 0
      %p115 = por %p113, %p114
      %p116 = scmp.ne.s32.totalorder %s105, %s108
      %p117 = scmp.eq.s32.totalorder %s62, 3
      %p118 = por %p116, %p117
      %p119 = scmp.ne.s32.totalorder %s108, %s109
      %p120 = scmp.eq.s32.totalorder %s62, 0
      %p121 = por %p119, %p120
      %p122 = scmp.ne.s32.totalorder %s108, %s109
      %p123 = scmp.eq.s32.totalorder %s63, 3
      %p124 = por %p122, %p123
      %p126 = scmp.ne.s32.totalorder %s109, %s125
      %p127 = scmp.eq.s32.totalorder %s63, 0
      %p128 = por %p126, %p127
      %s129 = ssub.s32 %s65, %s72
      %p130 = scmp.eq.s32.totalorder %s129, 0
      %s132 = sadd.s32 %s131, 1
      %s133 = scalar_select %p130, %s131, %s132
      %p136 = pneg %p130
      %p137 = scmp.eq.s32.totalorder %s57, 3
      %p138 = por %p136, %p137
      %p139 = scmp.ne.s32.totalorder %s131, %s134
      %p140 = scmp.eq.s32.totalorder %s57, 0
      %p141 = por %p139, %p140
      %p142 = scmp.ne.s32.totalorder %s131, %s134
      %p143 = scmp.eq.s32.totalorder %s62, 3
      %p144 = por %p142, %p143
      %p145 = scmp.ne.s32.totalorder %s134, %s135
      %p146 = scmp.eq.s32.totalorder %s62, 0
      %p147 = por %p145, %p146
      %p148 = scmp.ne.s32.totalorder %s134, %s135
      %p149 = scmp.eq.s32.totalorder %s63, 3
      %p150 = por %p148, %p149
      %p152 = scmp.ne.s32.totalorder %s135, %s151
      %p153 = scmp.eq.s32.totalorder %s63, 0
      %p154 = por %p152, %p153
      %s155 = ssub.s32 %s65, %s72
      %p156 = scmp.eq.s32.totalorder %s155, 0
      %s158 = sadd.s32 %s157, 1
      %s159 = scalar_select %p156, %s157, %s158
      %p162 = pneg %p156
      %p163 = scmp.eq.s32.totalorder %s57, 3
      %p164 = por %p162, %p163
      %p165 = scmp.ne.s32.totalorder %s157, %s160
      %p166 = scmp.eq.s32.totalorder %s57, 0
      %p167 = por %p165, %p166
      %p168 = scmp.ne.s32.totalorder %s157, %s160
      %p169 = scmp.eq.s32.totalorder %s62, 3
      %p170 = por %p168, %p169
      %p171 = scmp.ne.s32.totalorder %s160, %s161
      %p172 = scmp.eq.s32.totalorder %s62, 0
      %p173 = por %p171, %p172
      %p174 = scmp.ne.s32.totalorder %s160, %s161
      %p175 = scmp.eq.s32.totalorder %s63, 3
      %p176 = por %p174, %p175
      %p178 = scmp.ne.s32.totalorder %s161, %s177
      %p179 = scmp.eq.s32.totalorder %s63, 0
      %p180 = por %p178, %p179
      %s181 = ssub.s32 %s65, %s72
      %p182 = scmp.eq.s32.totalorder %s181, 0
      %s184 = sadd.s32 %s183, 1
      %s185 = scalar_select %p182, %s183, %s184
      %p188 = pneg %p182
      %p189 = scmp.eq.s32.totalorder %s57, 3
      %p190 = por %p188, %p189
      %p191 = scmp.ne.s32.totalorder %s183, %s186
      %p192 = scmp.eq.s32.totalorder %s57, 0
      %p193 = por %p191, %p192
      %p194 = scmp.ne.s32.totalorder %s183, %s186
      %p195 = scmp.eq.s32.totalorder %s62, 3
      %p196 = por %p194, %p195
      %p197 = scmp.ne.s32.totalorder %s186, %s187
      %p198 = scmp.eq.s32.totalorder %s62, 0
      %p199 = por %p197, %p198
      %p200 = scmp.ne.s32.totalorder %s186, %s187
      %p201 = scmp.eq.s32.totalorder %s63, 3
      %p202 = por %p200, %p201
      %p204 = scmp.ne.s32.totalorder %s187, %s203
      %p205 = scmp.eq.s32.totalorder %s63, 0
      %p206 = por %p204, %p205
      %s207 = ssub.s32 %s65, %s72
      %p208 = scmp.eq.s32.totalorder %s207, 0
      %s210 = sadd.s32 %s209, 1
      %s211 = scalar_select %p208, %s209, %s210
      %p214 = pneg %p208
      %p215 = scmp.eq.s32.totalorder %s57, 3
      %p216 = por %p214, %p215
      %p217 = scmp.ne.s32.totalorder %s209, %s212
      %p218 = scmp.eq.s32.totalorder %s57, 0
      %p219 = por %p217, %p218
      %p220 = scmp.ne.s32.totalorder %s209, %s212
      %p221 = scmp.eq.s32.totalorder %s62, 3
      %p222 = por %p220, %p221
      %p223 = scmp.ne.s32.totalorder %s212, %s213
      %p224 = scmp.eq.s32.totalorder %s62, 0
      %p225 = por %p223, %p224
      %p226 = scmp.ne.s32.totalorder %s212, %s213
      %p227 = scmp.eq.s32.totalorder %s63, 3
      %p228 = por %p226, %p227
      %p230 = scmp.ne.s32.totalorder %s213, %s229
      %p231 = scmp.eq.s32.totalorder %s63, 0
      %p232 = por %p230, %p231
      %s233 = ssub.s32 %s65, %s72
      %p234 = scmp.eq.s32.totalorder %s233, 0
      %s236 = sadd.s32 %s235, 1
      %s237 = scalar_select %p234, %s235, %s236
      %p240 = pneg %p234
      %p241 = scmp.eq.s32.totalorder %s57, 3
      %p242 = por %p240, %p241
      %p243 = scmp.ne.s32.totalorder %s235, %s238
      %p244 = scmp.eq.s32.totalorder %s57, 0
      %p245 = por %p243, %p244
      %p246 = scmp.ne.s32.totalorder %s235, %s238
      %p247 = scmp.eq.s32.totalorder %s62, 3
      %p248 = por %p246, %p247
      %p249 = scmp.ne.s32.totalorder %s238, %s239
      %p250 = scmp.eq.s32.totalorder %s62, 0
      %p251 = por %p249, %p250
      %p252 = scmp.ne.s32.totalorder %s238, %s239
      %p253 = scmp.eq.s32.totalorder %s63, 3
      %p254 = por %p252, %p253
      %p256 = scmp.ne.s32.totalorder %s239, %s255
      %p257 = scmp.eq.s32.totalorder %s63, 0
      %p258 = por %p256, %p257
      %s259 = ssub.s32 %s65, %s72
      %p260 = scmp.eq.s32.totalorder %s259, 0
      %s262 = sadd.s32 %s261, 1
      %s263 = scalar_select %p260, %s261, %s262
      %p266 = pneg %p260
      %p267 = scmp.eq.s32.totalorder %s57, 3
      %p268 = por %p266, %p267
      %p269 = scmp.ne.s32.totalorder %s261, %s264
      %p270 = scmp.eq.s32.totalorder %s57, 0
      %p271 = por %p269, %p270
      %p272 = scmp.ne.s32.totalorder %s261, %s264
      %p273 = scmp.eq.s32.totalorder %s62, 3
      %p274 = por %p272, %p273
      %p275 = scmp.ne.s32.totalorder %s264, %s265
      %p276 = scmp.eq.s32.totalorder %s62, 0
      %p277 = por %p275, %p276
      %p278 = scmp.ne.s32.totalorder %s264, %s265
      %p279 = scmp.eq.s32.totalorder %s63, 3
      %p280 = por %p278, %p279
      %p282 = scmp.ne.s32.totalorder %s265, %s281
      %p283 = scmp.eq.s32.totalorder %s63, 0
      %p284 = por %p282, %p283
      %s285 = ssub.s32 %s65, %s72
      %p286 = scmp.eq.s32.totalorder %s285, 0
      %s288 = sadd.s32 %s287, 1
      %s289 = scalar_select %p286, %s287, %s288
      %p292 = pneg %p286
      %p293 = scmp.eq.s32.totalorder %s57, 3
      %p294 = por %p292, %p293
      %p295 = scmp.ne.s32.totalorder %s287, %s290
      %p296 = scmp.eq.s32.totalorder %s57, 0
      %p297 = por %p295, %p296
      %p298 = scmp.ne.s32.totalorder %s287, %s290
      %p299 = scmp.eq.s32.totalorder %s62, 3
      %p300 = por %p298, %p299
      %p301 = scmp.ne.s32.totalorder %s290, %s291
      %p302 = scmp.eq.s32.totalorder %s62, 0
      %p303 = por %p301, %p302
      %p304 = scmp.ne.s32.totalorder %s290, %s291
      %p305 = scmp.eq.s32.totalorder %s63, 3
      %p306 = por %p304, %p305
      %p308 = scmp.ne.s32.totalorder %s291, %s307
      %p309 = scmp.eq.s32.totalorder %s63, 0
      %p310 = por %p308, %p309
      %s311 = ssub.s32 %s65, %s72
      %p312 = scmp.eq.s32.totalorder %s311, 0
      %s314 = sadd.s32 %s313, 1
      %s315 = scalar_select %p312, %s313, %s314
      %p318 = pneg %p312
      %p319 = scmp.eq.s32.totalorder %s57, 3
      %p320 = por %p318, %p319
      %p321 = scmp.ne.s32.totalorder %s313, %s316
      %p322 = scmp.eq.s32.totalorder %s57, 0
      %p323 = por %p321, %p322
      %p324 = scmp.ne.s32.totalorder %s313, %s316
      %p325 = scmp.eq.s32.totalorder %s62, 3
      %p326 = por %p324, %p325
      %p327 = scmp.ne.s32.totalorder %s316, %s317
      %p328 = scmp.eq.s32.totalorder %s62, 0
      %p329 = por %p327, %p328
      %p330 = scmp.ne.s32.totalorder %s316, %s317
      %p331 = scmp.eq.s32.totalorder %s63, 3
      %p332 = por %p330, %p331
      %p334 = scmp.ne.s32.totalorder %s317, %s333
      %p335 = scmp.eq.s32.totalorder %s63, 0
      %p336 = por %p334, %p335
      %s337 = ssub.s32 %s65, %s72
      %p338 = scmp.eq.s32.totalorder %s337, 0
      %s340 = sadd.s32 %s339, 1
      %s341 = scalar_select %p338, %s339, %s340
      %p344 = pneg %p338
      %p345 = scmp.eq.s32.totalorder %s57, 3
      %p346 = por %p344, %p345
      %p347 = scmp.ne.s32.totalorder %s339, %s342
      %p348 = scmp.eq.s32.totalorder %s57, 0
      %p349 = por %p347, %p348
      %p350 = scmp.ne.s32.totalorder %s339, %s342
      %p351 = scmp.eq.s32.totalorder %s62, 3
      %p352 = por %p350, %p351
      %p353 = scmp.ne.s32.totalorder %s342, %s343
      %p354 = scmp.eq.s32.totalorder %s62, 0
      %p355 = por %p353, %p354
      %p356 = scmp.ne.s32.totalorder %s342, %s343
      %p357 = scmp.eq.s32.totalorder %s63, 3
      %p358 = por %p356, %p357
      %p360 = scmp.ne.s32.totalorder %s343, %s359
      %p361 = scmp.eq.s32.totalorder %s63, 0
      %p362 = por %p360, %p361
      %s363 = ssub.s32 %s65, %s72
      %p364 = scmp.eq.s32.totalorder %s363, 0
      %s366 = sadd.s32 %s365, 1
      %s367 = scalar_select %p364, %s365, %s366
      %p370 = pneg %p364
      %p371 = scmp.eq.s32.totalorder %s57, 3
      %p372 = por %p370, %p371
      %p373 = scmp.ne.s32.totalorder %s365, %s368
      %p374 = scmp.eq.s32.totalorder %s57, 0
      %p375 = por %p373, %p374
      %p376 = scmp.ne.s32.totalorder %s365, %s368
      %p377 = scmp.eq.s32.totalorder %s62, 3
      %p378 = por %p376, %p377
      %p379 = scmp.ne.s32.totalorder %s368, %s369
      %p380 = scmp.eq.s32.totalorder %s62, 0
      %p381 = por %p379, %p380
      %p382 = scmp.ne.s32.totalorder %s368, %s369
      %p383 = scmp.eq.s32.totalorder %s63, 3
      %p384 = por %p382, %p383
      %p386 = scmp.ne.s32.totalorder %s369, %s385
      %p387 = scmp.eq.s32.totalorder %s63, 0
      %p388 = por %p386, %p387
      %s389 = ssub.s32 %s65, %s72
      %p390 = scmp.eq.s32.totalorder %s389, 0
      %s392 = sadd.s32 %s391, 1
      %s393 = scalar_select %p390, %s391, %s392
      %p396 = pneg %p390
      %p397 = scmp.eq.s32.totalorder %s57, 3
      %p398 = por %p396, %p397
      %p399 = scmp.ne.s32.totalorder %s391, %s394
      %p400 = scmp.eq.s32.totalorder %s57, 0
      %p401 = por %p399, %p400
      %p402 = scmp.ne.s32.totalorder %s391, %s394
      %p403 = scmp.eq.s32.totalorder %s62, 3
      %p404 = por %p402, %p403
      %p405 = scmp.ne.s32.totalorder %s394, %s395
      %p406 = scmp.eq.s32.totalorder %s62, 0
      %p407 = por %p405, %p406
      %p408 = scmp.ne.s32.totalorder %s394, %s395
      %p409 = scmp.eq.s32.totalorder %s63, 3
      %p410 = por %p408, %p409
      %p412 = scmp.ne.s32.totalorder %s395, %s411
      %p413 = scmp.eq.s32.totalorder %s63, 0
      %p414 = por %p412, %p413
      %s415 = ssub.s32 %s65, %s72
      %p416 = scmp.eq.s32.totalorder %s415, 0
      %s418 = sadd.s32 %s417, 1
      %s419 = scalar_select %p416, %s417, %s418
      %p422 = pneg %p416
      %p423 = scmp.eq.s32.totalorder %s57, 3
      %p424 = por %p422, %p423
      %p425 = scmp.ne.s32.totalorder %s417, %s420
      %p426 = scmp.eq.s32.totalorder %s57, 0
      %p427 = por %p425, %p426
      %p428 = scmp.ne.s32.totalorder %s417, %s420
      %p429 = scmp.eq.s32.totalorder %s62, 3
      %p430 = por %p428, %p429
      %p431 = scmp.ne.s32.totalorder %s420, %s421
      %p432 = scmp.eq.s32.totalorder %s62, 0
      %p433 = por %p431, %p432
      %p434 = scmp.ne.s32.totalorder %s420, %s421
      %p435 = scmp.eq.s32.totalorder %s63, 3
      %p436 = por %p434, %p435
      %p438 = scmp.ne.s32.totalorder %s421, %s437
      %p439 = scmp.eq.s32.totalorder %s63, 0
      %p440 = por %p438, %p439
      %s441 = ssub.s32 %s65, %s72
      %p442 = scmp.eq.s32.totalorder %s441, 0
      %s444 = sadd.s32 %s443, 1
      %s445 = scalar_select %p442, %s443, %s444
      %p448 = pneg %p442
      %p449 = scmp.eq.s32.totalorder %s57, 3
      %p450 = por %p448, %p449
      %p451 = scmp.ne.s32.totalorder %s443, %s446
      %p452 = scmp.eq.s32.totalorder %s57, 0
      %p453 = por %p451, %p452
      %p454 = scmp.ne.s32.totalorder %s443, %s446
      %p455 = scmp.eq.s32.totalorder %s62, 3
      %p456 = por %p454, %p455
      %p457 = scmp.ne.s32.totalorder %s446, %s447
      %p458 = scmp.eq.s32.totalorder %s62, 0
      %p459 = por %p457, %p458
      %p460 = scmp.ne.s32.totalorder %s446, %s447
      %p461 = scmp.eq.s32.totalorder %s63, 3
      %p462 = por %p460, %p461
      %p464 = scmp.ne.s32.totalorder %s447, %s463
      %p465 = scmp.eq.s32.totalorder %s63, 0
      %p466 = por %p464, %p465
      %s467 = ssub.s32 %s65, %s72
      %p468 = scmp.eq.s32.totalorder %s467, 0
      %s470 = sadd.s32 %s469, 1
      %s471 = scalar_select %p468, %s469, %s470
      %p474 = pneg %p468
      %p475 = scmp.eq.s32.totalorder %s57, 3
      %p476 = por %p474, %p475
      %p477 = scmp.ne.s32.totalorder %s469, %s472
      %p478 = scmp.eq.s32.totalorder %s57, 0
      %p479 = por %p477, %p478
      %p480 = scmp.ne.s32.totalorder %s469, %s472
      %p481 = scmp.eq.s32.totalorder %s62, 3
      %p482 = por %p480, %p481
      %p483 = scmp.ne.s32.totalorder %s472, %s473
      %p484 = scmp.eq.s32.totalorder %s62, 0
      %p485 = por %p483, %p484
      %p486 = scmp.ne.s32.totalorder %s472, %s473
      %p487 = scmp.eq.s32.totalorder %s63, 3
      %p488 = por %p486, %p487
      %p490 = scmp.ne.s32.totalorder %s473, %s489
      %p491 = scmp.eq.s32.totalorder %s63, 0
      %p492 = por %p490, %p491
      %s493 = ssub.s32 %s65, %s72
      %p494 = scmp.eq.s32.totalorder %s493, 0
      %s496 = sadd.s32 %s495, 1
      %s497 = scalar_select %p494, %s495, %s496
      %p500 = pneg %p494
      %p501 = scmp.eq.s32.totalorder %s57, 3
      %p502 = por %p500, %p501
      %p503 = scmp.ne.s32.totalorder %s495, %s498
      %p504 = scmp.eq.s32.totalorder %s57, 0
      %p505 = por %p503, %p504
      %p506 = scmp.ne.s32.totalorder %s495, %s498
      %p507 = scmp.eq.s32.totalorder %s62, 3
      %p508 = por %p506, %p507
      %p509 = scmp.ne.s32.totalorder %s498, %s499
      %p510 = scmp.eq.s32.totalorder %s62, 0
      %p511 = por %p509, %p510
      %p512 = scmp.ne.s32.totalorder %s498, %s499
      %p513 = scmp.eq.s32.totalorder %s63, 3
      %p514 = por %p512, %p513
      %p516 = scmp.ne.s32.totalorder %s499, %s515
      %p517 = scmp.eq.s32.totalorder %s63, 0
      %p518 = por %p516, %p517
      %s520 = sadd.s32 %s519, 1
      %p523 = scmp.eq.s32.totalorder %s57, 3
      %p524 = scmp.ne.s32.totalorder %s519, %s521
      %p525 = scmp.eq.s32.totalorder %s57, 0
      %p526 = por %p524, %p525
      %p527 = scmp.ne.s32.totalorder %s519, %s521
      %p528 = scmp.eq.s32.totalorder %s62, 3
      %p529 = por %p527, %p528
      %p530 = scmp.ne.s32.totalorder %s521, %s522
      %p531 = scmp.eq.s32.totalorder %s62, 0
      %p532 = por %p530, %p531
      %p533 = scmp.ne.s32.totalorder %s521, %s522
      %p534 = scmp.eq.s32.totalorder %s63, 3
      %p535 = por %p533, %p534
      %p537 = scmp.ne.s32.totalorder %s522, %s536
      %p538 = scmp.eq.s32.totalorder %s63, 0
      %p539 = por %p537, %p538
      %s541 = sadd.s32 %s540, 1
      %p544 = scmp.eq.s32.totalorder %s57, 3
      %p545 = scmp.ne.s32.totalorder %s540, %s542
      %p546 = scmp.eq.s32.totalorder %s57, 0
      %p547 = por %p545, %p546
      %p548 = scmp.ne.s32.totalorder %s540, %s542
      %p549 = scmp.eq.s32.totalorder %s62, 3
      %p550 = por %p548, %p549
      %p551 = scmp.ne.s32.totalorder %s542, %s543
      %p552 = scmp.eq.s32.totalorder %s62, 0
      %p553 = por %p551, %p552
      %p554 = scmp.ne.s32.totalorder %s542, %s543
      %p555 = scmp.eq.s32.totalorder %s63, 3
      %p556 = por %p554, %p555
      %p558 = scmp.ne.s32.totalorder %s543, %s557
      %p559 = scmp.eq.s32.totalorder %s63, 0
      %p560 = por %p558, %p559
      %s562 = sadd.s32 %s561, 1
      %p565 = scmp.eq.s32.totalorder %s57, 3
      %p566 = scmp.ne.s32.totalorder %s561, %s563
      %p567 = scmp.eq.s32.totalorder %s57, 0
      %p568 = por %p566, %p567
      %p569 = scmp.ne.s32.totalorder %s561, %s563
      %p570 = scmp.eq.s32.totalorder %s62, 3
      %p571 = por %p569, %p570
      %p572 = scmp.ne.s32.totalorder %s563, %s564
      %p573 = scmp.eq.s32.totalorder %s62, 0
      %p574 = por %p572, %p573
      %p575 = scmp.ne.s32.totalorder %s563, %s564
      %p576 = scmp.eq.s32.totalorder %s63, 3
      %p577 = por %p575, %p576
      %p579 = scmp.ne.s32.totalorder %s564, %s578
      %p580 = scmp.eq.s32.totalorder %s63, 0
      %p581 = por %p579, %p580
      %s583 = sadd.s32 %s582, 1
      %p586 = scmp.eq.s32.totalorder %s57, 3
      %p587 = scmp.ne.s32.totalorder %s582, %s584
      %p588 = scmp.eq.s32.totalorder %s57, 0
      %p589 = por %p587, %p588
      %p590 = scmp.ne.s32.totalorder %s582, %s584
      %p591 = scmp.eq.s32.totalorder %s62, 3
      %p592 = por %p590, %p591
      %p593 = scmp.ne.s32.totalorder %s584, %s585
      %p594 = scmp.eq.s32.totalorder %s62, 0
      %p595 = por %p593, %p594
      %p596 = scmp.ne.s32.totalorder %s584, %s585
      %p597 = scmp.eq.s32.totalorder %s63, 3
      %p598 = por %p596, %p597
      %p600 = scmp.ne.s32.totalorder %s585, %s599
      %p601 = scmp.eq.s32.totalorder %s63, 0
      %p602 = por %p600, %p601
      %s604 = sadd.s32 %s603, 1
      %p607 = scmp.eq.s32.totalorder %s57, 3
      %p608 = scmp.ne.s32.totalorder %s603, %s605
      %p609 = scmp.eq.s32.totalorder %s57, 0
      %p610 = por %p608, %p609
      %p611 = scmp.ne.s32.totalorder %s603, %s605
      %p612 = scmp.eq.s32.totalorder %s62, 3
      %p613 = por %p611, %p612
      %p614 = scmp.ne.s32.totalorder %s605, %s606
      %p615 = scmp.eq.s32.totalorder %s62, 0
      %p616 = por %p614, %p615
      %p617 = scmp.ne.s32.totalorder %s605, %s606
      %p618 = scmp.eq.s32.totalorder %s63, 3
      %p619 = por %p617, %p618
      %p621 = scmp.ne.s32.totalorder %s606, %s620
      %p622 = scmp.eq.s32.totalorder %s63, 0
      %p623 = por %p621, %p622
      %s625 = sadd.s32 %s624, 1
      %p628 = scmp.eq.s32.totalorder %s57, 3
      %p629 = scmp.ne.s32.totalorder %s624, %s626
      %p630 = scmp.eq.s32.totalorder %s57, 0
      %p631 = por %p629, %p630
      %p632 = scmp.ne.s32.totalorder %s624, %s626
      %p633 = scmp.eq.s32.totalorder %s62, 3
      %p634 = por %p632, %p633
      %p635 = scmp.ne.s32.totalorder %s626, %s627
      %p636 = scmp.eq.s32.totalorder %s62, 0
      %p637 = por %p635, %p636
      %p638 = scmp.ne.s32.totalorder %s626, %s627
      %p639 = scmp.eq.s32.totalorder %s63, 3
      %p640 = por %p638, %p639
      %p642 = scmp.ne.s32.totalorder %s627, %s641
      %p643 = scmp.eq.s32.totalorder %s63, 0
      %p644 = por %p642, %p643
      %s646 = sadd.s32 %s645, 1
      %p649 = scmp.eq.s32.totalorder %s57, 3
      %p650 = scmp.ne.s32.totalorder %s645, %s647
      %p651 = scmp.eq.s32.totalorder %s57, 0
      %p652 = por %p650, %p651
      %p653 = scmp.ne.s32.totalorder %s645, %s647
      %p654 = scmp.eq.s32.totalorder %s62, 3
      %p655 = por %p653, %p654
      %p656 = scmp.ne.s32.totalorder %s647, %s648
      %p657 = scmp.eq.s32.totalorder %s62, 0
      %p658 = por %p656, %p657
      %p659 = scmp.ne.s32.totalorder %s647, %s648
      %p660 = scmp.eq.s32.totalorder %s63, 3
      %p661 = por %p659, %p660
      %p663 = scmp.ne.s32.totalorder %s648, %s662
      %p664 = scmp.eq.s32.totalorder %s63, 0
      %p665 = por %p663, %p664
      %s667 = sadd.s32 %s666, 1
      %p670 = scmp.eq.s32.totalorder %s57, 3
      %p671 = scmp.ne.s32.totalorder %s666, %s668
      %p672 = scmp.eq.s32.totalorder %s57, 0
      %p673 = por %p671, %p672
      %p674 = scmp.ne.s32.totalorder %s666, %s668
      %p675 = scmp.eq.s32.totalorder %s62, 3
      %p676 = por %p674, %p675
      %p677 = scmp.ne.s32.totalorder %s668, %s669
      %p678 = scmp.eq.s32.totalorder %s62, 0
      %p679 = por %p677, %p678
      %p680 = scmp.ne.s32.totalorder %s668, %s669
      %p681 = scmp.eq.s32.totalorder %s63, 3
      %p682 = por %p680, %p681
      %p684 = scmp.ne.s32.totalorder %s669, %s683
      %p685 = scmp.eq.s32.totalorder %s63, 0
      %p686 = por %p684, %p685
      %s688 = sadd.s32 %s687, 1
      %p691 = scmp.eq.s32.totalorder %s57, 3
      %p692 = scmp.ne.s32.totalorder %s687, %s689
      %p693 = scmp.eq.s32.totalorder %s57, 0
      %p694 = por %p692, %p693
      %p695 = scmp.ne.s32.totalorder %s687, %s689
      %p696 = scmp.eq.s32.totalorder %s62, 3
      %p697 = por %p695, %p696
      %p698 = scmp.ne.s32.totalorder %s689, %s690
      %p699 = scmp.eq.s32.totalorder %s62, 0
      %p700 = por %p698, %p699
      %p701 = scmp.ne.s32.totalorder %s689, %s690
      %p702 = scmp.eq.s32.totalorder %s63, 3
      %p703 = por %p701, %p702
      %p705 = scmp.ne.s32.totalorder %s690, %s704
      %p706 = scmp.eq.s32.totalorder %s63, 0
      %p707 = por %p705, %p706
      %s709 = sadd.s32 %s708, 1
      %p712 = scmp.eq.s32.totalorder %s57, 3
      %p713 = scmp.ne.s32.totalorder %s708, %s710
      %p714 = scmp.eq.s32.totalorder %s57, 0
      %p715 = por %p713, %p714
      %p716 = scmp.ne.s32.totalorder %s708, %s710
      %p717 = scmp.eq.s32.totalorder %s62, 3
      %p718 = por %p716, %p717
      %p719 = scmp.ne.s32.totalorder %s710, %s711
      %p720 = scmp.eq.s32.totalorder %s62, 0
      %p721 = por %p719, %p720
      %p722 = scmp.ne.s32.totalorder %s710, %s711
      %p723 = scmp.eq.s32.totalorder %s63, 3
      %p724 = por %p722, %p723
      %p726 = scmp.ne.s32.totalorder %s711, %s725
      %p727 = scmp.eq.s32.totalorder %s63, 0
      %p728 = por %p726, %p727
      %s729 = ssub.s32 %s65, %s72
      %s730 = ssub.s32 %s64, %s76
      %s731 = sor.u32 %s729, %s730
      %p732 = scmp.eq.s32.totalorder %s731, 0
      %s734 = sadd.s32 %s733, 1
      %s735 = scalar_select %p732, %s733, %s734
      %p738 = pneg %p732
      %p739 = scmp.eq.s32.totalorder %s57, 3
      %p740 = por %p738, %p739
      %p741 = scmp.ne.s32.totalorder %s733, %s736
      %p742 = scmp.eq.s32.totalorder %s57, 0
      %p743 = por %p741, %p742
      %p744 = scmp.ne.s32.totalorder %s733, %s736
      %p745 = scmp.eq.s32.totalorder %s62, 3
      %p746 = por %p744, %p745
      %p747 = scmp.ne.s32.totalorder %s736, %s737
      %p748 = scmp.eq.s32.totalorder %s62, 0
      %p749 = por %p747, %p748
      %p750 = scmp.ne.s32.totalorder %s736, %s737
      %p751 = scmp.eq.s32.totalorder %s63, 3
      %p752 = por %p750, %p751
      %p754 = scmp.ne.s32.totalorder %s737, %s753
      %p755 = scmp.eq.s32.totalorder %s63, 0
      %p756 = por %p754, %p755
      %p757 = scmp.le.s32.totalorder 1, %s57
      %p758 = scmp.lt.s32.totalorder %s57, 5
      %p759 = pnand %p757, %p758
      %p760 = pneg %p759
      // Predicated region
      $region9: #{tpu_custom_call.1} parent=5 // pred_check
        _
      $region10: #{tpu_custom_call.1} parent=5 // pred_check_branch
        %762 = sbr.rel (%p759) target = $region12
      $region11: #{tpu_custom_call.1} parent=5 // pred_region
        %s763 = ssub.s32 %s57, 1
        // Predicated region
        $region13: #{tpu_custom_call.1} parent=11 // pred_check
          %p764 = pneg %p532
        $region14: #{tpu_custom_call.1} parent=11 // pred_check_branch
          %766 = sbr.rel (%p764) target = $region16
        $region15: #{tpu_custom_call.1} parent=11 // pred_region
          _
        $region16: #{tpu_custom_call.1} parent=11 // pred_fallthru
          _
        // Predicated region
        $region17: #{tpu_custom_call.1} parent=11 // pred_check
          %p767 = pneg %p553
        $region18: #{tpu_custom_call.1} parent=11 // pred_check_branch
          %769 = sbr.rel (%p767) target = $region20
        $region19: #{tpu_custom_call.1} parent=11 // pred_region
          _
        $region20: #{tpu_custom_call.1} parent=11 // pred_fallthru
          _
        // Predicated region
        $region21: #{tpu_custom_call.1} parent=11 // pred_check
          %p770 = pneg %p574
        $region22: #{tpu_custom_call.1} parent=11 // pred_check_branch
          %772 = sbr.rel (%p770) target = $region24
        $region23: #{tpu_custom_call.1} parent=11 // pred_region
          _
        $region24: #{tpu_custom_call.1} parent=11 // pred_fallthru
          _
        // Predicated region
        $region25: #{tpu_custom_call.1} parent=11 // pred_check
          %p773 = pneg %p595
        $region26: #{tpu_custom_call.1} parent=11 // pred_check_branch
          %775 = sbr.rel (%p773) target = $region28
        $region27: #{tpu_custom_call.1} parent=11 // pred_region
          _
        $region28: #{tpu_custom_call.1} parent=11 // pred_fallthru
          _
        // Predicated region
        $region29: #{tpu_custom_call.1} parent=11 // pred_check
          %p776 = pneg %p616
        $region30: #{tpu_custom_call.1} parent=11 // pred_check_branch
          %778 = sbr.rel (%p776) target = $region32
        $region31: #{tpu_custom_call.1} parent=11 // pred_region
          _
        $region32: #{tpu_custom_call.1} parent=11 // pred_fallthru
          _
        // Predicated region
        $region33: #{tpu_custom_call.1} parent=11 // pred_check
          %p779 = pneg %p637
        $region34: #{tpu_custom_call.1} parent=11 // pred_check_branch
          %781 = sbr.rel (%p779) target = $region36
        $region35: #{tpu_custom_call.1} parent=11 // pred_region
          _
        $region36: #{tpu_custom_call.1} parent=11 // pred_fallthru
          _
        // Predicated region
        $region37: #{tpu_custom_call.1} parent=11 // pred_check
          %p782 = pneg %p658
        $region38: #{tpu_custom_call.1} parent=11 // pred_check_branch
          %784 = sbr.rel (%p782) target = $region40
        $region39: #{tpu_custom_call.1} parent=11 // pred_region
          _
        $region40: #{tpu_custom_call.1} parent=11 // pred_fallthru
          _
        // Predicated region
        $region41: #{tpu_custom_call.1} parent=11 // pred_check
          %p785 = pneg %p679
        $region42: #{tpu_custom_call.1} parent=11 // pred_check_branch
          %787 = sbr.rel (%p785) target = $region44
        $region43: #{tpu_custom_call.1} parent=11 // pred_region
          _
        $region44: #{tpu_custom_call.1} parent=11 // pred_fallthru
          _
        // Predicated region
        $region45: #{tpu_custom_call.1} parent=11 // pred_check
          %p788 = pneg %p700
        $region46: #{tpu_custom_call.1} parent=11 // pred_check_branch
          %790 = sbr.rel (%p788) target = $region48
        $region47: #{tpu_custom_call.1} parent=11 // pred_region
          _
        $region48: #{tpu_custom_call.1} parent=11 // pred_fallthru
          _
        // Predicated region
        $region49: #{tpu_custom_call.1} parent=11 // pred_check
          %p791 = pneg %p721
        $region50: #{tpu_custom_call.1} parent=11 // pred_check_branch
          %793 = sbr.rel (%p791) target = $region52
        $region51: #{tpu_custom_call.1} parent=11 // pred_region
          _
        $region52: #{tpu_custom_call.1} parent=11 // pred_fallthru
          _
      $region12: #{tpu_custom_call.1} parent=5 // pred_fallthru
        _
      %p794 = scmp.lt.s32.totalorder %s57, 4
      // Predicated region
      $region53: #{tpu_custom_call.1} parent=5 // pred_check
        %p795 = pneg %p794
      $region54: #{tpu_custom_call.1} parent=5 // pred_check_branch
        %797 = sbr.rel (%p795) target = $region56
      $region55: #{tpu_custom_call.1} parent=5 // pred_region
        // Predicated region
        $region57: #{tpu_custom_call.1} parent=55 // pred_check
          %p798 = pneg %p89
        $region58: #{tpu_custom_call.1} parent=55 // pred_check_branch
          %800 = sbr.rel (%p798) target = $region60
        $region59: #{tpu_custom_call.1} parent=55 // pred_region
          %s801 = sand.u32 %s79, 1
          %s802 = scalar_lea.sflag [#allocation4], %s801
          %s803 = sand.u32 %s79, 1
          %s804 = smul.addr %s803, 8
          %s805 = scalar_lea.vmem [#allocation3], %s804
          %s807 = ssub.s32 128, 128
          %808 = vsyncadd %s802, %s807
          %s809 = smul.addr %s64, 128
          %s810 = scalar_lea.hbm %s0, %s809
          %s812 = sshll.u32 %s805, 4
          %s813 = int_to_ptr.vmem [resolvable:$true] %s812
          %815 = dma.hbm_to_vmem [thread:$0]  %s810, 128, %s813, %s802
        $region60: #{tpu_custom_call.1} parent=55 // pred_fallthru
          _
        // Predicated region
        $region61: #{tpu_custom_call.1} parent=55 // pred_check
          %p816 = pneg %p115
        $region62: #{tpu_custom_call.1} parent=55 // pred_check_branch
          %818 = sbr.rel (%p816) target = $region64
        $region63: #{tpu_custom_call.1} parent=55 // pred_region
          %p819 = scmp.lt.s32.totalorder %s65, 1
          %s820 = scalar_select %p819, %s65, 1
          %s821 = smul.addr %s820, 4
          %s822 = smul.addr %s821, 4
          %s823 = scalar_lea.vmem %s1, %s822
        $region64: #{tpu_custom_call.1} parent=55 // pred_fallthru
          _
        // Predicated region
        $region65: #{tpu_custom_call.1} parent=55 // pred_check
          %p824 = pneg %p141
        $region66: #{tpu_custom_call.1} parent=55 // pred_check_branch
          %826 = sbr.rel (%p824) target = $region68
        $region67: #{tpu_custom_call.1} parent=55 // pred_region
          %s827 = sand.u32 %s57, 1
          %s828 = scalar_lea.sflag [#allocation7], %s827
          %s829 = sand.u32 %s131, 1
          %s830 = scalar_lea.vmem [#allocation6], %s829
          %s832 = ssub.s32 16, 16
          %833 = vsyncadd %s828, %s832
          %s834 = smul.addr %s65, 16
          %s835 = scalar_lea.hbm %s2, %s834
          %s837 = sshll.u32 %s830, 4
          %s838 = int_to_ptr.vmem [resolvable:$true] %s837
          %840 = dma.hbm_to_vmem [thread:$0]  %s835, 16, %s838, %s828
        $region68: #{tpu_custom_call.1} parent=55 // pred_fallthru
          _
        // Predicated region
        $region69: #{tpu_custom_call.1} parent=55 // pred_check
          %p841 = pneg %p167
        $region70: #{tpu_custom_call.1} parent=55 // pred_check_branch
          %843 = sbr.rel (%p841) target = $region72
        $region71: #{tpu_custom_call.1} parent=55 // pred_region
          %p844 = scmp.lt.s32.totalorder %s65, 1
          %s845 = scalar_select %p844, %s65, 1
          %s846 = smul.addr %s845, 4
          %s847 = smul.addr %s846, 4
          %s848 = scalar_lea.vmem %s3, %s847
        $region72: #{tpu_custom_call.1} parent=55 // pred_fallthru
          _
        // Predicated region
        $region73: #{tpu_custom_call.1} parent=55 // pred_check
          %p849 = pneg %p193
        $region74: #{tpu_custom_call.1} parent=55 // pred_check_branch
          %851 = sbr.rel (%p849) target = $region76
        $region75: #{tpu_custom_call.1} parent=55 // pred_region
          %s852 = sand.u32 %s57, 1
          %s853 = scalar_lea.sflag [#allocation7], %s852
          %s854 = sand.u32 %s183, 1
          %s855 = scalar_lea.vmem [#allocation8], %s854
          %s857 = ssub.s32 16, 16
          %858 = vsyncadd %s853, %s857
          %s859 = smul.addr %s65, 16
          %s860 = scalar_lea.hbm %s4, %s859
          %s862 = sshll.u32 %s855, 4
          %s863 = int_to_ptr.vmem [resolvable:$true] %s862
          %865 = dma.hbm_to_vmem [thread:$0]  %s860, 16, %s863, %s853
        $region76: #{tpu_custom_call.1} parent=55 // pred_fallthru
          _
        // Predicated region
        $region77: #{tpu_custom_call.1} parent=55 // pred_check
          %p866 = pneg %p219
        $region78: #{tpu_custom_call.1} parent=55 // pred_check_branch
          %868 = sbr.rel (%p866) target = $region80
        $region79: #{tpu_custom_call.1} parent=55 // pred_region
          %p869 = scmp.lt.s32.totalorder %s65, 1
          %s870 = scalar_select %p869, %s65, 1
          %s871 = smul.addr %s870, 4
          %s872 = smul.addr %s871, 4
          %s873 = scalar_lea.vmem %s5, %s872
        $region80: #{tpu_custom_call.1} parent=55 // pred_fallthru
          _
        // Predicated region
        $region81: #{tpu_custom_call.1} parent=55 // pred_check
          %p874 = pneg %p245
        $region82: #{tpu_custom_call.1} parent=55 // pred_check_branch
          %876 = sbr.rel (%p874) target = $region84
        $region83: #{tpu_custom_call.1} parent=55 // pred_region
          %s877 = sand.u32 %s57, 1
          %s878 = scalar_lea.sflag [#allocation10], %s877
          %s879 = sand.u32 %s235, 1
          %s880 = scalar_lea.vmem [#allocation9], %s879
          %s882 = ssub.s32 16, 16
          %883 = vsyncadd %s878, %s882
          %s884 = smul.addr %s65, 16
          %s885 = scalar_lea.hbm %s6, %s884
          %s887 = sshll.u32 %s880, 4
          %s888 = int_to_ptr.vmem [resolvable:$true] %s887
          %890 = dma.hbm_to_vmem [thread:$0]  %s885, 16, %s888, %s878
        $region84: #{tpu_custom_call.1} parent=55 // pred_fallthru
          _
        // Predicated region
        $region85: #{tpu_custom_call.1} parent=55 // pred_check
          %p891 = pneg %p271
        $region86: #{tpu_custom_call.1} parent=55 // pred_check_branch
          %893 = sbr.rel (%p891) target = $region88
        $region87: #{tpu_custom_call.1} parent=55 // pred_region
          %s894 = sand.u32 %s57, 1
          %s895 = scalar_lea.sflag [#allocation10], %s894
          %s896 = sand.u32 %s261, 1
          %s897 = smul.addr %s896, 16
          %s898 = scalar_lea.vmem [#allocation11], %s897
          %s900 = ssub.s32 256, 256
          %901 = vsyncadd %s895, %s900
          %s902 = smul.addr %s65, 4
          %s903 = smul.addr %s902, 64
          %s904 = scalar_lea.hbm %s7, %s903
          %s905 = sshll.u32 %s898, 4
          %s906 = int_to_ptr.vmem [resolvable:$true] %s905
          %911 = dma.hbm_to_vmem [thread:$0]  %s904, 256, %s906, %s895, 64, 64, 4
        $region88: #{tpu_custom_call.1} parent=55 // pred_fallthru
          _
        // Predicated region
        $region89: #{tpu_custom_call.1} parent=55 // pred_check
          %p912 = pneg %p297
        $region90: #{tpu_custom_call.1} parent=55 // pred_check_branch
          %914 = sbr.rel (%p912) target = $region92
        $region91: #{tpu_custom_call.1} parent=55 // pred_region
          %s915 = sand.u32 %s57, 1
          %s916 = scalar_lea.sflag [#allocation13], %s915
          %s917 = sand.u32 %s287, 1
          %s918 = scalar_lea.vmem [#allocation12], %s917
          %s920 = ssub.s32 16, 16
          %921 = vsyncadd %s916, %s920
          %s922 = smul.addr %s65, 16
          %s923 = scalar_lea.hbm %s8, %s922
          %s925 = sshll.u32 %s918, 4
          %s926 = int_to_ptr.vmem [resolvable:$true] %s925
          %928 = dma.hbm_to_vmem [thread:$0]  %s923, 16, %s926, %s916
        $region92: #{tpu_custom_call.1} parent=55 // pred_fallthru
          _
        // Predicated region
        $region93: #{tpu_custom_call.1} parent=55 // pred_check
          %p929 = pneg %p323
        $region94: #{tpu_custom_call.1} parent=55 // pred_check_branch
          %931 = sbr.rel (%p929) target = $region96
        $region95: #{tpu_custom_call.1} parent=55 // pred_region
          %s932 = sand.u32 %s57, 1
          %s933 = scalar_lea.sflag [#allocation13], %s932
          %s934 = sand.u32 %s313, 1
          %s935 = scalar_lea.vmem [#allocation14], %s934
          %s937 = ssub.s32 16, 16
          %938 = vsyncadd %s933, %s937
          %s939 = smul.addr %s65, 16
          %s940 = scalar_lea.hbm %s9, %s939
          %s942 = sshll.u32 %s935, 4
          %s943 = int_to_ptr.vmem [resolvable:$true] %s942
          %945 = dma.hbm_to_vmem [thread:$0]  %s940, 16, %s943, %s933
        $region96: #{tpu_custom_call.1} parent=55 // pred_fallthru
          _
        // Predicated region
        $region97: #{tpu_custom_call.1} parent=55 // pred_check
          %p946 = pneg %p349
        $region98: #{tpu_custom_call.1} parent=55 // pred_check_branch
          %948 = sbr.rel (%p946) target = $region100
        $region99: #{tpu_custom_call.1} parent=55 // pred_region
          %s949 = sand.u32 %s57, 1
          %s950 = scalar_lea.sflag [#allocation16], %s949
          %s951 = sand.u32 %s339, 1
          %s952 = scalar_lea.vmem [#allocation15], %s951
          %s954 = ssub.s32 16, 16
          %955 = vsyncadd %s950, %s954
          %s956 = smul.addr %s65, 16
          %s957 = scalar_lea.hbm %s10, %s956
          %s959 = sshll.u32 %s952, 4
          %s960 = int_to_ptr.vmem [resolvable:$true] %s959
          %962 = dma.hbm_to_vmem [thread:$0]  %s957, 16, %s960, %s950
        $region100: #{tpu_custom_call.1} parent=55 // pred_fallthru
          _
        // Predicated region
        $region101: #{tpu_custom_call.1} parent=55 // pred_check
          %p963 = pneg %p375
        $region102: #{tpu_custom_call.1} parent=55 // pred_check_branch
          %965 = sbr.rel (%p963) target = $region104
        $region103: #{tpu_custom_call.1} parent=55 // pred_region
          %s966 = sand.u32 %s57, 1
          %s967 = scalar_lea.sflag [#allocation16], %s966
          %s968 = sand.u32 %s365, 1
          %s969 = smul.addr %s968, 16
          %s970 = scalar_lea.vmem [#allocation17], %s969
          %s972 = ssub.s32 256, 256
          %973 = vsyncadd %s967, %s972
          %s974 = smul.addr %s65, 4
          %s975 = smul.addr %s974, 64
          %s976 = scalar_lea.hbm %s11, %s975
          %s977 = sshll.u32 %s970, 4
          %s978 = int_to_ptr.vmem [resolvable:$true] %s977
          %983 = dma.hbm_to_vmem [thread:$0]  %s976, 256, %s978, %s967, 64, 64, 4
        $region104: #{tpu_custom_call.1} parent=55 // pred_fallthru
          _
        // Predicated region
        $region105: #{tpu_custom_call.1} parent=55 // pred_check
          %p984 = pneg %p401
        $region106: #{tpu_custom_call.1} parent=55 // pred_check_branch
          %986 = sbr.rel (%p984) target = $region108
        $region107: #{tpu_custom_call.1} parent=55 // pred_region
          %s987 = sand.u32 %s57, 1
          %s988 = scalar_lea.sflag [#allocation19], %s987
          %s989 = sand.u32 %s391, 1
          %s990 = scalar_lea.vmem [#allocation18], %s989
          %s992 = ssub.s32 16, 16
          %993 = vsyncadd %s988, %s992
          %s994 = smul.addr %s65, 16
          %s995 = scalar_lea.hbm %s12, %s994
          %s997 = sshll.u32 %s990, 4
          %s998 = int_to_ptr.vmem [resolvable:$true] %s997
          %1000 = dma.hbm_to_vmem [thread:$0]  %s995, 16, %s998, %s988
        $region108: #{tpu_custom_call.1} parent=55 // pred_fallthru
          _
        // Predicated region
        $region109: #{tpu_custom_call.1} parent=55 // pred_check
          %p1001 = pneg %p427
        $region110: #{tpu_custom_call.1} parent=55 // pred_check_branch
          %1003 = sbr.rel (%p1001) target = $region112
        $region111: #{tpu_custom_call.1} parent=55 // pred_region
          %p1004 = scmp.lt.s32.totalorder %s65, 1
          %s1005 = scalar_select %p1004, %s65, 1
          %s1006 = smul.addr %s1005, 8
          %s1007 = smul.addr %s1006, 4
          %s1008 = scalar_lea.vmem %s13, %s1007
        $region112: #{tpu_custom_call.1} parent=55 // pred_fallthru
          _
        // Predicated region
        $region113: #{tpu_custom_call.1} parent=55 // pred_check
          %p1009 = pneg %p453
        $region114: #{tpu_custom_call.1} parent=55 // pred_check_branch
          %1011 = sbr.rel (%p1009) target = $region116
        $region115: #{tpu_custom_call.1} parent=55 // pred_region
          %s1012 = sand.u32 %s57, 1
          %s1013 = scalar_lea.sflag [#allocation19], %s1012
          %s1014 = sand.u32 %s443, 1
          %s1015 = scalar_lea.vmem [#allocation20], %s1014
          %s1017 = ssub.s32 16, 16
          %1018 = vsyncadd %s1013, %s1017
          %s1019 = smul.addr %s65, 16
          %s1020 = scalar_lea.hbm %s14, %s1019
          %s1022 = sshll.u32 %s1015, 4
          %s1023 = int_to_ptr.vmem [resolvable:$true] %s1022
          %1025 = dma.hbm_to_vmem [thread:$0]  %s1020, 16, %s1023, %s1013
        $region116: #{tpu_custom_call.1} parent=55 // pred_fallthru
          _
        // Predicated region
        $region117: #{tpu_custom_call.1} parent=55 // pred_check
          %p1026 = pneg %p479
        $region118: #{tpu_custom_call.1} parent=55 // pred_check_branch
          %1028 = sbr.rel (%p1026) target = $region120
        $region119: #{tpu_custom_call.1} parent=55 // pred_region
          %s1029 = sand.u32 %s57, 1
          %s1030 = scalar_lea.sflag [#allocation22], %s1029
          %s1031 = sand.u32 %s469, 1
          %s1032 = scalar_lea.vmem [#allocation21], %s1031
          %s1034 = ssub.s32 16, 16
          %1035 = vsyncadd %s1030, %s1034
          %s1036 = smul.addr %s65, 16
          %s1037 = scalar_lea.hbm %s15, %s1036
          %s1039 = sshll.u32 %s1032, 4
          %s1040 = int_to_ptr.vmem [resolvable:$true] %s1039
          %1042 = dma.hbm_to_vmem [thread:$0]  %s1037, 16, %s1040, %s1030
        $region120: #{tpu_custom_call.1} parent=55 // pred_fallthru
          _
        // Predicated region
        $region121: #{tpu_custom_call.1} parent=55 // pred_check
          %p1043 = pneg %p505
        $region122: #{tpu_custom_call.1} parent=55 // pred_check_branch
          %1045 = sbr.rel (%p1043) target = $region124
        $region123: #{tpu_custom_call.1} parent=55 // pred_region
          %s1046 = sand.u32 %s57, 1
          %s1047 = scalar_lea.sflag [#allocation22], %s1046
          %s1048 = sand.u32 %s495, 1
          %s1049 = scalar_lea.vmem [#allocation23], %s1048
          %s1051 = ssub.s32 16, 16
          %1052 = vsyncadd %s1047, %s1051
          %s1053 = smul.addr %s65, 16
          %s1054 = scalar_lea.hbm %s16, %s1053
          %s1056 = sshll.u32 %s1049, 4
          %s1057 = int_to_ptr.vmem [resolvable:$true] %s1056
          %1059 = dma.hbm_to_vmem [thread:$0]  %s1054, 16, %s1057, %s1047
        $region124: #{tpu_custom_call.1} parent=55 // pred_fallthru
          _
      $region56: #{tpu_custom_call.1} parent=5 // pred_fallthru
        _
      %p1060 = scmp.le.s32.totalorder 1, %s57
      %p1061 = scmp.lt.s32.totalorder %s57, 5
      %p1062 = pnand %p1060, %p1061
      %p1063 = pneg %p1062
      // Predicated region
      $region125: #{tpu_custom_call.1} parent=5 // pred_check
        _
      $region126: #{tpu_custom_call.1} parent=5 // pred_check_branch
        %1065 = sbr.rel (%p1062) target = $region128
      $region127: #{tpu_custom_call.1} parent=5 // pred_region
        %s1066 = ssub.s32 %s57, 1
        %s1067 = sand.u32 %s82, 1
        %s1068 = scalar_lea.sflag [#allocation4], %s1067
        %s1069 = sand.u32 %s82, 1
        %s1070 = smul.addr %s1069, 8
        %s1071 = scalar_lea.vmem [#allocation3], %s1070
        // Predicated region
        $region129: #{tpu_custom_call.1} parent=127 // pred_check
          %p1072 = pneg %p95
        $region130: #{tpu_custom_call.1} parent=127 // pred_check_branch
          %1074 = sbr.rel (%p1072) target = $region132
        $region131: #{tpu_custom_call.1} parent=127 // pred_region
          %1075 = dma.done %s1068, 128
        $region132: #{tpu_custom_call.1} parent=127 // pred_fallthru
          _
        %s1076 = sand.u32 %s62, 1
        %s1077 = scalar_lea.sflag [#allocation7], %s1076
        %s1078 = sand.u32 %s134, 1
        %s1079 = scalar_lea.vmem [#allocation6], %s1078
        // Predicated region
        $region133: #{tpu_custom_call.1} parent=127 // pred_check
          %p1080 = pneg %p147
        $region134: #{tpu_custom_call.1} parent=127 // pred_check_branch
          %1082 = sbr.rel (%p1080) target = $region136
        $region135: #{tpu_custom_call.1} parent=127 // pred_region
          %1083 = dma.done %s1077, 16
        $region136: #{tpu_custom_call.1} parent=127 // pred_fallthru
          _
        %s1084 = sand.u32 %s62, 1
        %s1085 = scalar_lea.sflag [#allocation7], %s1084
        %s1086 = sand.u32 %s186, 1
        %s1087 = scalar_lea.vmem [#allocation8], %s1086
        // Predicated region
        $region137: #{tpu_custom_call.1} parent=127 // pred_check
          %p1088 = pneg %p199
        $region138: #{tpu_custom_call.1} parent=127 // pred_check_branch
          %1090 = sbr.rel (%p1088) target = $region140
        $region139: #{tpu_custom_call.1} parent=127 // pred_region
          %1091 = dma.done %s1085, 16
        $region140: #{tpu_custom_call.1} parent=127 // pred_fallthru
          _
        %s1092 = sand.u32 %s62, 1
        %s1093 = scalar_lea.sflag [#allocation10], %s1092
        %s1094 = sand.u32 %s238, 1
        %s1095 = scalar_lea.vmem [#allocation9], %s1094
        // Predicated region
        $region141: #{tpu_custom_call.1} parent=127 // pred_check
          %p1096 = pneg %p251
        $region142: #{tpu_custom_call.1} parent=127 // pred_check_branch
          %1098 = sbr.rel (%p1096) target = $region144
        $region143: #{tpu_custom_call.1} parent=127 // pred_region
          %1099 = dma.done %s1093, 16
        $region144: #{tpu_custom_call.1} parent=127 // pred_fallthru
          _
        %s1100 = sand.u32 %s62, 1
        %s1101 = scalar_lea.sflag [#allocation10], %s1100
        %s1102 = sand.u32 %s264, 1
        %s1103 = smul.addr %s1102, 16
        %s1104 = scalar_lea.vmem [#allocation11], %s1103
        // Predicated region
        $region145: #{tpu_custom_call.1} parent=127 // pred_check
          %p1105 = pneg %p277
        $region146: #{tpu_custom_call.1} parent=127 // pred_check_branch
          %1107 = sbr.rel (%p1105) target = $region148
        $region147: #{tpu_custom_call.1} parent=127 // pred_region
          %1108 = dma.done %s1101, 256
        $region148: #{tpu_custom_call.1} parent=127 // pred_fallthru
          _
        %s1109 = sand.u32 %s62, 1
        %s1110 = scalar_lea.sflag [#allocation13], %s1109
        %s1111 = sand.u32 %s290, 1
        %s1112 = scalar_lea.vmem [#allocation12], %s1111
        // Predicated region
        $region149: #{tpu_custom_call.1} parent=127 // pred_check
          %p1113 = pneg %p303
        $region150: #{tpu_custom_call.1} parent=127 // pred_check_branch
          %1115 = sbr.rel (%p1113) target = $region152
        $region151: #{tpu_custom_call.1} parent=127 // pred_region
          %1116 = dma.done %s1110, 16
        $region152: #{tpu_custom_call.1} parent=127 // pred_fallthru
          _
        %s1117 = sand.u32 %s62, 1
        %s1118 = scalar_lea.sflag [#allocation13], %s1117
        %s1119 = sand.u32 %s316, 1
        %s1120 = scalar_lea.vmem [#allocation14], %s1119
        // Predicated region
        $region153: #{tpu_custom_call.1} parent=127 // pred_check
          %p1121 = pneg %p329
        $region154: #{tpu_custom_call.1} parent=127 // pred_check_branch
          %1123 = sbr.rel (%p1121) target = $region156
        $region155: #{tpu_custom_call.1} parent=127 // pred_region
          %1124 = dma.done %s1118, 16
        $region156: #{tpu_custom_call.1} parent=127 // pred_fallthru
          _
        %s1125 = sand.u32 %s62, 1
        %s1126 = scalar_lea.sflag [#allocation16], %s1125
        %s1127 = sand.u32 %s342, 1
        %s1128 = scalar_lea.vmem [#allocation15], %s1127
        // Predicated region
        $region157: #{tpu_custom_call.1} parent=127 // pred_check
          %p1129 = pneg %p355
        $region158: #{tpu_custom_call.1} parent=127 // pred_check_branch
          %1131 = sbr.rel (%p1129) target = $region160
        $region159: #{tpu_custom_call.1} parent=127 // pred_region
          %1132 = dma.done %s1126, 16
        $region160: #{tpu_custom_call.1} parent=127 // pred_fallthru
          _
        %s1133 = sand.u32 %s62, 1
        %s1134 = scalar_lea.sflag [#allocation16], %s1133
        %s1135 = sand.u32 %s368, 1
        %s1136 = smul.addr %s1135, 16
        %s1137 = scalar_lea.vmem [#allocation17], %s1136
        // Predicated region
        $region161: #{tpu_custom_call.1} parent=127 // pred_check
          %p1138 = pneg %p381
        $region162: #{tpu_custom_call.1} parent=127 // pred_check_branch
          %1140 = sbr.rel (%p1138) target = $region164
        $region163: #{tpu_custom_call.1} parent=127 // pred_region
          %1141 = dma.done %s1134, 256
        $region164: #{tpu_custom_call.1} parent=127 // pred_fallthru
          _
        %s1142 = sand.u32 %s62, 1
        %s1143 = scalar_lea.sflag [#allocation19], %s1142
        %s1144 = sand.u32 %s394, 1
        %s1145 = scalar_lea.vmem [#allocation18], %s1144
        // Predicated region
        $region165: #{tpu_custom_call.1} parent=127 // pred_check
          %p1146 = pneg %p407
        $region166: #{tpu_custom_call.1} parent=127 // pred_check_branch
          %1148 = sbr.rel (%p1146) target = $region168
        $region167: #{tpu_custom_call.1} parent=127 // pred_region
          %1149 = dma.done %s1143, 16
        $region168: #{tpu_custom_call.1} parent=127 // pred_fallthru
          _
        %s1150 = sand.u32 %s62, 1
        %s1151 = scalar_lea.sflag [#allocation19], %s1150
        %s1152 = sand.u32 %s446, 1
        %s1153 = scalar_lea.vmem [#allocation20], %s1152
        // Predicated region
        $region169: #{tpu_custom_call.1} parent=127 // pred_check
          %p1154 = pneg %p459
        $region170: #{tpu_custom_call.1} parent=127 // pred_check_branch
          %1156 = sbr.rel (%p1154) target = $region172
        $region171: #{tpu_custom_call.1} parent=127 // pred_region
          %1157 = dma.done %s1151, 16
        $region172: #{tpu_custom_call.1} parent=127 // pred_fallthru
          _
        %s1158 = sand.u32 %s62, 1
        %s1159 = scalar_lea.sflag [#allocation22], %s1158
        %s1160 = sand.u32 %s472, 1
        %s1161 = scalar_lea.vmem [#allocation21], %s1160
        // Predicated region
        $region173: #{tpu_custom_call.1} parent=127 // pred_check
          %p1162 = pneg %p485
        $region174: #{tpu_custom_call.1} parent=127 // pred_check_branch
          %1164 = sbr.rel (%p1162) target = $region176
        $region175: #{tpu_custom_call.1} parent=127 // pred_region
          %1165 = dma.done %s1159, 16
        $region176: #{tpu_custom_call.1} parent=127 // pred_fallthru
          _
        %s1166 = sand.u32 %s62, 1
        %s1167 = scalar_lea.sflag [#allocation22], %s1166
        %s1168 = sand.u32 %s498, 1
        %s1169 = scalar_lea.vmem [#allocation23], %s1168
        // Predicated region
        $region177: #{tpu_custom_call.1} parent=127 // pred_check
          %p1170 = pneg %p511
        $region178: #{tpu_custom_call.1} parent=127 // pred_check_branch
          %1172 = sbr.rel (%p1170) target = $region180
        $region179: #{tpu_custom_call.1} parent=127 // pred_region
          %1173 = dma.done %s1167, 16
        $region180: #{tpu_custom_call.1} parent=127 // pred_fallthru
          _
        %s1174 = sand.u32 %s82, 1
        %s1175 = scalar_lea.sflag [#allocation4], %s1174
        %s1176 = sand.u32 %s82, 1
        %s1177 = smul.addr %s1176, 8
        %s1178 = scalar_lea.vmem [#allocation3], %s1177
        %p1179 = pneg %p95
        %p1180 = pneg %p92
        %p1181 = scmp.lt.s32.totalorder %s67, 1
        %s1182 = scalar_select %p1181, %s67, 1
        %s1183 = smul.addr %s1182, 4
        %s1184 = smul.addr %s1183, 4
        %s1185 = scalar_lea.vmem %s1, %s1184
        %p1186 = pneg %p121
        %p1187 = pneg %p118
        %s1188 = sand.u32 %s62, 1
        %s1189 = scalar_lea.sflag [#allocation7], %s1188
        %s1190 = sand.u32 %s134, 1
        %s1191 = scalar_lea.vmem [#allocation6], %s1190
        %p1192 = pneg %p147
        %p1193 = pneg %p144
        %p1194 = scmp.lt.s32.totalorder %s67, 1
        %s1195 = scalar_select %p1194, %s67, 1
        %s1196 = smul.addr %s1195, 4
        %s1197 = smul.addr %s1196, 4
        %s1198 = scalar_lea.vmem %s3, %s1197
        %p1199 = pneg %p173
        %p1200 = pneg %p170
        %s1201 = sand.u32 %s62, 1
        %s1202 = scalar_lea.sflag [#allocation7], %s1201
        %s1203 = sand.u32 %s186, 1
        %s1204 = scalar_lea.vmem [#allocation8], %s1203
        %p1205 = pneg %p199
        %p1206 = pneg %p196
        %p1207 = scmp.lt.s32.totalorder %s67, 1
        %s1208 = scalar_select %p1207, %s67, 1
        %s1209 = smul.addr %s1208, 4
        %s1210 = smul.addr %s1209, 4
        %s1211 = scalar_lea.vmem %s5, %s1210
        %p1212 = pneg %p225
        %p1213 = pneg %p222
        %s1214 = sand.u32 %s62, 1
        %s1215 = scalar_lea.sflag [#allocation10], %s1214
        %s1216 = sand.u32 %s238, 1
        %s1217 = scalar_lea.vmem [#allocation9], %s1216
        %p1218 = pneg %p251
        %p1219 = pneg %p248
        %s1220 = sand.u32 %s62, 1
        %s1221 = scalar_lea.sflag [#allocation10], %s1220
        %s1222 = sand.u32 %s264, 1
        %s1223 = smul.addr %s1222, 16
        %s1224 = scalar_lea.vmem [#allocation11], %s1223
        %p1225 = pneg %p277
        %p1226 = pneg %p274
        %s1227 = sand.u32 %s62, 1
        %s1228 = scalar_lea.sflag [#allocation13], %s1227
        %s1229 = sand.u32 %s290, 1
        %s1230 = scalar_lea.vmem [#allocation12], %s1229
        %p1231 = pneg %p303
        %p1232 = pneg %p300
        %s1233 = sand.u32 %s62, 1
        %s1234 = scalar_lea.sflag [#allocation13], %s1233
        %s1235 = sand.u32 %s316, 1
        %s1236 = scalar_lea.vmem [#allocation14], %s1235
        %p1237 = pneg %p329
        %p1238 = pneg %p326
        %s1239 = sand.u32 %s62, 1
        %s1240 = scalar_lea.sflag [#allocation16], %s1239
        %s1241 = sand.u32 %s342, 1
        %s1242 = scalar_lea.vmem [#allocation15], %s1241
        %p1243 = pneg %p355
        %p1244 = pneg %p352
        %s1245 = sand.u32 %s62, 1
        %s1246 = scalar_lea.sflag [#allocation16], %s1245
        %s1247 = sand.u32 %s368, 1
        %s1248 = smul.addr %s1247, 16
        %s1249 = scalar_lea.vmem [#allocation17], %s1248
        %p1250 = pneg %p381
        %p1251 = pneg %p378
        %s1252 = sand.u32 %s62, 1
        %s1253 = scalar_lea.sflag [#allocation19], %s1252
        %s1254 = sand.u32 %s394, 1
        %s1255 = scalar_lea.vmem [#allocation18], %s1254
        %p1256 = pneg %p407
        %p1257 = pneg %p404
        %p1258 = scmp.lt.s32.totalorder %s67, 1
        %s1259 = scalar_select %p1258, %s67, 1
        %s1260 = smul.addr %s1259, 8
        %s1261 = smul.addr %s1260, 4
        %s1262 = scalar_lea.vmem %s13, %s1261
        %p1263 = pneg %p433
        %p1264 = pneg %p430
        %s1265 = sand.u32 %s62, 1
        %s1266 = scalar_lea.sflag [#allocation19], %s1265
        %s1267 = sand.u32 %s446, 1
        %s1268 = scalar_lea.vmem [#allocation20], %s1267
        %p1269 = pneg %p459
        %p1270 = pneg %p456
        %s1271 = sand.u32 %s62, 1
        %s1272 = scalar_lea.sflag [#allocation22], %s1271
        %s1273 = sand.u32 %s472, 1
        %s1274 = scalar_lea.vmem [#allocation21], %s1273
        %p1275 = pneg %p485
        %p1276 = pneg %p482
        %s1277 = sand.u32 %s62, 1
        %s1278 = scalar_lea.sflag [#allocation22], %s1277
        %s1279 = sand.u32 %s498, 1
        %s1280 = scalar_lea.vmem [#allocation23], %s1279
        %p1281 = pneg %p511
        %p1282 = pneg %p508
        %p1283 = pneg %p532
        %p1284 = pneg %p529
        %p1285 = pneg %p553
        %p1286 = pneg %p550
        %p1287 = pneg %p574
        %p1288 = pneg %p571
        %p1289 = pneg %p595
        %p1290 = pneg %p592
        %p1291 = pneg %p616
        %p1292 = pneg %p613
        %p1293 = pneg %p637
        %p1294 = pneg %p634
        %p1295 = pneg %p658
        %p1296 = pneg %p655
        %p1297 = pneg %p679
        %p1298 = pneg %p676
        %p1299 = pneg %p700
        %p1300 = pneg %p697
        %p1301 = pneg %p721
        %p1302 = pneg %p718
        %p1303 = pneg %p749
        %p1304 = pneg %p746
        %s1305 = sand.u32 %s736, 1
        %s1306 = scalar_lea.sflag [#allocation5], %s1305
        %s1307 = sand.u32 %s736, 1
        %s1308 = smul.addr %s1307, 8
        %s1309 = scalar_lea.vmem [#allocation24], %s1308
        %p1310 = scmp.lt.s32.totalorder %s67, 1
        %s1311 = scalar_select %p1310, %s67, 1
        %s1312 = smul.addr %s1311, 4
        %s1313 = smul.addr %s1312, 4
        %s1314 = scalar_lea.vmem %s1, %s1313
        %p1315 = scmp.lt.s32.totalorder %s67, 1
        %s1316 = scalar_select %p1315, %s67, 1
        %s1317 = smul.addr %s1316, 4
        %s1318 = smul.addr %s1317, 4
        %s1319 = scalar_lea.vmem %s3, %s1318
        %p1320 = scmp.lt.s32.totalorder %s67, 1
        %s1321 = scalar_select %p1320, %s67, 1
        %s1322 = smul.addr %s1321, 4
        %s1323 = smul.addr %s1322, 4
        %s1324 = scalar_lea.vmem %s5, %s1323
        %p1325 = scmp.lt.s32.totalorder %s67, 1
        %s1326 = scalar_select %p1325, %s67, 1
        %s1327 = smul.addr %s1326, 8
        %s1328 = smul.addr %s1327, 4
        %s1329 = scalar_lea.vmem %s13, %s1328
        %p1331 = scmp.eq.s32.totalorder %s67, 0
        // Predicated region
        $region181: #{tpu_custom_call.1} parent=127 // pred_check
          %p1332 = pneg %p1331
        $region182: #{tpu_custom_call.1} parent=127 // pred_check_branch
          %1334 = sbr.rel (%p1332) target = $region184
        $region183: #{tpu_custom_call.1} parent=127 // pred_region
          %v1335 = vld [vmem:[%s1071] sm:$0xff]
          %vm1336 = vcmask 261120
          %1337 = vst.msk [vmem:[#allocation2] sm:$0xff] %vm1336, %v1335
        $region184: #{tpu_custom_call.1} parent=127 // pred_fallthru
          _
        %v1338 = vld [vmem:[#allocation2] sm:$0xff]
        %v1339 = vpack.c.bf16 %v1338, %v1338
        %v1340 = vld [vmem:[%s1314] sm:$0xf]
        %v1341 = vld [vmem:[%s1314 + $0x4] sm:$0xf]
        %v1342 = vld [vmem:[%s1314 + $0x8] sm:$0xf]
        %v1343 = vld [vmem:[%s1314 + $0xc] sm:$0xf]
        %v1344 = vld [vmem:[%s1079] sm:$0x1]
        %v1346 = vlaneseq
        %v1347 = vshrl.u32 %v1346, 7
        %v1348 = vsub.s32 0, %v1347
        %v1349 = vrot.slane %v1344, %v1348
        %v1355 = vunpack.c.l.b16 %v1340
        %v1356 = vunpack.c.l.b16 %v1341
        %v1357 = vunpack.c.l.b16 %v1342
        %v1358 = vunpack.c.l.b16 %v1343
        %v1359 = vpack.c.b16 %v1356, %v1355
        %v1360 = vpack.c.b16 %v1358, %v1357
        %vm1363 = vcmask 261120
        %v1365 = vsel %vm1363, %v1339, 0
        %1367 = vmatprep.subr.bf16.mxu0 0
        %1368 = vmatpush1.bf16.msra.mxu0 %v1359
        %1369 = vmatprep.subr.bf16.mxu0 0
        %1370 = vmatpush1.bf16.msra.mxu0 %v1360
        %1371 = vmatprep.subr.bf16.mxu0 0
        %1372 = vmatpush1.bf16.msra.mxu0 0
        %1373 = vmatprep.subr.bf16.mxu0 0
        %1374 = vmatpush1.bf16.msra.mxu0 0
        %1375 = vmatprep.subr.bf16.mxu0 0
        %1376 = vmatpush1.bf16.msra.mxu0 0
        %1377 = vmatprep.subr.bf16.mxu0 0
        %1378 = vmatpush1.bf16.msra.mxu0 0
        %1379 = vmatprep.subr.bf16.mxu0 0
        %1380 = vmatpush1.bf16.msra.mxu0 0
        %1381 = vmatprep.subr.bf16.mxu0 0
        %1382 = vmatpush1.bf16.msra.mxu0 0
        %1383 = vmatprep.subr.bf16.mxu0 0
        %1384 = vmatpush1.bf16.msra.mxu0 0
        %1385 = vmatprep.subr.bf16.mxu0 0
        %1386 = vmatpush1.bf16.msra.mxu0 0
        %1387 = vmatprep.subr.bf16.mxu0 0
        %1388 = vmatpush1.bf16.msra.mxu0 0
        %1389 = vmatprep.subr.bf16.mxu0 0
        %1390 = vmatpush1.bf16.msra.mxu0 0
        %1391 = vmatprep.subr.bf16.mxu0 0
        %1392 = vmatpush1.bf16.msra.mxu0 0
        %1393 = vmatprep.subr.bf16.mxu0 0
        %1394 = vmatpush1.bf16.msra.mxu0 0
        %1395 = vmatprep.subr.bf16.mxu0 0
        %1396 = vmatpush1.bf16.msra.mxu0 0
        %1397 = vmatprep.subr.bf16.mxu0 0
        %1398 = vmatpush1.bf16.msra.mxu0 0
        %1399 = vmatprep.mubr.bf16.mxu0 0
        %1400 = vmatmul.mubr.bf16.gmra.mrb[0].mxu0 %v1365
        %v1401 = vpop.f32.mrb[0].mxu0
        %v1402 = vadd.f32 %v1349, %v1401
        %v1403 = vpop.f32.mrb[0].mxu0
        %v1404 = vpop.f32.mrb[0].mxu0
        %v1405 = vpop.f32.mrb[0].mxu0
        %1406 = vdwg.mxu0
        %v1407 = vld [vmem:[%s1319] sm:$0xf]
        %v1408 = vld [vmem:[%s1319 + $0x4] sm:$0xf]
        %v1409 = vld [vmem:[%s1319 + $0x8] sm:$0xf]
        %v1410 = vld [vmem:[%s1319 + $0xc] sm:$0xf]
        %v1411 = vld [vmem:[%s1087] sm:$0x1]
        %v1413 = vlaneseq
        %v1414 = vshrl.u32 %v1413, 7
        %v1415 = vsub.s32 0, %v1414
        %v1416 = vrot.slane %v1411, %v1415
        %v1422 = vunpack.c.l.b16 %v1407
        %v1423 = vunpack.c.l.b16 %v1408
        %v1424 = vunpack.c.l.b16 %v1409
        %v1425 = vunpack.c.l.b16 %v1410
        %v1426 = vpack.c.b16 %v1423, %v1422
        %v1427 = vpack.c.b16 %v1425, %v1424
        %1430 = vmatprep.subr.bf16.mxu0 0
        %1431 = vmatpush1.bf16.msra.mxu0 %v1426
        %1432 = vmatprep.subr.bf16.mxu0 0
        %1433 = vmatpush1.bf16.msra.mxu0 %v1427
        %1434 = vmatprep.subr.bf16.mxu0 0
        %1435 = vmatpush1.bf16.msra.mxu0 0
        %1436 = vmatprep.subr.bf16.mxu0 0
        %1437 = vmatpush1.bf16.msra.mxu0 0
        %1438 = vmatprep.subr.bf16.mxu0 0
        %1439 = vmatpush1.bf16.msra.mxu0 0
        %1440 = vmatprep.subr.bf16.mxu0 0
        %1441 = vmatpush1.bf16.msra.mxu0 0
        %1442 = vmatprep.subr.bf16.mxu0 0
        %1443 = vmatpush1.bf16.msra.mxu0 0
        %1444 = vmatprep.subr.bf16.mxu0 0
        %1445 = vmatpush1.bf16.msra.mxu0 0
        %1446 = vmatprep.subr.bf16.mxu0 0
        %1447 = vmatpush1.bf16.msra.mxu0 0
        %1448 = vmatprep.subr.bf16.mxu0 0
        %1449 = vmatpush1.bf16.msra.mxu0 0
        %1450 = vmatprep.subr.bf16.mxu0 0
        %1451 = vmatpush1.bf16.msra.mxu0 0
        %1452 = vmatprep.subr.bf16.mxu0 0
        %1453 = vmatpush1.bf16.msra.mxu0 0
        %1454 = vmatprep.subr.bf16.mxu0 0
        %1455 = vmatpush1.bf16.msra.mxu0 0
        %1456 = vmatprep.subr.bf16.mxu0 0
        %1457 = vmatpush1.bf16.msra.mxu0 0
        %1458 = vmatprep.subr.bf16.mxu0 0
        %1459 = vmatpush1.bf16.msra.mxu0 0
        %1460 = vmatprep.subr.bf16.mxu0 0
        %1461 = vmatpush1.bf16.msra.mxu0 0
        %1462 = vmatprep.mubr.bf16.mxu0 0
        %1463 = vmatmul.mubr.bf16.gmra.mrb[0].mxu0 %v1365
        %v1464 = vpop.f32.mrb[0].mxu0
        %v1465 = vadd.f32 %v1416, %v1464
        %v1466 = vpop.f32.mrb[0].mxu0
        %v1467 = vpop.f32.mrb[0].mxu0
        %v1468 = vpop.f32.mrb[0].mxu0
        %1469 = vdwg.mxu0
        %v1470 = vld [vmem:[%s1324] sm:$0xf]
        %v1471 = vld [vmem:[%s1324 + $0x4] sm:$0xf]
        %v1472 = vld [vmem:[%s1324 + $0x8] sm:$0xf]
        %v1473 = vld [vmem:[%s1324 + $0xc] sm:$0xf]
        %v1474 = vld [vmem:[%s1095] sm:$0x1]
        %v1476 = vlaneseq
        %v1477 = vshrl.u32 %v1476, 7
        %v1478 = vsub.s32 0, %v1477
        %v1479 = vrot.slane %v1474, %v1478
        %v1485 = vunpack.c.l.b16 %v1470
        %v1486 = vunpack.c.l.b16 %v1471
        %v1487 = vunpack.c.l.b16 %v1472
        %v1488 = vunpack.c.l.b16 %v1473
        %v1489 = vpack.c.b16 %v1486, %v1485
        %v1490 = vpack.c.b16 %v1488, %v1487
        %1493 = vmatprep.subr.bf16.mxu0 0
        %1494 = vmatpush1.bf16.msra.mxu0 %v1489
        %1495 = vmatprep.subr.bf16.mxu0 0
        %1496 = vmatpush1.bf16.msra.mxu0 %v1490
        %1497 = vmatprep.subr.bf16.mxu0 0
        %1498 = vmatpush1.bf16.msra.mxu0 0
        %1499 = vmatprep.subr.bf16.mxu0 0
        %1500 = vmatpush1.bf16.msra.mxu0 0
        %1501 = vmatprep.subr.bf16.mxu0 0
        %1502 = vmatpush1.bf16.msra.mxu0 0
        %1503 = vmatprep.subr.bf16.mxu0 0
        %1504 = vmatpush1.bf16.msra.mxu0 0
        %1505 = vmatprep.subr.bf16.mxu0 0
        %1506 = vmatpush1.bf16.msra.mxu0 0
        %1507 = vmatprep.subr.bf16.mxu0 0
        %1508 = vmatpush1.bf16.msra.mxu0 0
        %1509 = vmatprep.subr.bf16.mxu0 0
        %1510 = vmatpush1.bf16.msra.mxu0 0
        %1511 = vmatprep.subr.bf16.mxu0 0
        %1512 = vmatpush1.bf16.msra.mxu0 0
        %1513 = vmatprep.subr.bf16.mxu0 0
        %1514 = vmatpush1.bf16.msra.mxu0 0
        %1515 = vmatprep.subr.bf16.mxu0 0
        %1516 = vmatpush1.bf16.msra.mxu0 0
        %1517 = vmatprep.subr.bf16.mxu0 0
        %1518 = vmatpush1.bf16.msra.mxu0 0
        %1519 = vmatprep.subr.bf16.mxu0 0
        %1520 = vmatpush1.bf16.msra.mxu0 0
        %1521 = vmatprep.subr.bf16.mxu0 0
        %1522 = vmatpush1.bf16.msra.mxu0 0
        %1523 = vmatprep.subr.bf16.mxu0 0
        %1524 = vmatpush1.bf16.msra.mxu0 0
        %1525 = vmatprep.mubr.bf16.mxu0 0
        %1526 = vmatmul.mubr.bf16.gmra.mrb[0].mxu0 %v1365
        %v1527 = vpop.f32.mrb[0].mxu0
        %v1528 = vadd.f32 %v1479, %v1527
        %v1529 = vpop.f32.mrb[0].mxu0
        %v1530 = vpop.f32.mrb[0].mxu0
        %v1531 = vpop.f32.mrb[0].mxu0
        %1532 = vdwg.mxu0
        %v1533 = vpack.c.bf16 %v1402, %v1402
        %v1534 = vpack.c.bf16 %v1465, %v1465
        %v1535 = vpack.c.bf16 %v1528, %v1528
        %vm1536 = vcmask 64512
        %v1538 = vsel %vm1536, %v1533, 0
        %v1541 = vsel %vm1536, %v1534, 0
        %1543 = vmatprep.subr.bf16.mxu0 0
        %1544 = vmatpush1.bf16.xpose.msra.mxu0 %v1541
        %1545 = vmatprep.subr.bf16.mxu0 0
        %1546 = vmatpush1.bf16.xpose.msra.mxu0 0
        %1547 = vmatprep.subr.bf16.mxu0 0
        %1548 = vmatpush1.bf16.xpose.msra.mxu0 0
        %1549 = vmatprep.subr.bf16.mxu0 0
        %1550 = vmatpush1.bf16.xpose.msra.mxu0 0
        %1551 = vmatprep.subr.bf16.mxu0 0
        %1552 = vmatpush1.bf16.xpose.msra.mxu0 0
        %1553 = vmatprep.subr.bf16.mxu0 0
        %1554 = vmatpush1.bf16.xpose.msra.mxu0 0
        %1555 = vmatprep.subr.bf16.mxu0 0
        %1556 = vmatpush1.bf16.xpose.msra.mxu0 0
        %1557 = vmatprep.subr.bf16.mxu0 0
        %1558 = vmatpush1.bf16.xpose.msra.mxu0 0
        %1559 = vmatprep.subr.bf16.mxu0 0
        %1560 = vmatpush1.bf16.xpose.msra.mxu0 0
        %1561 = vmatprep.subr.bf16.mxu0 0
        %1562 = vmatpush1.bf16.xpose.msra.mxu0 0
        %1563 = vmatprep.subr.bf16.mxu0 0
        %1564 = vmatpush1.bf16.xpose.msra.mxu0 0
        %1565 = vmatprep.subr.bf16.mxu0 0
        %1566 = vmatpush1.bf16.xpose.msra.mxu0 0
        %1567 = vmatprep.subr.bf16.mxu0 0
        %1568 = vmatpush1.bf16.xpose.msra.mxu0 0
        %1569 = vmatprep.subr.bf16.mxu0 0
        %1570 = vmatpush1.bf16.xpose.msra.mxu0 0
        %1571 = vmatprep.subr.bf16.mxu0 0
        %1572 = vmatpush1.bf16.xpose.msra.mxu0 0
        %1573 = vmatprep.subr.bf16.mxu0 0
        %1574 = vmatpush1.bf16.xpose.msra.mxu0 0
        %1575 = vmatprep.mubr.bf16.mxu0 0
        %1576 = vmatmul.mubr.bf16.gmra.mrb[0].mxu0 %v1538
        %v1577 = vpop.f32.mrb[0].mxu0
        %v1578 = vadd.f32 0.0, %v1577
        %v1579 = vpop.f32.mrb[0].mxu0
        %v1580 = vpop.f32.mrb[0].mxu0
        %v1581 = vpop.f32.mrb[0].mxu0
        %1582 = vdwg.mxu0
        %v1583 = vsel %vm1536, %v1578, -inf
        %1584 = vmax.xlane.f32.xlu0 %v1583
        %v1585 = vpop.xlane.xlu0 %1584
        %v1586 = vsub.f32 %v1578, %v1585
        %v1587 = vmul.f32 %v1586, 1.442695
        %v1588 = vpow.pop %v1587
        %v1589 = vsel %vm1536, %v1588, 0.0
        %1590 = vadd.xlane.f32.xlu0 %v1589
        %v1591 = vpop.xlane.xlu0 %1590
        %v1592 = vrcp.pop %v1591
        %v1593 = vmul.f32 %v1588, %v1592
        %v1594 = vpack.c.bf16 %v1593, %v1593
        %v1596 = vsel %vm1536, %v1594, 0
        %vm1598 = vcmask 1043456
        %v1600 = vsel %vm1598, %v1535, 0
        %1602 = vmatprep.subr.bf16.mxu0 0
        %1603 = vmatpush1.bf16.msra.mxu0 %v1600
        %1604 = vmatprep.subr.bf16.mxu0 0
        %1605 = vmatpush1.bf16.msra.mxu0 0
        %1606 = vmatprep.subr.bf16.mxu0 0
        %1607 = vmatpush1.bf16.msra.mxu0 0
        %1608 = vmatprep.subr.bf16.mxu0 0
        %1609 = vmatpush1.bf16.msra.mxu0 0
        %1610 = vmatprep.subr.bf16.mxu0 0
        %1611 = vmatpush1.bf16.msra.mxu0 0
        %1612 = vmatprep.subr.bf16.mxu0 0
        %1613 = vmatpush1.bf16.msra.mxu0 0
        %1614 = vmatprep.subr.bf16.mxu0 0
        %1615 = vmatpush1.bf16.msra.mxu0 0
        %1616 = vmatprep.subr.bf16.mxu0 0
        %1617 = vmatpush1.bf16.msra.mxu0 0
        %1618 = vmatprep.subr.bf16.mxu0 0
        %1619 = vmatpush1.bf16.msra.mxu0 0
        %1620 = vmatprep.subr.bf16.mxu0 0
        %1621 = vmatpush1.bf16.msra.mxu0 0
        %1622 = vmatprep.subr.bf16.mxu0 0
        %1623 = vmatpush1.bf16.msra.mxu0 0
        %1624 = vmatprep.subr.bf16.mxu0 0
        %1625 = vmatpush1.bf16.msra.mxu0 0
        %1626 = vmatprep.subr.bf16.mxu0 0
        %1627 = vmatpush1.bf16.msra.mxu0 0
        %1628 = vmatprep.subr.bf16.mxu0 0
        %1629 = vmatpush1.bf16.msra.mxu0 0
        %1630 = vmatprep.subr.bf16.mxu0 0
        %1631 = vmatpush1.bf16.msra.mxu0 0
        %1632 = vmatprep.subr.bf16.mxu0 0
        %1633 = vmatpush1.bf16.msra.mxu0 0
        %1634 = vmatprep.mubr.bf16.mxu0 0
        %1635 = vmatmul.mubr.bf16.gmra.mrb[0].mxu0 %v1596
        %v1636 = vpop.f32.mrb[0].mxu0
        %v1637 = vadd.f32 0.0, %v1636
        %v1638 = vpop.f32.mrb[0].mxu0
        %v1639 = vpop.f32.mrb[0].mxu0
        %v1640 = vpop.f32.mrb[0].mxu0
        %1641 = vdwg.mxu0
        %1643 = vrot.lane.b32.xlu0 %v1533, 120
        %v1644 = vpop.permute.xlu0 %1643
        %1646 = vrot.lane.b32.xlu0 %v1534, 120
        %v1647 = vpop.permute.xlu0 %1646
        %v1649 = vsel %vm1536, %v1644, 0
        %v1652 = vsel %vm1536, %v1647, 0
        %1654 = vmatprep.subr.bf16.mxu0 0
        %1655 = vmatpush1.bf16.xpose.msra.mxu0 %v1652
        %1656 = vmatprep.subr.bf16.mxu0 0
        %1657 = vmatpush1.bf16.xpose.msra.mxu0 0
        %1658 = vmatprep.subr.bf16.mxu0 0
        %1659 = vmatpush1.bf16.xpose.msra.mxu0 0
        %1660 = vmatprep.subr.bf16.mxu0 0
        %1661 = vmatpush1.bf16.xpose.msra.mxu0 0
        %1662 = vmatprep.subr.bf16.mxu0 0
        %1663 = vmatpush1.bf16.xpose.msra.mxu0 0
        %1664 = vmatprep.subr.bf16.mxu0 0
        %1665 = vmatpush1.bf16.xpose.msra.mxu0 0
        %1666 = vmatprep.subr.bf16.mxu0 0
        %1667 = vmatpush1.bf16.xpose.msra.mxu0 0
        %1668 = vmatprep.subr.bf16.mxu0 0
        %1669 = vmatpush1.bf16.xpose.msra.mxu0 0
        %1670 = vmatprep.subr.bf16.mxu0 0
        %1671 = vmatpush1.bf16.xpose.msra.mxu0 0
        %1672 = vmatprep.subr.bf16.mxu0 0
        %1673 = vmatpush1.bf16.xpose.msra.mxu0 0
        %1674 = vmatprep.subr.bf16.mxu0 0
        %1675 = vmatpush1.bf16.xpose.msra.mxu0 0
        %1676 = vmatprep.subr.bf16.mxu0 0
        %1677 = vmatpush1.bf16.xpose.msra.mxu0 0
        %1678 = vmatprep.subr.bf16.mxu0 0
        %1679 = vmatpush1.bf16.xpose.msra.mxu0 0
        %1680 = vmatprep.subr.bf16.mxu0 0
        %1681 = vmatpush1.bf16.xpose.msra.mxu0 0
        %1682 = vmatprep.subr.bf16.mxu0 0
        %1683 = vmatpush1.bf16.xpose.msra.mxu0 0
        %1684 = vmatprep.subr.bf16.mxu0 0
        %1685 = vmatpush1.bf16.xpose.msra.mxu0 0
        %1686 = vmatprep.mubr.bf16.mxu0 0
        %1687 = vmatmul.mubr.bf16.gmra.mrb[0].mxu0 %v1649
        %v1688 = vpop.f32.mrb[0].mxu0
        %v1689 = vadd.f32 0.0, %v1688
        %v1690 = vpop.f32.mrb[0].mxu0
        %v1691 = vpop.f32.mrb[0].mxu0
        %v1692 = vpop.f32.mrb[0].mxu0
        %1693 = vdwg.mxu0
        %v1694 = vsel %vm1536, %v1689, -inf
        %1695 = vmax.xlane.f32.xlu0 %v1694
        %v1696 = vpop.xlane.xlu0 %1695
        %v1697 = vsub.f32 %v1689, %v1696
        %v1698 = vmul.f32 %v1697, 1.442695
        %v1699 = vpow.pop %v1698
        %v1700 = vsel %vm1536, %v1699, 0.0
        %1701 = vadd.xlane.f32.xlu0 %v1700
        %v1702 = vpop.xlane.xlu0 %1701
        %v1703 = vrcp.pop %v1702
        %v1704 = vmul.f32 %v1699, %v1703
        %v1705 = vpack.c.bf16 %v1704, %v1704
        %1707 = vrot.lane.b32.xlu0 %v1535, 120
        %v1708 = vpop.permute.xlu0 %1707
        %v1710 = vsel %vm1536, %v1705, 0
        %v1713 = vsel %vm1598, %v1708, 0
        %1715 = vmatprep.subr.bf16.mxu0 0
        %1716 = vmatpush1.bf16.msra.mxu0 %v1713
        %1717 = vmatprep.subr.bf16.mxu0 0
        %1718 = vmatpush1.bf16.msra.mxu0 0
        %1719 = vmatprep.subr.bf16.mxu0 0
        %1720 = vmatpush1.bf16.msra.mxu0 0
        %1721 = vmatprep.subr.bf16.mxu0 0
        %1722 = vmatpush1.bf16.msra.mxu0 0
        %1723 = vmatprep.subr.bf16.mxu0 0
        %1724 = vmatpush1.bf16.msra.mxu0 0
        %1725 = vmatprep.subr.bf16.mxu0 0
        %1726 = vmatpush1.bf16.msra.mxu0 0
        %1727 = vmatprep.subr.bf16.mxu0 0
        %1728 = vmatpush1.bf16.msra.mxu0 0
        %1729 = vmatprep.subr.bf16.mxu0 0
        %1730 = vmatpush1.bf16.msra.mxu0 0
        %1731 = vmatprep.subr.bf16.mxu0 0
        %1732 = vmatpush1.bf16.msra.mxu0 0
        %1733 = vmatprep.subr.bf16.mxu0 0
        %1734 = vmatpush1.bf16.msra.mxu0 0
        %1735 = vmatprep.subr.bf16.mxu0 0
        %1736 = vmatpush1.bf16.msra.mxu0 0
        %1737 = vmatprep.subr.bf16.mxu0 0
        %1738 = vmatpush1.bf16.msra.mxu0 0
        %1739 = vmatprep.subr.bf16.mxu0 0
        %1740 = vmatpush1.bf16.msra.mxu0 0
        %1741 = vmatprep.subr.bf16.mxu0 0
        %1742 = vmatpush1.bf16.msra.mxu0 0
        %1743 = vmatprep.subr.bf16.mxu0 0
        %1744 = vmatpush1.bf16.msra.mxu0 0
        %1745 = vmatprep.subr.bf16.mxu0 0
        %1746 = vmatpush1.bf16.msra.mxu0 0
        %1747 = vmatprep.mubr.bf16.mxu0 0
        %1748 = vmatmul.mubr.bf16.gmra.mrb[0].mxu0 %v1710
        %v1749 = vpop.f32.mrb[0].mxu0
        %v1750 = vadd.f32 0.0, %v1749
        %v1751 = vpop.f32.mrb[0].mxu0
        %v1752 = vpop.f32.mrb[0].mxu0
        %v1753 = vpop.f32.mrb[0].mxu0
        %1754 = vdwg.mxu0
        %1755 = vrot.lane.b32.xlu0 %v1533, 112
        %v1756 = vpop.permute.xlu0 %1755
        %1757 = vrot.lane.b32.xlu0 %v1534, 112
        %v1758 = vpop.permute.xlu0 %1757
        %v1760 = vsel %vm1536, %v1756, 0
        %v1763 = vsel %vm1536, %v1758, 0
        %1765 = vmatprep.subr.bf16.mxu0 0
        %1766 = vmatpush1.bf16.xpose.msra.mxu0 %v1763
        %1767 = vmatprep.subr.bf16.mxu0 0
        %1768 = vmatpush1.bf16.xpose.msra.mxu0 0
        %1769 = vmatprep.subr.bf16.mxu0 0
        %1770 = vmatpush1.bf16.xpose.msra.mxu0 0
        %1771 = vmatprep.subr.bf16.mxu0 0
        %1772 = vmatpush1.bf16.xpose.msra.mxu0 0
        %1773 = vmatprep.subr.bf16.mxu0 0
        %1774 = vmatpush1.bf16.xpose.msra.mxu0 0
        %1775 = vmatprep.subr.bf16.mxu0 0
        %1776 = vmatpush1.bf16.xpose.msra.mxu0 0
        %1777 = vmatprep.subr.bf16.mxu0 0
        %1778 = vmatpush1.bf16.xpose.msra.mxu0 0
        %1779 = vmatprep.subr.bf16.mxu0 0
        %1780 = vmatpush1.bf16.xpose.msra.mxu0 0
        %1781 = vmatprep.subr.bf16.mxu0 0
        %1782 = vmatpush1.bf16.xpose.msra.mxu0 0
        %1783 = vmatprep.subr.bf16.mxu0 0
        %1784 = vmatpush1.bf16.xpose.msra.mxu0 0
        %1785 = vmatprep.subr.bf16.mxu0 0
        %1786 = vmatpush1.bf16.xpose.msra.mxu0 0
        %1787 = vmatprep.subr.bf16.mxu0 0
        %1788 = vmatpush1.bf16.xpose.msra.mxu0 0
        %1789 = vmatprep.subr.bf16.mxu0 0
        %1790 = vmatpush1.bf16.xpose.msra.mxu0 0
        %1791 = vmatprep.subr.bf16.mxu0 0
        %1792 = vmatpush1.bf16.xpose.msra.mxu0 0
        %1793 = vmatprep.subr.bf16.mxu0 0
        %1794 = vmatpush1.bf16.xpose.msra.mxu0 0
        %1795 = vmatprep.subr.bf16.mxu0 0
        %1796 = vmatpush1.bf16.xpose.msra.mxu0 0
        %1797 = vmatprep.mubr.bf16.mxu0 0
        %1798 = vmatmul.mubr.bf16.gmra.mrb[0].mxu0 %v1760
        %v1799 = vpop.f32.mrb[0].mxu0
        %v1800 = vadd.f32 0.0, %v1799
        %v1801 = vpop.f32.mrb[0].mxu0
        %v1802 = vpop.f32.mrb[0].mxu0
        %v1803 = vpop.f32.mrb[0].mxu0
        %1804 = vdwg.mxu0
        %v1805 = vsel %vm1536, %v1800, -inf
        %1806 = vmax.xlane.f32.xlu0 %v1805
        %v1807 = vpop.xlane.xlu0 %1806
        %v1808 = vsub.f32 %v1800, %v1807
        %v1809 = vmul.f32 %v1808, 1.442695
        %v1810 = vpow.pop %v1809
        %v1811 = vsel %vm1536, %v1810, 0.0
        %1812 = vadd.xlane.f32.xlu0 %v1811
        %v1813 = vpop.xlane.xlu0 %1812
        %v1814 = vrcp.pop %v1813
        %v1815 = vmul.f32 %v1810, %v1814
        %v1816 = vpack.c.bf16 %v1815, %v1815
        %1817 = vrot.lane.b32.xlu0 %v1535, 112
        %v1818 = vpop.permute.xlu0 %1817
        %v1820 = vsel %vm1536, %v1816, 0
        %v1823 = vsel %vm1598, %v1818, 0
        %1825 = vmatprep.subr.bf16.mxu0 0
        %1826 = vmatpush1.bf16.msra.mxu0 %v1823
        %1827 = vmatprep.subr.bf16.mxu0 0
        %1828 = vmatpush1.bf16.msra.mxu0 0
        %1829 = vmatprep.subr.bf16.mxu0 0
        %1830 = vmatpush1.bf16.msra.mxu0 0
        %1831 = vmatprep.subr.bf16.mxu0 0
        %1832 = vmatpush1.bf16.msra.mxu0 0
        %1833 = vmatprep.subr.bf16.mxu0 0
        %1834 = vmatpush1.bf16.msra.mxu0 0
        %1835 = vmatprep.subr.bf16.mxu0 0
        %1836 = vmatpush1.bf16.msra.mxu0 0
        %1837 = vmatprep.subr.bf16.mxu0 0
        %1838 = vmatpush1.bf16.msra.mxu0 0
        %1839 = vmatprep.subr.bf16.mxu0 0
        %1840 = vmatpush1.bf16.msra.mxu0 0
        %1841 = vmatprep.subr.bf16.mxu0 0
        %1842 = vmatpush1.bf16.msra.mxu0 0
        %1843 = vmatprep.subr.bf16.mxu0 0
        %1844 = vmatpush1.bf16.msra.mxu0 0
        %1845 = vmatprep.subr.bf16.mxu0 0
        %1846 = vmatpush1.bf16.msra.mxu0 0
        %1847 = vmatprep.subr.bf16.mxu0 0
        %1848 = vmatpush1.bf16.msra.mxu0 0
        %1849 = vmatprep.subr.bf16.mxu0 0
        %1850 = vmatpush1.bf16.msra.mxu0 0
        %1851 = vmatprep.subr.bf16.mxu0 0
        %1852 = vmatpush1.bf16.msra.mxu0 0
        %1853 = vmatprep.subr.bf16.mxu0 0
        %1854 = vmatpush1.bf16.msra.mxu0 0
        %1855 = vmatprep.subr.bf16.mxu0 0
        %1856 = vmatpush1.bf16.msra.mxu0 0
        %1857 = vmatprep.mubr.bf16.mxu0 0
        %1858 = vmatmul.mubr.bf16.gmra.mrb[0].mxu0 %v1820
        %v1859 = vpop.f32.mrb[0].mxu0
        %v1860 = vadd.f32 0.0, %v1859
        %v1861 = vpop.f32.mrb[0].mxu0
        %v1862 = vpop.f32.mrb[0].mxu0
        %v1863 = vpop.f32.mrb[0].mxu0
        %1864 = vdwg.mxu0
        %1865 = vrot.lane.b32.xlu0 %v1533, 104
        %v1866 = vpop.permute.xlu0 %1865
        %1867 = vrot.lane.b32.xlu0 %v1534, 104
        %v1868 = vpop.permute.xlu0 %1867
        %v1870 = vsel %vm1536, %v1866, 0
        %v1873 = vsel %vm1536, %v1868, 0
        %1875 = vmatprep.subr.bf16.mxu0 0
        %1876 = vmatpush1.bf16.xpose.msra.mxu0 %v1873
        %1877 = vmatprep.subr.bf16.mxu0 0
        %1878 = vmatpush1.bf16.xpose.msra.mxu0 0
        %1879 = vmatprep.subr.bf16.mxu0 0
        %1880 = vmatpush1.bf16.xpose.msra.mxu0 0
        %1881 = vmatprep.subr.bf16.mxu0 0
        %1882 = vmatpush1.bf16.xpose.msra.mxu0 0
        %1883 = vmatprep.subr.bf16.mxu0 0
        %1884 = vmatpush1.bf16.xpose.msra.mxu0 0
        %1885 = vmatprep.subr.bf16.mxu0 0
        %1886 = vmatpush1.bf16.xpose.msra.mxu0 0
        %1887 = vmatprep.subr.bf16.mxu0 0
        %1888 = vmatpush1.bf16.xpose.msra.mxu0 0
        %1889 = vmatprep.subr.bf16.mxu0 0
        %1890 = vmatpush1.bf16.xpose.msra.mxu0 0
        %1891 = vmatprep.subr.bf16.mxu0 0
        %1892 = vmatpush1.bf16.xpose.msra.mxu0 0
        %1893 = vmatprep.subr.bf16.mxu0 0
        %1894 = vmatpush1.bf16.xpose.msra.mxu0 0
        %1895 = vmatprep.subr.bf16.mxu0 0
        %1896 = vmatpush1.bf16.xpose.msra.mxu0 0
        %1897 = vmatprep.subr.bf16.mxu0 0
        %1898 = vmatpush1.bf16.xpose.msra.mxu0 0
        %1899 = vmatprep.subr.bf16.mxu0 0
        %1900 = vmatpush1.bf16.xpose.msra.mxu0 0
        %1901 = vmatprep.subr.bf16.mxu0 0
        %1902 = vmatpush1.bf16.xpose.msra.mxu0 0
        %1903 = vmatprep.subr.bf16.mxu0 0
        %1904 = vmatpush1.bf16.xpose.msra.mxu0 0
        %1905 = vmatprep.subr.bf16.mxu0 0
        %1906 = vmatpush1.bf16.xpose.msra.mxu0 0
        %1907 = vmatprep.mubr.bf16.mxu0 0
        %1908 = vmatmul.mubr.bf16.gmra.mrb[0].mxu0 %v1870
        %v1909 = vpop.f32.mrb[0].mxu0
        %v1910 = vadd.f32 0.0, %v1909
        %v1911 = vpop.f32.mrb[0].mxu0
        %v1912 = vpop.f32.mrb[0].mxu0
        %v1913 = vpop.f32.mrb[0].mxu0
        %1914 = vdwg.mxu0
        %v1915 = vsel %vm1536, %v1910, -inf
        %1916 = vmax.xlane.f32.xlu0 %v1915
        %v1917 = vpop.xlane.xlu0 %1916
        %v1918 = vsub.f32 %v1910, %v1917
        %v1919 = vmul.f32 %v1918, 1.442695
        %v1920 = vpow.pop %v1919
        %v1921 = vsel %vm1536, %v1920, 0.0
        %1922 = vadd.xlane.f32.xlu0 %v1921
        %v1923 = vpop.xlane.xlu0 %1922
        %v1924 = vrcp.pop %v1923
        %v1925 = vmul.f32 %v1920, %v1924
        %v1926 = vpack.c.bf16 %v1925, %v1925
        %1927 = vrot.lane.b32.xlu0 %v1535, 104
        %v1928 = vpop.permute.xlu0 %1927
        %v1930 = vsel %vm1536, %v1926, 0
        %v1933 = vsel %vm1598, %v1928, 0
        %1935 = vmatprep.subr.bf16.mxu0 0
        %1936 = vmatpush1.bf16.msra.mxu0 %v1933
        %1937 = vmatprep.subr.bf16.mxu0 0
        %1938 = vmatpush1.bf16.msra.mxu0 0
        %1939 = vmatprep.subr.bf16.mxu0 0
        %1940 = vmatpush1.bf16.msra.mxu0 0
        %1941 = vmatprep.subr.bf16.mxu0 0
        %1942 = vmatpush1.bf16.msra.mxu0 0
        %1943 = vmatprep.subr.bf16.mxu0 0
        %1944 = vmatpush1.bf16.msra.mxu0 0
        %1945 = vmatprep.subr.bf16.mxu0 0
        %1946 = vmatpush1.bf16.msra.mxu0 0
        %1947 = vmatprep.subr.bf16.mxu0 0
        %1948 = vmatpush1.bf16.msra.mxu0 0
        %1949 = vmatprep.subr.bf16.mxu0 0
        %1950 = vmatpush1.bf16.msra.mxu0 0
        %1951 = vmatprep.subr.bf16.mxu0 0
        %1952 = vmatpush1.bf16.msra.mxu0 0
        %1953 = vmatprep.subr.bf16.mxu0 0
        %1954 = vmatpush1.bf16.msra.mxu0 0
        %1955 = vmatprep.subr.bf16.mxu0 0
        %1956 = vmatpush1.bf16.msra.mxu0 0
        %1957 = vmatprep.subr.bf16.mxu0 0
        %1958 = vmatpush1.bf16.msra.mxu0 0
        %1959 = vmatprep.subr.bf16.mxu0 0
        %1960 = vmatpush1.bf16.msra.mxu0 0
        %1961 = vmatprep.subr.bf16.mxu0 0
        %1962 = vmatpush1.bf16.msra.mxu0 0
        %1963 = vmatprep.subr.bf16.mxu0 0
        %1964 = vmatpush1.bf16.msra.mxu0 0
        %1965 = vmatprep.subr.bf16.mxu0 0
        %1966 = vmatpush1.bf16.msra.mxu0 0
        %1967 = vmatprep.mubr.bf16.mxu0 0
        %1968 = vmatmul.mubr.bf16.gmra.mrb[0].mxu0 %v1930
        %v1969 = vpop.f32.mrb[0].mxu0
        %v1970 = vadd.f32 0.0, %v1969
        %v1971 = vpop.f32.mrb[0].mxu0
        %v1972 = vpop.f32.mrb[0].mxu0
        %v1973 = vpop.f32.mrb[0].mxu0
        %1974 = vdwg.mxu0
        %1976 = vrot.lane.b32.xlu0 %v1750, 8
        %v1977 = vpop.permute.xlu0 %1976
        %1980 = vrot.lane.b32.xlu0 %v1860, 16
        %v1981 = vpop.permute.xlu0 %1980
        %1984 = vrot.lane.b32.xlu0 %v1970, 24
        %v1985 = vpop.permute.xlu0 %1984
        %v1987 = vsel %vm1536, %v1637, %v1977
        %vm1988 = vcmask 130048
        %v1989 = vsel %vm1988, %v1987, %v1981
        %vm1990 = vcmask 195584
        %v1991 = vsel %vm1990, %v1989, %v1985
        %v1992 = vpack.c.bf16 %v1991, %v1991
        %v1993 = vld [vmem:[%s1104] sm:$0xf]
        %v1994 = vld [vmem:[%s1104 + $0x4] sm:$0xf]
        %v1995 = vld [vmem:[%s1104 + $0x8] sm:$0xf]
        %v1996 = vld [vmem:[%s1104 + $0xc] sm:$0xf]
        %v1997 = vld [vmem:[%s1112] sm:$0x1]
        %v1999 = vlaneseq
        %v2000 = vshrl.u32 %v1999, 7
        %v2001 = vsub.s32 0, %v2000
        %v2002 = vrot.slane %v1997, %v2001
        %v2008 = vunpack.c.l.b16 %v1993
        %v2009 = vunpack.c.l.b16 %v1994
        %v2010 = vunpack.c.l.b16 %v1995
        %v2011 = vunpack.c.l.b16 %v1996
        %v2012 = vpack.c.b16 %v2009, %v2008
        %v2013 = vpack.c.b16 %v2011, %v2010
        %v2017 = vsel %vm1363, %v1992, 0
        %2019 = vmatprep.subr.bf16.mxu0 0
        %2020 = vmatpush1.bf16.msra.mxu0 %v2012
        %2021 = vmatprep.subr.bf16.mxu0 0
        %2022 = vmatpush1.bf16.msra.mxu0 %v2013
        %2023 = vmatprep.subr.bf16.mxu0 0
        %2024 = vmatpush1.bf16.msra.mxu0 0
        %2025 = vmatprep.subr.bf16.mxu0 0
        %2026 = vmatpush1.bf16.msra.mxu0 0
        %2027 = vmatprep.subr.bf16.mxu0 0
        %2028 = vmatpush1.bf16.msra.mxu0 0
        %2029 = vmatprep.subr.bf16.mxu0 0
        %2030 = vmatpush1.bf16.msra.mxu0 0
        %2031 = vmatprep.subr.bf16.mxu0 0
        %2032 = vmatpush1.bf16.msra.mxu0 0
        %2033 = vmatprep.subr.bf16.mxu0 0
        %2034 = vmatpush1.bf16.msra.mxu0 0
        %2035 = vmatprep.subr.bf16.mxu0 0
        %2036 = vmatpush1.bf16.msra.mxu0 0
        %2037 = vmatprep.subr.bf16.mxu0 0
        %2038 = vmatpush1.bf16.msra.mxu0 0
        %2039 = vmatprep.subr.bf16.mxu0 0
        %2040 = vmatpush1.bf16.msra.mxu0 0
        %2041 = vmatprep.subr.bf16.mxu0 0
        %2042 = vmatpush1.bf16.msra.mxu0 0
        %2043 = vmatprep.subr.bf16.mxu0 0
        %2044 = vmatpush1.bf16.msra.mxu0 0
        %2045 = vmatprep.subr.bf16.mxu0 0
        %2046 = vmatpush1.bf16.msra.mxu0 0
        %2047 = vmatprep.subr.bf16.mxu0 0
        %2048 = vmatpush1.bf16.msra.mxu0 0
        %2049 = vmatprep.subr.bf16.mxu0 0
        %2050 = vmatpush1.bf16.msra.mxu0 0
        %2051 = vmatprep.mubr.bf16.mxu0 0
        %2052 = vmatmul.mubr.bf16.gmra.mrb[0].mxu0 %v2017
        %v2053 = vpop.f32.mrb[0].mxu0
        %v2054 = vadd.f32 %v2002, %v2053
        %v2055 = vpop.f32.mrb[0].mxu0
        %v2056 = vpop.f32.mrb[0].mxu0
        %v2057 = vpop.f32.mrb[0].mxu0
        %2058 = vdwg.mxu0
        %v2059 = vadd.f32 %v1338, %v2054
        %v2060 = vld [vmem:[%s1120] sm:$0x1]
        %v2061 = vld [vmem:[%s1128] sm:$0x1]
        %v2062 = vsel %vm1363, %v2059, 0.0
        %2063 = vadd.xlane.f32.xlu0 %v2062
        %v2064 = vpop.xlane.xlu0 %2063
        %v2065 = vrcp.pop 32.0
        %v2066 = vmul.f32 %v2064, %v2065
        %v2067 = vsub.f32 %v2059, %v2066
        %v2068 = vmul.f32 %v2067, %v2067
        %v2069 = vsel %vm1363, %v2068, 0.0
        %2070 = vadd.xlane.f32.xlu0 %v2069
        %v2071 = vpop.xlane.xlu0 %2070
        %v2072 = vmul.f32 %v2071, %v2065
        %v2073 = vadd.f32 %v2072, 1e-05
        %v2074 = vrsqrt.pop %v2073
        %v2075 = vmul.f32 %v2067, %v2074
        %v2077 = vlaneseq
        %v2078 = vshrl.u32 %v2077, 7
        %v2079 = vsub.s32 0, %v2078
        %v2080 = vrot.slane %v2060, %v2079
        %v2082 = vmul.f32 %v2075, %v2080
        %v2084 = vlaneseq
        %v2085 = vshrl.u32 %v2084, 7
        %v2086 = vsub.s32 0, %v2085
        %v2087 = vrot.slane %v2061, %v2086
        %v2089 = vadd.f32 %v2082, %v2087
        %v2090 = vpack.c.bf16 %v2089, %v2089
        %v2091 = vld [vmem:[%s1137] sm:$0xf]
        %v2092 = vld [vmem:[%s1137 + $0x4] sm:$0xf]
        %v2093 = vld [vmem:[%s1137 + $0x8] sm:$0xf]
        %v2094 = vld [vmem:[%s1137 + $0xc] sm:$0xf]
        %v2095 = vld [vmem:[%s1145] sm:$0x1]
        %v2097 = vlaneseq
        %v2098 = vshrl.u32 %v2097, 7
        %v2099 = vsub.s32 0, %v2098
        %v2100 = vrot.slane %v2095, %v2099
        %v2106 = vunpack.c.l.b16 %v2091
        %v2107 = vunpack.c.l.b16 %v2092
        %v2108 = vunpack.c.l.b16 %v2093
        %v2109 = vunpack.c.l.b16 %v2094
        %v2110 = vpack.c.b16 %v2107, %v2106
        %v2111 = vpack.c.b16 %v2109, %v2108
        %v2115 = vsel %vm1363, %v2090, 0
        %2117 = vmatprep.subr.bf16.mxu0 0
        %2118 = vmatpush1.bf16.msra.mxu0 %v2110
        %2119 = vmatprep.subr.bf16.mxu0 0
        %2120 = vmatpush1.bf16.msra.mxu0 %v2111
        %2121 = vmatprep.subr.bf16.mxu0 0
        %2122 = vmatpush1.bf16.msra.mxu0 0
        %2123 = vmatprep.subr.bf16.mxu0 0
        %2124 = vmatpush1.bf16.msra.mxu0 0
        %2125 = vmatprep.subr.bf16.mxu0 0
        %2126 = vmatpush1.bf16.msra.mxu0 0
        %2127 = vmatprep.subr.bf16.mxu0 0
        %2128 = vmatpush1.bf16.msra.mxu0 0
        %2129 = vmatprep.subr.bf16.mxu0 0
        %2130 = vmatpush1.bf16.msra.mxu0 0
        %2131 = vmatprep.subr.bf16.mxu0 0
        %2132 = vmatpush1.bf16.msra.mxu0 0
        %2133 = vmatprep.subr.bf16.mxu0 0
        %2134 = vmatpush1.bf16.msra.mxu0 0
        %2135 = vmatprep.subr.bf16.mxu0 0
        %2136 = vmatpush1.bf16.msra.mxu0 0
        %2137 = vmatprep.subr.bf16.mxu0 0
        %2138 = vmatpush1.bf16.msra.mxu0 0
        %2139 = vmatprep.subr.bf16.mxu0 0
        %2140 = vmatpush1.bf16.msra.mxu0 0
        %2141 = vmatprep.subr.bf16.mxu0 0
        %2142 = vmatpush1.bf16.msra.mxu0 0
        %2143 = vmatprep.subr.bf16.mxu0 0
        %2144 = vmatpush1.bf16.msra.mxu0 0
        %2145 = vmatprep.subr.bf16.mxu0 0
        %2146 = vmatpush1.bf16.msra.mxu0 0
        %2147 = vmatprep.subr.bf16.mxu0 0
        %2148 = vmatpush1.bf16.msra.mxu0 0
        %2149 = vmatprep.mubr.bf16.mxu0 0
        %2150 = vmatmul.mubr.bf16.gmra.mrb[0].mxu0 %v2115
        %v2151 = vpop.f32.mrb[0].mxu0
        %v2152 = vadd.f32 %v2100, %v2151
        %v2153 = vpop.f32.mrb[0].mxu0
        %v2154 = vpop.f32.mrb[0].mxu0
        %v2155 = vpop.f32.mrb[0].mxu0
        %2156 = vdwg.mxu0
        %v2157 = vmax.f32 %v2152, 0.0
        %v2158 = vpack.c.bf16 %v2157, %v2157
        %v2159 = vld [vmem:[%s1329] sm:$0xf]
        %v2160 = vld [vmem:[%s1329 + $0x4] sm:$0xf]
        %v2161 = vld [vmem:[%s1329 + $0x8] sm:$0xf]
        %v2162 = vld [vmem:[%s1329 + $0xc] sm:$0xf]
        %v2163 = vld [vmem:[%s1329 + $0x10] sm:$0xf]
        %v2164 = vld [vmem:[%s1329 + $0x14] sm:$0xf]
        %v2165 = vld [vmem:[%s1329 + $0x18] sm:$0xf]
        %v2166 = vld [vmem:[%s1329 + $0x1c] sm:$0xf]
        %v2167 = vld [vmem:[%s1153] sm:$0x1]
        %v2169 = vlaneseq
        %v2170 = vshrl.u32 %v2169, 7
        %v2171 = vsub.s32 0, %v2170
        %v2172 = vrot.slane %v2167, %v2171
        %v2182 = vunpack.c.l.b16 %v2159
        %v2183 = vunpack.c.l.b16 %v2160
        %v2184 = vunpack.c.l.b16 %v2161
        %v2185 = vunpack.c.l.b16 %v2162
        %v2186 = vunpack.c.l.b16 %v2163
        %v2187 = vunpack.c.l.b16 %v2164
        %v2188 = vunpack.c.l.b16 %v2165
        %v2189 = vunpack.c.l.b16 %v2166
        %v2190 = vpack.c.b16 %v2183, %v2182
        %v2191 = vpack.c.b16 %v2185, %v2184
        %v2192 = vpack.c.b16 %v2187, %v2186
        %v2193 = vpack.c.b16 %v2189, %v2188
        %vm2198 = vcmask 523264
        %v2200 = vsel %vm2198, %v2158, 0
        %2202 = vmatprep.subr.bf16.mxu0 0
        %2203 = vmatpush1.bf16.msra.mxu0 %v2190
        %2204 = vmatprep.subr.bf16.mxu0 0
        %2205 = vmatpush1.bf16.msra.mxu0 %v2191
        %2206 = vmatprep.subr.bf16.mxu0 0
        %2207 = vmatpush1.bf16.msra.mxu0 %v2192
        %2208 = vmatprep.subr.bf16.mxu0 0
        %2209 = vmatpush1.bf16.msra.mxu0 %v2193
        %2210 = vmatprep.subr.bf16.mxu0 0
        %2211 = vmatpush1.bf16.msra.mxu0 0
        %2212 = vmatprep.subr.bf16.mxu0 0
        %2213 = vmatpush1.bf16.msra.mxu0 0
        %2214 = vmatprep.subr.bf16.mxu0 0
        %2215 = vmatpush1.bf16.msra.mxu0 0
        %2216 = vmatprep.subr.bf16.mxu0 0
        %2217 = vmatpush1.bf16.msra.mxu0 0
        %2218 = vmatprep.subr.bf16.mxu0 0
        %2219 = vmatpush1.bf16.msra.mxu0 0
        %2220 = vmatprep.subr.bf16.mxu0 0
        %2221 = vmatpush1.bf16.msra.mxu0 0
        %2222 = vmatprep.subr.bf16.mxu0 0
        %2223 = vmatpush1.bf16.msra.mxu0 0
        %2224 = vmatprep.subr.bf16.mxu0 0
        %2225 = vmatpush1.bf16.msra.mxu0 0
        %2226 = vmatprep.subr.bf16.mxu0 0
        %2227 = vmatpush1.bf16.msra.mxu0 0
        %2228 = vmatprep.subr.bf16.mxu0 0
        %2229 = vmatpush1.bf16.msra.mxu0 0
        %2230 = vmatprep.subr.bf16.mxu0 0
        %2231 = vmatpush1.bf16.msra.mxu0 0
        %2232 = vmatprep.subr.bf16.mxu0 0
        %2233 = vmatpush1.bf16.msra.mxu0 0
        %2234 = vmatprep.mubr.bf16.mxu0 0
        %2235 = vmatmul.mubr.bf16.gmra.mrb[0].mxu0 %v2200
        %v2236 = vpop.f32.mrb[0].mxu0
        %v2237 = vadd.f32 %v2172, %v2236
        %v2238 = vpop.f32.mrb[0].mxu0
        %v2239 = vpop.f32.mrb[0].mxu0
        %v2240 = vpop.f32.mrb[0].mxu0
        %2241 = vdwg.mxu0
        %v2242 = vadd.f32 %v2089, %v2237
        %v2243 = vld [vmem:[%s1161] sm:$0x1]
        %v2244 = vld [vmem:[%s1169] sm:$0x1]
        %v2245 = vsel %vm1363, %v2242, 0.0
        %2246 = vadd.xlane.f32.xlu0 %v2245
        %v2247 = vpop.xlane.xlu0 %2246
        %v2248 = vmul.f32 %v2247, %v2065
        %v2249 = vsub.f32 %v2242, %v2248
        %v2250 = vmul.f32 %v2249, %v2249
        %v2251 = vsel %vm1363, %v2250, 0.0
        %2252 = vadd.xlane.f32.xlu0 %v2251
        %v2253 = vpop.xlane.xlu0 %2252
        %v2254 = vmul.f32 %v2253, %v2065
        %v2255 = vadd.f32 %v2254, 1e-05
        %v2256 = vrsqrt.pop %v2255
        %v2257 = vmul.f32 %v2249, %v2256
        %v2259 = vlaneseq
        %v2260 = vshrl.u32 %v2259, 7
        %v2261 = vsub.s32 0, %v2260
        %v2262 = vrot.slane %v2243, %v2261
        %v2264 = vmul.f32 %v2257, %v2262
        %v2266 = vlaneseq
        %v2267 = vshrl.u32 %v2266, 7
        %v2268 = vsub.s32 0, %v2267
        %v2269 = vrot.slane %v2244, %v2268
        %v2271 = vadd.f32 %v2264, %v2269
        %v2272 = vpack.c.bf16 %v2271, %v2271
        %v2273 = vld [vmem:[%s17] sm:$0xf]
        %v2274 = vld [vmem:[%s17 + $0x4] sm:$0xf]
        %v2275 = vld [vmem:[%s17 + $0x8] sm:$0xf]
        %v2276 = vld [vmem:[%s17 + $0xc] sm:$0xf]
        %v2277 = vld [vmem:[%s18] sm:$0x1]
        %v2279 = vlaneseq
        %v2280 = vshrl.u32 %v2279, 7
        %v2281 = vsub.s32 0, %v2280
        %v2282 = vrot.slane %v2277, %v2281
        %v2288 = vunpack.c.l.b16 %v2273
        %v2289 = vunpack.c.l.b16 %v2274
        %v2290 = vunpack.c.l.b16 %v2275
        %v2291 = vunpack.c.l.b16 %v2276
        %v2292 = vpack.c.b16 %v2289, %v2288
        %v2293 = vpack.c.b16 %v2291, %v2290
        %v2297 = vsel %vm1363, %v2272, 0
        %2299 = vmatprep.subr.bf16.mxu0 0
        %2300 = vmatpush1.bf16.msra.mxu0 %v2292
        %2301 = vmatprep.subr.bf16.mxu0 0
        %2302 = vmatpush1.bf16.msra.mxu0 %v2293
        %2303 = vmatprep.subr.bf16.mxu0 0
        %2304 = vmatpush1.bf16.msra.mxu0 0
        %2305 = vmatprep.subr.bf16.mxu0 0
        %2306 = vmatpush1.bf16.msra.mxu0 0
        %2307 = vmatprep.subr.bf16.mxu0 0
        %2308 = vmatpush1.bf16.msra.mxu0 0
        %2309 = vmatprep.subr.bf16.mxu0 0
        %2310 = vmatpush1.bf16.msra.mxu0 0
        %2311 = vmatprep.subr.bf16.mxu0 0
        %2312 = vmatpush1.bf16.msra.mxu0 0
        %2313 = vmatprep.subr.bf16.mxu0 0
        %2314 = vmatpush1.bf16.msra.mxu0 0
        %2315 = vmatprep.subr.bf16.mxu0 0
        %2316 = vmatpush1.bf16.msra.mxu0 0
        %2317 = vmatprep.subr.bf16.mxu0 0
        %2318 = vmatpush1.bf16.msra.mxu0 0
        %2319 = vmatprep.subr.bf16.mxu0 0
        %2320 = vmatpush1.bf16.msra.mxu0 0
        %2321 = vmatprep.subr.bf16.mxu0 0
        %2322 = vmatpush1.bf16.msra.mxu0 0
        %2323 = vmatprep.subr.bf16.mxu0 0
        %2324 = vmatpush1.bf16.msra.mxu0 0
        %2325 = vmatprep.subr.bf16.mxu0 0
        %2326 = vmatpush1.bf16.msra.mxu0 0
        %2327 = vmatprep.subr.bf16.mxu0 0
        %2328 = vmatpush1.bf16.msra.mxu0 0
        %2329 = vmatprep.subr.bf16.mxu0 0
        %2330 = vmatpush1.bf16.msra.mxu0 0
        %2331 = vmatprep.mubr.bf16.mxu0 0
        %2332 = vmatmul.mubr.bf16.gmra.mrb[0].mxu0 %v2297
        %v2333 = vpop.f32.mrb[0].mxu0
        %v2334 = vadd.f32 %v2282, %v2333
        %v2335 = vpop.f32.mrb[0].mxu0
        %v2336 = vpop.f32.mrb[0].mxu0
        %v2337 = vpop.f32.mrb[0].mxu0
        %2338 = vdwg.mxu0
        %v2339 = vld [vmem:[%s19] sm:$0x1]
        %v2340 = vld [vmem:[%s20] sm:$0x1]
        %v2341 = vsel %vm1363, %v2334, 0.0
        %2342 = vadd.xlane.f32.xlu0 %v2341
        %v2343 = vpop.xlane.xlu0 %2342
        %v2344 = vmul.f32 %v2343, %v2065
        %v2345 = vsub.f32 %v2334, %v2344
        %v2346 = vmul.f32 %v2345, %v2345
        %v2347 = vsel %vm1363, %v2346, 0.0
        %2348 = vadd.xlane.f32.xlu0 %v2347
        %v2349 = vpop.xlane.xlu0 %2348
        %v2350 = vmul.f32 %v2349, %v2065
        %v2351 = vadd.f32 %v2350, 1e-05
        %v2352 = vrsqrt.pop %v2351
        %v2353 = vmul.f32 %v2345, %v2352
        %v2355 = vlaneseq
        %v2356 = vshrl.u32 %v2355, 7
        %v2357 = vsub.s32 0, %v2356
        %v2358 = vrot.slane %v2339, %v2357
        %v2360 = vmul.f32 %v2353, %v2358
        %v2362 = vlaneseq
        %v2363 = vshrl.u32 %v2362, 7
        %v2364 = vsub.s32 0, %v2363
        %v2365 = vrot.slane %v2340, %v2364
        %v2367 = vadd.f32 %v2360, %v2365
        %v2368 = vmul.f32 %v2367, 0.5
        %v2369 = vmul.f32 %v2367, 0.70710677
        %v2370 = verf.f32.pop %v2369
        %v2371 = vadd.f32 %v2370, 1.0
        %v2372 = vmul.f32 %v2368, %v2371
        %v2373 = vpack.c.bf16 %v2372, %v2372
        %v2374 = vld [vmem:[%s21] sm:$0xf]
        %v2375 = vld [vmem:[%s21 + $0x4] sm:$0xf]
        %v2376 = vld [vmem:[%s21 + $0x8] sm:$0xf]
        %v2377 = vld [vmem:[%s21 + $0xc] sm:$0xf]
        %v2378 = vld [vmem:[%s22] sm:$0x1]
        %v2380 = vlaneseq
        %v2381 = vshrl.u32 %v2380, 7
        %v2382 = vsub.s32 0, %v2381
        %v2383 = vrot.slane %v2378, %v2382
        %v2389 = vunpack.c.l.b16 %v2374
        %v2390 = vunpack.c.l.b16 %v2375
        %v2391 = vunpack.c.l.b16 %v2376
        %v2392 = vunpack.c.l.b16 %v2377
        %v2393 = vpack.c.b16 %v2390, %v2389
        %v2394 = vpack.c.b16 %v2392, %v2391
        %v2398 = vsel %vm1363, %v2373, 0
        %2400 = vmatprep.subr.bf16.mxu0 0
        %2401 = vmatpush1.bf16.msra.mxu0 %v2393
        %2402 = vmatprep.subr.bf16.mxu0 0
        %2403 = vmatpush1.bf16.msra.mxu0 %v2394
        %2404 = vmatprep.subr.bf16.mxu0 0
        %2405 = vmatpush1.bf16.msra.mxu0 0
        %2406 = vmatprep.subr.bf16.mxu0 0
        %2407 = vmatpush1.bf16.msra.mxu0 0
        %2408 = vmatprep.subr.bf16.mxu0 0
        %2409 = vmatpush1.bf16.msra.mxu0 0
        %2410 = vmatprep.subr.bf16.mxu0 0
        %2411 = vmatpush1.bf16.msra.mxu0 0
        %2412 = vmatprep.subr.bf16.mxu0 0
        %2413 = vmatpush1.bf16.msra.mxu0 0
        %2414 = vmatprep.subr.bf16.mxu0 0
        %2415 = vmatpush1.bf16.msra.mxu0 0
        %2416 = vmatprep.subr.bf16.mxu0 0
        %2417 = vmatpush1.bf16.msra.mxu0 0
        %2418 = vmatprep.subr.bf16.mxu0 0
        %2419 = vmatpush1.bf16.msra.mxu0 0
        %2420 = vmatprep.subr.bf16.mxu0 0
        %2421 = vmatpush1.bf16.msra.mxu0 0
        %2422 = vmatprep.subr.bf16.mxu0 0
        %2423 = vmatpush1.bf16.msra.mxu0 0
        %2424 = vmatprep.subr.bf16.mxu0 0
        %2425 = vmatpush1.bf16.msra.mxu0 0
        %2426 = vmatprep.subr.bf16.mxu0 0
        %2427 = vmatpush1.bf16.msra.mxu0 0
        %2428 = vmatprep.subr.bf16.mxu0 0
        %2429 = vmatpush1.bf16.msra.mxu0 0
        %2430 = vmatprep.subr.bf16.mxu0 0
        %2431 = vmatpush1.bf16.msra.mxu0 0
        %2432 = vmatprep.mubr.bf16.mxu0 0
        %2433 = vmatmul.mubr.bf16.gmra.mrb[0].mxu0 %v2398
        %v2434 = vpop.f32.mrb[0].mxu0
        %v2435 = vadd.f32 %v2383, %v2434
        %v2436 = vpop.f32.mrb[0].mxu0
        %v2437 = vpop.f32.mrb[0].mxu0
        %v2438 = vpop.f32.mrb[0].mxu0
        %2439 = vdwg.mxu0
        %v2440 = vld [vmem:[%s23] sm:$0x1]
        %v2441 = vld [vmem:[%s24] sm:$0x1]
        %v2442 = vsel %vm1363, %v2435, 0.0
        %2443 = vadd.xlane.f32.xlu0 %v2442
        %v2444 = vpop.xlane.xlu0 %2443
        %v2445 = vmul.f32 %v2444, %v2065
        %v2446 = vsub.f32 %v2435, %v2445
        %v2447 = vmul.f32 %v2446, %v2446
        %v2448 = vsel %vm1363, %v2447, 0.0
        %2449 = vadd.xlane.f32.xlu0 %v2448
        %v2450 = vpop.xlane.xlu0 %2449
        %v2451 = vmul.f32 %v2450, %v2065
        %v2452 = vadd.f32 %v2451, 1e-05
        %v2453 = vrsqrt.pop %v2452
        %v2454 = vmul.f32 %v2446, %v2453
        %v2456 = vlaneseq
        %v2457 = vshrl.u32 %v2456, 7
        %v2458 = vsub.s32 0, %v2457
        %v2459 = vrot.slane %v2440, %v2458
        %v2461 = vmul.f32 %v2454, %v2459
        %v2463 = vlaneseq
        %v2464 = vshrl.u32 %v2463, 7
        %v2465 = vsub.s32 0, %v2464
        %v2466 = vrot.slane %v2441, %v2465
        %v2468 = vadd.f32 %v2461, %v2466
        %v2469 = vadd.f32 %v2468, %v2271
        %v2470 = vld [vmem:[%s25] sm:$0x1]
        %v2471 = vld [vmem:[%s26] sm:$0x1]
        %v2472 = vsel %vm1363, %v2469, 0.0
        %2473 = vadd.xlane.f32.xlu0 %v2472
        %v2474 = vpop.xlane.xlu0 %2473
        %v2475 = vmul.f32 %v2474, %v2065
        %v2476 = vsub.f32 %v2469, %v2475
        %v2477 = vmul.f32 %v2476, %v2476
        %v2478 = vsel %vm1363, %v2477, 0.0
        %2479 = vadd.xlane.f32.xlu0 %v2478
        %v2480 = vpop.xlane.xlu0 %2479
        %v2481 = vmul.f32 %v2480, %v2065
        %v2482 = vadd.f32 %v2481, 1e-05
        %v2483 = vrsqrt.pop %v2482
        %v2484 = vmul.f32 %v2476, %v2483
        %v2486 = vlaneseq
        %v2487 = vshrl.u32 %v2486, 7
        %v2488 = vsub.s32 0, %v2487
        %v2489 = vrot.slane %v2470, %v2488
        %v2491 = vmul.f32 %v2484, %v2489
        %v2493 = vlaneseq
        %v2494 = vshrl.u32 %v2493, 7
        %v2495 = vsub.s32 0, %v2494
        %v2496 = vrot.slane %v2471, %v2495
        %v2498 = vadd.f32 %v2491, %v2496
        %v2499 = vmul.f32 %v2498, 0.5
        %v2500 = vmul.f32 %v2498, 0.70710677
        %v2501 = verf.f32.pop %v2500
        %v2502 = vadd.f32 %v2501, 1.0
        %v2503 = vmul.f32 %v2499, %v2502
        %2504 = vst.msk [vmem:[#allocation2] sm:$0xff] %vm1363, %v2503
        %2505 = vst.msk [vmem:[%s1309] sm:$0xff] %vm1363, %v2503
        %s2506 = sand.u32 %s736, 1
        %s2507 = scalar_lea.sflag [#allocation5], %s2506
        %s2508 = sand.u32 %s736, 1
        %s2509 = smul.addr %s2508, 8
        %s2510 = scalar_lea.vmem [#allocation24], %s2509
        // Predicated region
        $region185: #{tpu_custom_call.1} parent=127 // pred_check
          %p2511 = pneg %p746
        $region186: #{tpu_custom_call.1} parent=127 // pred_check_branch
          %2513 = sbr.rel (%p2511) target = $region188
        $region187: #{tpu_custom_call.1} parent=127 // pred_region
          %s2515 = ssub.s32 128, 128
          %2516 = vsyncadd %s2507, %s2515
          %s2517 = smul.addr %s67, 2
          %s2518 = sadd.s32 %s66, %s2517
          %s2519 = smul.addr %s2518, 128
          %s2520 = scalar_lea.hbm %s27, %s2519
          %s2522 = sshll.u32 %s2510, 4
          %s2523 = int_to_ptr.vmem [resolvable:$true] %s2522
          %2525 = dma.vmem_to_hbm [thread:$0]  %s2523, 128, %s2520, %s2507
        $region188: #{tpu_custom_call.1} parent=127 // pred_fallthru
          _
      $region128: #{tpu_custom_call.1} parent=5 // pred_fallthru
        _
      %p2526 = scmp.le.s32.totalorder 2, %s57
      // Predicated region
      $region189: #{tpu_custom_call.1} parent=5 // pred_check
        %p2527 = pneg %p2526
      $region190: #{tpu_custom_call.1} parent=5 // pred_check_branch
        %2529 = sbr.rel (%p2527) target = $region192
      $region191: #{tpu_custom_call.1} parent=5 // pred_region
        %s2530 = ssub.s32 %s57, 2
        // Predicated region
        $region193: #{tpu_custom_call.1} parent=191 // pred_check
          %p2531 = pneg %p752
        $region194: #{tpu_custom_call.1} parent=191 // pred_check_branch
          %2533 = sbr.rel (%p2531) target = $region196
        $region195: #{tpu_custom_call.1} parent=191 // pred_region
          %s2534 = sand.u32 %s737, 1
          %s2535 = scalar_lea.sflag [#allocation5], %s2534
          %s2536 = sand.u32 %s737, 1
          %s2537 = smul.addr %s2536, 8
          %s2538 = scalar_lea.vmem [#allocation24], %s2537
          %2539 = dma.done %s2535, 128
        $region196: #{tpu_custom_call.1} parent=191 // pred_fallthru
          _
      $region192: #{tpu_custom_call.1} parent=5 // pred_fallthru
        _
    $region6: #{tpu_custom_call.1} parent=1 // loop_footer
      %s61 = sadd.s32 1, %s57
    $region7: #{tpu_custom_call.1} parent=1 // loop_footer_branch
      %56 = sbr.rel target = $region3
    $region8: #{tpu_custom_call.1} parent=1 // loop_exit
      _
    %2540 = vsyncpa [#allocation4], 1
    %s2541 = scalar_lea.sflag [#allocation4], 1
    %2542 = vsyncpa %s2541, 1
    %2543 = vsyncpa [#allocation7], 1
    %s2544 = scalar_lea.sflag [#allocation7], 1
    %2545 = vsyncpa %s2544, 1
    %2546 = vsyncpa [#allocation10], 1
    %s2547 = scalar_lea.sflag [#allocation10], 1
    %2548 = vsyncpa %s2547, 1
    %2549 = vsyncpa [#allocation13], 1
    %s2550 = scalar_lea.sflag [#allocation13], 1
    %2551 = vsyncpa %s2550, 1
    %2552 = vsyncpa [#allocation16], 1
    %s2553 = scalar_lea.sflag [#allocation16], 1
    %2554 = vsyncpa %s2553, 1
    %2555 = vsyncpa [#allocation19], 1
    %s2556 = scalar_lea.sflag [#allocation19], 1
    %2557 = vsyncpa %s2556, 1
    %2558 = vsyncpa [#allocation22], 1
    %s2559 = scalar_lea.sflag [#allocation22], 1
    %2560 = vsyncpa %s2559, 1
    %2561 = vsyncpa [#allocation5], 1
    %s2562 = scalar_lea.sflag [#allocation5], 1
    %2563 = vsyncpa %s2562, 1

</llo_original>
